<compile_context>
chip_gen: v5e
topology: v5e:2x2
jax: 0.10.0
libtpu: 0.0.40
codegen_flags: <defaults>
</compile_context>

<pallas_src>
import functools

import jax
import jax.numpy as jnp
from jax.experimental import pallas as pl
from jax.experimental.pallas import tpu as pltpu


# ----------------------------------------------------------------------------
# Fused block kernel
# ----------------------------------------------------------------------------
def _wrn_block_kernel(*refs, stride, has_shortcut, row_tile):
    if has_shortcut:
        (x_ref, w0_ref, w1_ref, wsc_ref, s0_ref, b0_ref, s1_ref, b1_ref,
         o_ref, a_pad_ref, out0_pad_ref) = refs
    else:
        (x_ref, w0_ref, w1_ref, s0_ref, b0_ref, s1_ref, b1_ref,
         o_ref, a_pad_ref, out0_pad_ref) = refs
        wsc_ref = None

    h, w, cin = x_ref.shape[1], x_ref.shape[2], x_ref.shape[3]
    hout, wout, cout_t = o_ref.shape[1], o_ref.shape[2], o_ref.shape[3]
    cmid = out0_pad_ref.shape[2]          # conv_0 output channels (= out_planes)
    po = 1 if stride == 1 else 0          # where the data sits inside a_pad

    def tap(src_ref, kh, kw, h0, th, width):
        """(th, width, C) window of a zero-padded scratch, honouring stride."""
        if stride == 1:
            return src_ref[kh + h0:kh + h0 + th, kw:kw + width, :]
        # stride-2: read strided taps directly instead of computing a dense
        # stride-1 conv and subsampling afterwards.
        return src_ref[pl.ds(kh + stride * h0, th, stride),
                       pl.ds(kw, width, stride), :]

    # ---- Stages 1+2: run once per image (first cout tile), persist in VMEM.
    @pl.when(pl.program_id(1) == 0)
    def _stage12():
        # BN0 + ReLU, written into the zero-padded scratch (pad done in VMEM).
        a_pad_ref[...] = jnp.zeros_like(a_pad_ref)
        out0_pad_ref[...] = jnp.zeros_like(out0_pad_ref)
        a = jnp.maximum(
            x_ref[0].astype(jnp.float32) * s0_ref[...] + b0_ref[...], 0.0)
        a_pad_ref[po:po + h, po:po + w, :] = a.astype(a_pad_ref.dtype)

        # conv_0 (stride folded into the taps) fused with BN1 + ReLU; result
        # written (padded by 1 for conv_1) into out0_pad.
        for h0 in range(0, hout, row_tile):
            th = min(row_tile, hout - h0)
            acc = jnp.zeros((th * wout, cmid), jnp.float32)
            for kh in range(3):
                for kw in range(3):
                    t = tap(a_pad_ref, kh, kw, h0, th, wout)
                    acc = acc + jnp.dot(t.reshape(th * wout, cin),
                                        w0_ref[kh, kw],
                                        preferred_element_type=jnp.float32)
            y = jnp.maximum(acc * s1_ref[...] + b1_ref[...], 0.0)
            out0_pad_ref[1 + h0:1 + h0 + th, 1:1 + wout, :] = (
                y.reshape(th, wout, cmid).astype(out0_pad_ref.dtype))

    # ---- Stage 3: conv_1 for this cout tile, shortcut + residual fused in.
    for h0 in range(0, hout, row_tile):
        th = min(row_tile, hout - h0)
        acc = jnp.zeros((th * wout, cout_t), jnp.float32)
        for kh in range(3):
            for kw in range(3):
                t = out0_pad_ref[kh + h0:kh + h0 + th, kw:kw + wout, :]
                acc = acc + jnp.dot(t.reshape(th * wout, cmid),
                                    w1_ref[kh, kw],
                                    preferred_element_type=jnp.float32)
        if has_shortcut:
            # 1x1 strided conv: subsample of the BN0 activation straight from
            # the resident scratch (no XLA slice pass), then a matmul.
            a_sub = tap(a_pad_ref, po, po, h0, th, wout)
            acc = acc + jnp.dot(a_sub.reshape(th * wout, cin), wsc_ref[...],
                                preferred_element_type=jnp.float32)
        else:
            # identity residual (stride == 1, cin == cout, single cout tile).
            acc = acc + x_ref[0, h0:h0 + th, :, :].reshape(
                th * wout, cout_t).astype(jnp.float32)
        o_ref[0, h0:h0 + th, :, :] = acc.reshape(
            th, wout, cout_t).astype(o_ref.dtype)


# ----------------------------------------------------------------------------
# Wrapper: NCHW in/out, BN folding, BlockSpecs, grid = (batch, cout tiles)
# ----------------------------------------------------------------------------
def wrn_block_forward(x_nchw, params, stride, has_shortcut, *, eps=1e-5,
                      compute_dtype=jnp.float32, cout_tile=None, row_tile=None):
    x = jnp.transpose(x_nchw, (0, 2, 3, 1))      # NCHW -> NHWC
    n, h, w, cin = x.shape
    cout = params["w0"].shape[-1]

    if stride not in (1, 2):
        raise ValueError("Unsupported `stride`.")
    if not has_shortcut and (stride != 1 or cin != cout):
        raise ValueError("Identity residual requires stride == 1 and cin == cout.")

    hout, wout = h // stride, w // stride

    # Fold BatchNorm (inference form) into per-channel scale / bias.
    s0 = (params["gamma0"] / jnp.sqrt(params["var0"] + eps)).astype(jnp.float32)
    b0 = (params["beta0"] - params["mean0"] * s0).astype(jnp.float32)
    s1 = (params["gamma1"] / jnp.sqrt(params["var1"] + eps)).astype(jnp.float32)
    b1 = (params["beta1"] - params["mean1"] * s1).astype(jnp.float32)

    w0 = params["w0"].astype(compute_dtype)      # (3, 3, cin, cout)   HWIO
    w1 = params["w1"].astype(compute_dtype)      # (3, 3, cout, cout)

    if row_tile is None:                          # keep f32 accumulator small
        row_tile = max(1, min(hout, 256 // max(1, wout)))
    if not has_shortcut:
        cout_tile = cout                          # identity path needs all C
    elif cout_tile is None:
        cout_tile = min(cout, 128)                # lane-dense output tiles
    num_ct = pl.cdiv(cout, cout_tile)

    inputs = [x, w0, w1]
    in_specs = [
        pl.BlockSpec((1, h, w, cin), lambda i, j: (i, 0, 0, 0)),
        pl.BlockSpec((3, 3, cin, cout), lambda i, j: (0, 0, 0, 0)),
        pl.BlockSpec((3, 3, cout, cout_tile), lambda i, j: (0, 0, 0, j)),
    ]
    if has_shortcut:
        inputs.append(params["w_sc"].astype(compute_dtype))      # (cin, cout)
        in_specs.append(pl.BlockSpec((cin, cout_tile), lambda i, j: (0, j)))
    inputs += [s0.reshape(1, cin), b0.reshape(1, cin),
               s1.reshape(1, cout), b1.reshape(1, cout)]
    in_specs += [
        pl.BlockSpec((1, cin), lambda i, j: (0, 0)),
        pl.BlockSpec((1, cin), lambda i, j: (0, 0)),
        pl.BlockSpec((1, cout), lambda i, j: (0, 0)),
        pl.BlockSpec((1, cout), lambda i, j: (0, 0)),
    ]

    scratch_shapes = [
        pltpu.VMEM((h + 2, w + 2, cin), compute_dtype),           # padded BN0 act
        pltpu.VMEM((hout + 2, wout + 2, cout), compute_dtype),    # padded conv_0 out
    ]

    # Explicit VMEM budget (double-buffered blocks + scratch) -- keeps wide
    # layers within v7x's 64 MiB physical VMEM, raises the small default on
    # v5e/v6e when the estimate asks for it.
    esz = jnp.dtype(compute_dtype).itemsize
    blk_bytes = (h * w * cin * x.dtype.itemsize
                 + 9 * cin * cout * esz
                 + 9 * cout * cout_tile * esz
                 + (cin * cout_tile * esz if has_shortcut else 0)
                 + 2 * (cin + cout) * 4
                 + hout * wout * cout_tile * x.dtype.itemsize)
    scratch_bytes = ((h + 2) * (w + 2) * cin
                     + (hout + 2) * (wout + 2) * cout) * esz
    vmem_limit = int(min(max(2 * (2 * blk_bytes + scratch_bytes), 16 * 2**20),
                         48 * 2**20))

    kernel = functools.partial(_wrn_block_kernel, stride=stride,
                               has_shortcut=has_shortcut, row_tile=row_tile)

    out = pl.pallas_call(
        kernel,
        out_shape=jax.ShapeDtypeStruct((n, hout, wout, cout), x.dtype),
        grid=(n, num_ct),
        in_specs=in_specs,
        out_specs=pl.BlockSpec((1, hout, wout, cout_tile),
                               lambda i, j: (i, 0, 0, j)),
        scratch_shapes=scratch_shapes,
        compiler_params=pltpu.CompilerParams(
            dimension_semantics=("parallel", "arbitrary"),
            vmem_limit_bytes=vmem_limit),
    )(*inputs)
    return jnp.transpose(out, (0, 3, 1, 2))       # NHWC -> NCHW


# ----------------------------------------------------------------------------
# Pure-JAX reference (mirrors the PyTorch forward, eval-mode BN)
# ----------------------------------------------------------------------------
def _ref_conv(x, w, stride, padding):
    return jax.lax.conv_general_dilated(
        x, w, window_strides=(stride, stride), padding=padding,
        dimension_numbers=("NHWC", "HWIO", "NHWC"))


def reference_forward(x_nchw, params, stride, has_shortcut, eps=1e-5):
    x = jnp.transpose(x_nchw, (0, 2, 3, 1))

    def bn(v, g, b, m, var):
        return (v - m) / jnp.sqrt(var + eps) * g + b

    a = jax.nn.relu(bn(x, params["gamma0"], params["beta0"],
                       params["mean0"], params["var0"]))
    if stride == 1:
        v = jnp.pad(a, ((0, 0), (1, 1), (1, 1), (0, 0)))
    else:
        v = jnp.pad(a, ((0, 0), (0, 1), (0, 1), (0, 0)))
    out = _ref_conv(v, params["w0"], stride, "VALID")
    out = jax.nn.relu(bn(out, params["gamma1"], params["beta1"],
                         params["mean1"], params["var1"]))
    out = _ref_conv(out, params["w1"], 1, [(1, 1), (1, 1)])
    if has_shortcut:
        w_sc = params["w_sc"].reshape(1, 1, *params["w_sc"].shape)
        res = _ref_conv(a, w_sc, stride, "VALID")
    else:
        res = x
    return jnp.transpose(res + out, (0, 3, 1, 2))


# ----------------------------------------------------------------------------
if __name__ == "__main__":
    key = jax.random.PRNGKey(0)

    def make_params(cin, cout, k):
        ks = jax.random.split(k, 11)
        return {
            "w0": 0.1 * jax.random.normal(ks[0], (3, 3, cin, cout), jnp.float32),
            "w1": 0.1 * jax.random.normal(ks[1], (3, 3, cout, cout), jnp.float32),
            "w_sc": 0.1 * jax.random.normal(ks[2], (cin, cout), jnp.float32),
            "gamma0": 1.0 + 0.1 * jax.random.normal(ks[3], (cin,), jnp.float32),
            "beta0": 0.1 * jax.random.normal(ks[4], (cin,), jnp.float32),
            "mean0": 0.1 * jax.random.normal(ks[5], (cin,), jnp.float32),
            "var0": 0.5 + 0.1 * jnp.abs(jax.random.normal(ks[6], (cin,), jnp.float32)),
            "gamma1": 1.0 + 0.1 * jax.random.normal(ks[7], (cout,), jnp.float32),
            "beta1": 0.1 * jax.random.normal(ks[8], (cout,), jnp.float32),
            "mean1": 0.1 * jax.random.normal(ks[9], (cout,), jnp.float32),
            "var1": 0.5 + 0.1 * jnp.abs(jax.random.normal(ks[10], (cout,), jnp.float32)),
        }

    k1, k2, k3 = jax.random.split(key, 3)

    # Case 1: stride=1, projection shortcut (cin != cout), f32 compute, strict.
    N, Cin, Cout, H, W = 2, 4, 8, 16, 16
    params = make_params(Cin, Cout, k1)
    x = jax.random.normal(k2, (N, Cin, H, W), jnp.float32)
    out = jax.block_until_ready(
        wrn_block_forward(x, params, stride=1, has_shortcut=True))
    ref = jax.block_until_ready(
        reference_forward(x, params, stride=1, has_shortcut=True))
    assert out.shape == (N, Cout, H, W), out.shape
    assert jnp.allclose(out, ref, rtol=2e-3, atol=2e-4), float(
        jnp.max(jnp.abs(out - ref)))

    # Case 2: stride=1, identity residual (cin == cout), bf16 MXU operands.
    params2 = make_params(Cout, Cout, k3)
    x2 = jax.random.normal(k2, (N, Cout, H, W), jnp.float32)
    out2 = jax.block_until_ready(
        wrn_block_forward(x2, params2, stride=1, has_shortcut=False,
                          compute_dtype=jnp.bfloat16))
    ref2 = jax.block_until_ready(
        reference_forward(x2, params2, stride=1, has_shortcut=False))
    assert out2.shape == (N, Cout, H, W), out2.shape
    assert jnp.allclose(out2, ref2, rtol=5e-2, atol=5e-2), float(
        jnp.max(jnp.abs(out2 - ref2)))

    print("KERNEL_OK")
</pallas_src>

<mosaic_0001>
module attributes {stable_mosaic.version = 11 : i64} {
  func.func @_wrn_block_kernel(%arg0: i32, %arg1: i32, %arg2: memref<1x16x16x4xf32, #tpu.memory_space<vmem>>, %arg3: memref<3x3x4x8xf32, #tpu.memory_space<vmem>>, %arg4: memref<3x3x8x8xf32, #tpu.memory_space<vmem>>, %arg5: memref<4x8xf32, #tpu.memory_space<vmem>>, %arg6: memref<1x4xf32, #tpu.memory_space<vmem>>, %arg7: memref<1x4xf32, #tpu.memory_space<vmem>>, %arg8: memref<1x8xf32, #tpu.memory_space<vmem>>, %arg9: memref<1x8xf32, #tpu.memory_space<vmem>>, %arg10: memref<1x16x16x8xf32, #tpu.memory_space<vmem>>, %arg11: memref<18x18x4xf32, #tpu.memory_space<vmem>>, %arg12: memref<18x18x8xf32, #tpu.memory_space<vmem>>) attributes {dimension_semantics = [#tpu.dimension_semantics<parallel>, #tpu.dimension_semantics<arbitrary>], iteration_bounds = array<i64: 2, 1>, scalar_prefetch = 0 : i64, scratch_operands = 2 : i64, tpu.core_type = #tpu.core_type<tc>, window_params = [{transform_indices = @transform_0, window_bounds = array<i64: 1, 16, 16, 4>}, {pipeline_mode = #tpu.pipeline_mode<synchronous>, transform_indices = @transform_1, window_bounds = array<i64: 3, 3, 4, 8>}, {transform_indices = @transform_2, window_bounds = array<i64: 3, 3, 8, 8>}, {transform_indices = @transform_3, window_bounds = array<i64: 4, 8>}, {pipeline_mode = #tpu.pipeline_mode<synchronous>, transform_indices = @transform_4, window_bounds = array<i64: 1, 4>}, {pipeline_mode = #tpu.pipeline_mode<synchronous>, transform_indices = @transform_5, window_bounds = array<i64: 1, 4>}, {pipeline_mode = #tpu.pipeline_mode<synchronous>, transform_indices = @transform_6, window_bounds = array<i64: 1, 8>}, {pipeline_mode = #tpu.pipeline_mode<synchronous>, transform_indices = @transform_7, window_bounds = array<i64: 1, 8>}, {transform_indices = @transform_8, window_bounds = array<i64: 1, 16, 16, 8>}]} {
    %c0_i32 = arith.constant 0 : i32
    %0 = arith.cmpi eq, %arg1, %c0_i32 : i32
    %1 = arith.extui %0 : i1 to i32
    %c0_i32_0 = arith.constant 0 : i32
    %2 = arith.cmpi ne, %1, %c0_i32_0 : i32
    scf.if %2 {
      %cst_80 = arith.constant 0.000000e+00 : f32
      %67 = vector.broadcast %cst_80 : f32 to vector<18x18x4xf32>
      %c0_81 = arith.constant 0 : index
      %c0_82 = arith.constant 0 : index
      %c0_83 = arith.constant 0 : index
      %68 = vector.load %arg11[%c0_81, %c0_82, %c0_83] : memref<18x18x4xf32, #tpu.memory_space<vmem>>, vector<18x18x4xf32>
      tpu.vector_store %arg11[%c0_81, %c0_82, %c0_83], %67 {strides = array<i32>} : memref<18x18x4xf32, #tpu.memory_space<vmem>>, vector<18x18x4xf32>,
      %cst_84 = arith.constant 0.000000e+00 : f32
      %69 = vector.broadcast %cst_84 : f32 to vector<18x18x8xf32>
      %c0_85 = arith.constant 0 : index
      %c0_86 = arith.constant 0 : index
      %c0_87 = arith.constant 0 : index
      %70 = vector.load %arg12[%c0_85, %c0_86, %c0_87] : memref<18x18x8xf32, #tpu.memory_space<vmem>>, vector<18x18x8xf32>
      tpu.vector_store %arg12[%c0_85, %c0_86, %c0_87], %69 {strides = array<i32>} : memref<18x18x8xf32, #tpu.memory_space<vmem>>, vector<18x18x8xf32>,
      %c0_88 = arith.constant 0 : index
      %c0_89 = arith.constant 0 : index
      %c0_90 = arith.constant 0 : index
      %c0_91 = arith.constant 0 : index
      %71 = vector.load %arg2[%c0_88, %c0_89, %c0_90, %c0_91] : memref<1x16x16x4xf32, #tpu.memory_space<vmem>>, vector<1x16x16x4xf32>
      %72 = vector.shape_cast %71 : vector<1x16x16x4xf32> to vector<16x16x4xf32>
      %c0_92 = arith.constant 0 : index
      %c0_93 = arith.constant 0 : index
      %73 = vector.load %arg6[%c0_92, %c0_93] : memref<1x4xf32, #tpu.memory_space<vmem>>, vector<1x4xf32>
      %74 = vector.shape_cast %73 : vector<1x4xf32> to vector<1x1x4xf32>
      %75 = vector.broadcast %74 : vector<1x1x4xf32> to vector<16x16x4xf32>
      %76 = arith.mulf %72, %75 : vector<16x16x4xf32>
      %c0_94 = arith.constant 0 : index
      %c0_95 = arith.constant 0 : index
      %77 = vector.load %arg7[%c0_94, %c0_95] : memref<1x4xf32, #tpu.memory_space<vmem>>, vector<1x4xf32>
      %78 = vector.shape_cast %77 : vector<1x4xf32> to vector<1x1x4xf32>
      %79 = vector.broadcast %78 : vector<1x1x4xf32> to vector<16x16x4xf32>
      %80 = arith.addf %76, %79 : vector<16x16x4xf32>
      %cst_96 = arith.constant 0.000000e+00 : f32
      %81 = vector.broadcast %cst_96 : f32 to vector<16x16x4xf32>
      %82 = arith.maximumf %80, %81 : vector<16x16x4xf32>
      %c1_97 = arith.constant 1 : index
      %c1_98 = arith.constant 1 : index
      %c0_99 = arith.constant 0 : index
      %83 = vector.load %arg11[%c1_97, %c1_98, %c0_99] : memref<18x18x4xf32, #tpu.memory_space<vmem>>, vector<16x16x4xf32>
      tpu.vector_store %arg11[%c1_97, %c1_98, %c0_99], %82 {strides = array<i32>} : memref<18x18x4xf32, #tpu.memory_space<vmem>>, vector<16x16x4xf32>,
      %cst_100 = arith.constant 0.000000e+00 : f32
      %84 = vector.broadcast %cst_100 : f32 to vector<256x8xf32>
      %c0_101 = arith.constant 0 : index
      %c0_102 = arith.constant 0 : index
      %c0_103 = arith.constant 0 : index
      %85 = vector.load %arg11[%c0_101, %c0_102, %c0_103] : memref<18x18x4xf32, #tpu.memory_space<vmem>>, vector<16x16x4xf32>
      %86 = vector.shape_cast %85 : vector<16x16x4xf32> to vector<256x4xf32>
      %c0_104 = arith.constant 0 : index
      %c0_105 = arith.constant 0 : index
      %c0_106 = arith.constant 0 : index
      %c0_107 = arith.constant 0 : index
      %87 = vector.load %arg3[%c0_104, %c0_105, %c0_106, %c0_107] : memref<3x3x4x8xf32, #tpu.memory_space<vmem>>, vector<1x1x4x8xf32>
      %88 = vector.shape_cast %87 : vector<1x1x4x8xf32> to vector<4x8xf32>
      %cst_108 = arith.constant dense<0.000000e+00> : vector<256x8xf32>
      %89 = tpu.matmul %86, %88, %cst_108 {dimension_numbers = #tpu.dot_dimension_numbers<[1], [0], [0], [1], [0, 0, 1, 1], [], []>} : vector<256x4xf32>, vector<4x8xf32>, vector<256x8xf32> -> vector<256x8xf32>
      %90 = arith.addf %84, %89 : vector<256x8xf32>
      %c0_109 = arith.constant 0 : index
      %c1_110 = arith.constant 1 : index
      %c0_111 = arith.constant 0 : index
      %91 = vector.load %arg11[%c0_109, %c1_110, %c0_111] : memref<18x18x4xf32, #tpu.memory_space<vmem>>, vector<16x16x4xf32>
      %92 = vector.shape_cast %91 : vector<16x16x4xf32> to vector<256x4xf32>
      %c0_112 = arith.constant 0 : index
      %c1_113 = arith.constant 1 : index
      %c0_114 = arith.constant 0 : index
      %c0_115 = arith.constant 0 : index
      %93 = vector.load %arg3[%c0_112, %c1_113, %c0_114, %c0_115] : memref<3x3x4x8xf32, #tpu.memory_space<vmem>>, vector<1x1x4x8xf32>
      %94 = vector.shape_cast %93 : vector<1x1x4x8xf32> to vector<4x8xf32>
      %cst_116 = arith.constant dense<0.000000e+00> : vector<256x8xf32>
      %95 = tpu.matmul %92, %94, %cst_116 {dimension_numbers = #tpu.dot_dimension_numbers<[1], [0], [0], [1], [0, 0, 1, 1], [], []>} : vector<256x4xf32>, vector<4x8xf32>, vector<256x8xf32> -> vector<256x8xf32>
      %96 = arith.addf %90, %95 : vector<256x8xf32>
      %c0_117 = arith.constant 0 : index
      %c2_118 = arith.constant 2 : index
      %c0_119 = arith.constant 0 : index
      %97 = vector.load %arg11[%c0_117, %c2_118, %c0_119] : memref<18x18x4xf32, #tpu.memory_space<vmem>>, vector<16x16x4xf32>
      %98 = vector.shape_cast %97 : vector<16x16x4xf32> to vector<256x4xf32>
      %c0_120 = arith.constant 0 : index
      %c2_121 = arith.constant 2 : index
      %c0_122 = arith.constant 0 : index
      %c0_123 = arith.constant 0 : index
      %99 = vector.load %arg3[%c0_120, %c2_121, %c0_122, %c0_123] : memref<3x3x4x8xf32, #tpu.memory_space<vmem>>, vector<1x1x4x8xf32>
      %100 = vector.shape_cast %99 : vector<1x1x4x8xf32> to vector<4x8xf32>
      %cst_124 = arith.constant dense<0.000000e+00> : vector<256x8xf32>
      %101 = tpu.matmul %98, %100, %cst_124 {dimension_numbers = #tpu.dot_dimension_numbers<[1], [0], [0], [1], [0, 0, 1, 1], [], []>} : vector<256x4xf32>, vector<4x8xf32>, vector<256x8xf32> -> vector<256x8xf32>
      %102 = arith.addf %96, %101 : vector<256x8xf32>
      %c1_125 = arith.constant 1 : index
      %c0_126 = arith.constant 0 : index
      %c0_127 = arith.constant 0 : index
      %103 = vector.load %arg11[%c1_125, %c0_126, %c0_127] : memref<18x18x4xf32, #tpu.memory_space<vmem>>, vector<16x16x4xf32>
      %104 = vector.shape_cast %103 : vector<16x16x4xf32> to vector<256x4xf32>
      %c1_128 = arith.constant 1 : index
      %c0_129 = arith.constant 0 : index
      %c0_130 = arith.constant 0 : index
      %c0_131 = arith.constant 0 : index
      %105 = vector.load %arg3[%c1_128, %c0_129, %c0_130, %c0_131] : memref<3x3x4x8xf32, #tpu.memory_space<vmem>>, vector<1x1x4x8xf32>
      %106 = vector.shape_cast %105 : vector<1x1x4x8xf32> to vector<4x8xf32>
      %cst_132 = arith.constant dense<0.000000e+00> : vector<256x8xf32>
      %107 = tpu.matmul %104, %106, %cst_132 {dimension_numbers = #tpu.dot_dimension_numbers<[1], [0], [0], [1], [0, 0, 1, 1], [], []>} : vector<256x4xf32>, vector<4x8xf32>, vector<256x8xf32> -> vector<256x8xf32>
      %108 = arith.addf %102, %107 : vector<256x8xf32>
      %c1_133 = arith.constant 1 : index
      %c1_134 = arith.constant 1 : index
      %c0_135 = arith.constant 0 : index
      %109 = vector.load %arg11[%c1_133, %c1_134, %c0_135] : memref<18x18x4xf32, #tpu.memory_space<vmem>>, vector<16x16x4xf32>
      %110 = vector.shape_cast %109 : vector<16x16x4xf32> to vector<256x4xf32>
      %c1_136 = arith.constant 1 : index
      %c1_137 = arith.constant 1 : index
      %c0_138 = arith.constant 0 : index
      %c0_139 = arith.constant 0 : index
      %111 = vector.load %arg3[%c1_136, %c1_137, %c0_138, %c0_139] : memref<3x3x4x8xf32, #tpu.memory_space<vmem>>, vector<1x1x4x8xf32>
      %112 = vector.shape_cast %111 : vector<1x1x4x8xf32> to vector<4x8xf32>
      %cst_140 = arith.constant dense<0.000000e+00> : vector<256x8xf32>
      %113 = tpu.matmul %110, %112, %cst_140 {dimension_numbers = #tpu.dot_dimension_numbers<[1], [0], [0], [1], [0, 0, 1, 1], [], []>} : vector<256x4xf32>, vector<4x8xf32>, vector<256x8xf32> -> vector<256x8xf32>
      %114 = arith.addf %108, %113 : vector<256x8xf32>
      %c1_141 = arith.constant 1 : index
      %c2_142 = arith.constant 2 : index
      %c0_143 = arith.constant 0 : index
      %115 = vector.load %arg11[%c1_141, %c2_142, %c0_143] : memref<18x18x4xf32, #tpu.memory_space<vmem>>, vector<16x16x4xf32>
      %116 = vector.shape_cast %115 : vector<16x16x4xf32> to vector<256x4xf32>
      %c1_144 = arith.constant 1 : index
      %c2_145 = arith.constant 2 : index
      %c0_146 = arith.constant 0 : index
      %c0_147 = arith.constant 0 : index
      %117 = vector.load %arg3[%c1_144, %c2_145, %c0_146, %c0_147] : memref<3x3x4x8xf32, #tpu.memory_space<vmem>>, vector<1x1x4x8xf32>
      %118 = vector.shape_cast %117 : vector<1x1x4x8xf32> to vector<4x8xf32>
      %cst_148 = arith.constant dense<0.000000e+00> : vector<256x8xf32>
      %119 = tpu.matmul %116, %118, %cst_148 {dimension_numbers = #tpu.dot_dimension_numbers<[1], [0], [0], [1], [0, 0, 1, 1], [], []>} : vector<256x4xf32>, vector<4x8xf32>, vector<256x8xf32> -> vector<256x8xf32>
      %120 = arith.addf %114, %119 : vector<256x8xf32>
      %c2_149 = arith.constant 2 : index
      %c0_150 = arith.constant 0 : index
      %c0_151 = arith.constant 0 : index
      %121 = vector.load %arg11[%c2_149, %c0_150, %c0_151] : memref<18x18x4xf32, #tpu.memory_space<vmem>>, vector<16x16x4xf32>
      %122 = vector.shape_cast %121 : vector<16x16x4xf32> to vector<256x4xf32>
      %c2_152 = arith.constant 2 : index
      %c0_153 = arith.constant 0 : index
      %c0_154 = arith.constant 0 : index
      %c0_155 = arith.constant 0 : index
      %123 = vector.load %arg3[%c2_152, %c0_153, %c0_154, %c0_155] : memref<3x3x4x8xf32, #tpu.memory_space<vmem>>, vector<1x1x4x8xf32>
      %124 = vector.shape_cast %123 : vector<1x1x4x8xf32> to vector<4x8xf32>
      %cst_156 = arith.constant dense<0.000000e+00> : vector<256x8xf32>
      %125 = tpu.matmul %122, %124, %cst_156 {dimension_numbers = #tpu.dot_dimension_numbers<[1], [0], [0], [1], [0, 0, 1, 1], [], []>} : vector<256x4xf32>, vector<4x8xf32>, vector<256x8xf32> -> vector<256x8xf32>
      %126 = arith.addf %120, %125 : vector<256x8xf32>
      %c2_157 = arith.constant 2 : index
      %c1_158 = arith.constant 1 : index
      %c0_159 = arith.constant 0 : index
      %127 = vector.load %arg11[%c2_157, %c1_158, %c0_159] : memref<18x18x4xf32, #tpu.memory_space<vmem>>, vector<16x16x4xf32>
      %128 = vector.shape_cast %127 : vector<16x16x4xf32> to vector<256x4xf32>
      %c2_160 = arith.constant 2 : index
      %c1_161 = arith.constant 1 : index
      %c0_162 = arith.constant 0 : index
      %c0_163 = arith.constant 0 : index
      %129 = vector.load %arg3[%c2_160, %c1_161, %c0_162, %c0_163] : memref<3x3x4x8xf32, #tpu.memory_space<vmem>>, vector<1x1x4x8xf32>
      %130 = vector.shape_cast %129 : vector<1x1x4x8xf32> to vector<4x8xf32>
      %cst_164 = arith.constant dense<0.000000e+00> : vector<256x8xf32>
      %131 = tpu.matmul %128, %130, %cst_164 {dimension_numbers = #tpu.dot_dimension_numbers<[1], [0], [0], [1], [0, 0, 1, 1], [], []>} : vector<256x4xf32>, vector<4x8xf32>, vector<256x8xf32> -> vector<256x8xf32>
      %132 = arith.addf %126, %131 : vector<256x8xf32>
      %c2_165 = arith.constant 2 : index
      %c2_166 = arith.constant 2 : index
      %c0_167 = arith.constant 0 : index
      %133 = vector.load %arg11[%c2_165, %c2_166, %c0_167] : memref<18x18x4xf32, #tpu.memory_space<vmem>>, vector<16x16x4xf32>
      %134 = vector.shape_cast %133 : vector<16x16x4xf32> to vector<256x4xf32>
      %c2_168 = arith.constant 2 : index
      %c2_169 = arith.constant 2 : index
      %c0_170 = arith.constant 0 : index
      %c0_171 = arith.constant 0 : index
      %135 = vector.load %arg3[%c2_168, %c2_169, %c0_170, %c0_171] : memref<3x3x4x8xf32, #tpu.memory_space<vmem>>, vector<1x1x4x8xf32>
      %136 = vector.shape_cast %135 : vector<1x1x4x8xf32> to vector<4x8xf32>
      %cst_172 = arith.constant dense<0.000000e+00> : vector<256x8xf32>
      %137 = tpu.matmul %134, %136, %cst_172 {dimension_numbers = #tpu.dot_dimension_numbers<[1], [0], [0], [1], [0, 0, 1, 1], [], []>} : vector<256x4xf32>, vector<4x8xf32>, vector<256x8xf32> -> vector<256x8xf32>
      %138 = arith.addf %132, %137 : vector<256x8xf32>
      %c0_173 = arith.constant 0 : index
      %c0_174 = arith.constant 0 : index
      %139 = vector.load %arg8[%c0_173, %c0_174] : memref<1x8xf32, #tpu.memory_space<vmem>>, vector<1x8xf32>
      %140 = vector.broadcast %139 : vector<1x8xf32> to vector<256x8xf32>
      %141 = arith.mulf %138, %140 : vector<256x8xf32>
      %c0_175 = arith.constant 0 : index
      %c0_176 = arith.constant 0 : index
      %142 = vector.load %arg9[%c0_175, %c0_176] : memref<1x8xf32, #tpu.memory_space<vmem>>, vector<1x8xf32>
      %143 = vector.broadcast %142 : vector<1x8xf32> to vector<256x8xf32>
      %144 = arith.addf %141, %143 : vector<256x8xf32>
      %cst_177 = arith.constant 0.000000e+00 : f32
      %145 = vector.broadcast %cst_177 : f32 to vector<256x8xf32>
      %146 = arith.maximumf %144, %145 : vector<256x8xf32>
      %147 = vector.shape_cast %146 : vector<256x8xf32> to vector<16x16x8xf32>
      %c1_178 = arith.constant 1 : index
      %c1_179 = arith.constant 1 : index
      %c0_180 = arith.constant 0 : index
      %148 = vector.load %arg12[%c1_178, %c1_179, %c0_180] : memref<18x18x8xf32, #tpu.memory_space<vmem>>, vector<16x16x8xf32>
      tpu.vector_store %arg12[%c1_178, %c1_179, %c0_180], %147 {strides = array<i32>} : memref<18x18x8xf32, #tpu.memory_space<vmem>>, vector<16x16x8xf32>,
    } else {
    }
    %cst = arith.constant 0.000000e+00 : f32
    %3 = vector.broadcast %cst : f32 to vector<256x8xf32>
    %c0 = arith.constant 0 : index
    %c0_1 = arith.constant 0 : index
    %c0_2 = arith.constant 0 : index
    %4 = vector.load %arg12[%c0, %c0_1, %c0_2] : memref<18x18x8xf32, #tpu.memory_space<vmem>>, vector<16x16x8xf32>
    %5 = vector.shape_cast %4 : vector<16x16x8xf32> to vector<256x8xf32>
    %c0_3 = arith.constant 0 : index
    %c0_4 = arith.constant 0 : index
    %c0_5 = arith.constant 0 : index
    %c0_6 = arith.constant 0 : index
    %6 = vector.load %arg4[%c0_3, %c0_4, %c0_5, %c0_6] : memref<3x3x8x8xf32, #tpu.memory_space<vmem>>, vector<1x1x8x8xf32>
    %7 = vector.shape_cast %6 : vector<1x1x8x8xf32> to vector<8x8xf32>
    %cst_7 = arith.constant dense<0.000000e+00> : vector<256x8xf32>
    %8 = tpu.matmul %5, %7, %cst_7 {dimension_numbers = #tpu.dot_dimension_numbers<[1], [0], [0], [1], [0, 0, 1, 1], [], []>} : vector<256x8xf32>, vector<8x8xf32>, vector<256x8xf32> -> vector<256x8xf32>
    %9 = arith.addf %3, %8 : vector<256x8xf32>
    %c0_8 = arith.constant 0 : index
    %c1 = arith.constant 1 : index
    %c0_9 = arith.constant 0 : index
    %10 = vector.load %arg12[%c0_8, %c1, %c0_9] : memref<18x18x8xf32, #tpu.memory_space<vmem>>, vector<16x16x8xf32>
    %11 = vector.shape_cast %10 : vector<16x16x8xf32> to vector<256x8xf32>
    %c0_10 = arith.constant 0 : index
    %c1_11 = arith.constant 1 : index
    %c0_12 = arith.constant 0 : index
    %c0_13 = arith.constant 0 : index
    %12 = vector.load %arg4[%c0_10, %c1_11, %c0_12, %c0_13] : memref<3x3x8x8xf32, #tpu.memory_space<vmem>>, vector<1x1x8x8xf32>
    %13 = vector.shape_cast %12 : vector<1x1x8x8xf32> to vector<8x8xf32>
    %cst_14 = arith.constant dense<0.000000e+00> : vector<256x8xf32>
    %14 = tpu.matmul %11, %13, %cst_14 {dimension_numbers = #tpu.dot_dimension_numbers<[1], [0], [0], [1], [0, 0, 1, 1], [], []>} : vector<256x8xf32>, vector<8x8xf32>, vector<256x8xf32> -> vector<256x8xf32>
    %15 = arith.addf %9, %14 : vector<256x8xf32>
    %c0_15 = arith.constant 0 : index
    %c2 = arith.constant 2 : index
    %c0_16 = arith.constant 0 : index
    %16 = vector.load %arg12[%c0_15, %c2, %c0_16] : memref<18x18x8xf32, #tpu.memory_space<vmem>>, vector<16x16x8xf32>
    %17 = vector.shape_cast %16 : vector<16x16x8xf32> to vector<256x8xf32>
    %c0_17 = arith.constant 0 : index
    %c2_18 = arith.constant 2 : index
    %c0_19 = arith.constant 0 : index
    %c0_20 = arith.constant 0 : index
    %18 = vector.load %arg4[%c0_17, %c2_18, %c0_19, %c0_20] : memref<3x3x8x8xf32, #tpu.memory_space<vmem>>, vector<1x1x8x8xf32>
    %19 = vector.shape_cast %18 : vector<1x1x8x8xf32> to vector<8x8xf32>
    %cst_21 = arith.constant dense<0.000000e+00> : vector<256x8xf32>
    %20 = tpu.matmul %17, %19, %cst_21 {dimension_numbers = #tpu.dot_dimension_numbers<[1], [0], [0], [1], [0, 0, 1, 1], [], []>} : vector<256x8xf32>, vector<8x8xf32>, vector<256x8xf32> -> vector<256x8xf32>
    %21 = arith.addf %15, %20 : vector<256x8xf32>
    %c1_22 = arith.constant 1 : index
    %c0_23 = arith.constant 0 : index
    %c0_24 = arith.constant 0 : index
    %22 = vector.load %arg12[%c1_22, %c0_23, %c0_24] : memref<18x18x8xf32, #tpu.memory_space<vmem>>, vector<16x16x8xf32>
    %23 = vector.shape_cast %22 : vector<16x16x8xf32> to vector<256x8xf32>
    %c1_25 = arith.constant 1 : index
    %c0_26 = arith.constant 0 : index
    %c0_27 = arith.constant 0 : index
    %c0_28 = arith.constant 0 : index
    %24 = vector.load %arg4[%c1_25, %c0_26, %c0_27, %c0_28] : memref<3x3x8x8xf32, #tpu.memory_space<vmem>>, vector<1x1x8x8xf32>
    %25 = vector.shape_cast %24 : vector<1x1x8x8xf32> to vector<8x8xf32>
    %cst_29 = arith.constant dense<0.000000e+00> : vector<256x8xf32>
    %26 = tpu.matmul %23, %25, %cst_29 {dimension_numbers = #tpu.dot_dimension_numbers<[1], [0], [0], [1], [0, 0, 1, 1], [], []>} : vector<256x8xf32>, vector<8x8xf32>, vector<256x8xf32> -> vector<256x8xf32>
    %27 = arith.addf %21, %26 : vector<256x8xf32>
    %c1_30 = arith.constant 1 : index
    %c1_31 = arith.constant 1 : index
    %c0_32 = arith.constant 0 : index
    %28 = vector.load %arg12[%c1_30, %c1_31, %c0_32] : memref<18x18x8xf32, #tpu.memory_space<vmem>>, vector<16x16x8xf32>
    %29 = vector.shape_cast %28 : vector<16x16x8xf32> to vector<256x8xf32>
    %c1_33 = arith.constant 1 : index
    %c1_34 = arith.constant 1 : index
    %c0_35 = arith.constant 0 : index
    %c0_36 = arith.constant 0 : index
    %30 = vector.load %arg4[%c1_33, %c1_34, %c0_35, %c0_36] : memref<3x3x8x8xf32, #tpu.memory_space<vmem>>, vector<1x1x8x8xf32>
    %31 = vector.shape_cast %30 : vector<1x1x8x8xf32> to vector<8x8xf32>
    %cst_37 = arith.constant dense<0.000000e+00> : vector<256x8xf32>
    %32 = tpu.matmul %29, %31, %cst_37 {dimension_numbers = #tpu.dot_dimension_numbers<[1], [0], [0], [1], [0, 0, 1, 1], [], []>} : vector<256x8xf32>, vector<8x8xf32>, vector<256x8xf32> -> vector<256x8xf32>
    %33 = arith.addf %27, %32 : vector<256x8xf32>
    %c1_38 = arith.constant 1 : index
    %c2_39 = arith.constant 2 : index
    %c0_40 = arith.constant 0 : index
    %34 = vector.load %arg12[%c1_38, %c2_39, %c0_40] : memref<18x18x8xf32, #tpu.memory_space<vmem>>, vector<16x16x8xf32>
    %35 = vector.shape_cast %34 : vector<16x16x8xf32> to vector<256x8xf32>
    %c1_41 = arith.constant 1 : index
    %c2_42 = arith.constant 2 : index
    %c0_43 = arith.constant 0 : index
    %c0_44 = arith.constant 0 : index
    %36 = vector.load %arg4[%c1_41, %c2_42, %c0_43, %c0_44] : memref<3x3x8x8xf32, #tpu.memory_space<vmem>>, vector<1x1x8x8xf32>
    %37 = vector.shape_cast %36 : vector<1x1x8x8xf32> to vector<8x8xf32>
    %cst_45 = arith.constant dense<0.000000e+00> : vector<256x8xf32>
    %38 = tpu.matmul %35, %37, %cst_45 {dimension_numbers = #tpu.dot_dimension_numbers<[1], [0], [0], [1], [0, 0, 1, 1], [], []>} : vector<256x8xf32>, vector<8x8xf32>, vector<256x8xf32> -> vector<256x8xf32>
    %39 = arith.addf %33, %38 : vector<256x8xf32>
    %c2_46 = arith.constant 2 : index
    %c0_47 = arith.constant 0 : index
    %c0_48 = arith.constant 0 : index
    %40 = vector.load %arg12[%c2_46, %c0_47, %c0_48] : memref<18x18x8xf32, #tpu.memory_space<vmem>>, vector<16x16x8xf32>
    %41 = vector.shape_cast %40 : vector<16x16x8xf32> to vector<256x8xf32>
    %c2_49 = arith.constant 2 : index
    %c0_50 = arith.constant 0 : index
    %c0_51 = arith.constant 0 : index
    %c0_52 = arith.constant 0 : index
    %42 = vector.load %arg4[%c2_49, %c0_50, %c0_51, %c0_52] : memref<3x3x8x8xf32, #tpu.memory_space<vmem>>, vector<1x1x8x8xf32>
    %43 = vector.shape_cast %42 : vector<1x1x8x8xf32> to vector<8x8xf32>
    %cst_53 = arith.constant dense<0.000000e+00> : vector<256x8xf32>
    %44 = tpu.matmul %41, %43, %cst_53 {dimension_numbers = #tpu.dot_dimension_numbers<[1], [0], [0], [1], [0, 0, 1, 1], [], []>} : vector<256x8xf32>, vector<8x8xf32>, vector<256x8xf32> -> vector<256x8xf32>
    %45 = arith.addf %39, %44 : vector<256x8xf32>
    %c2_54 = arith.constant 2 : index
    %c1_55 = arith.constant 1 : index
    %c0_56 = arith.constant 0 : index
    %46 = vector.load %arg12[%c2_54, %c1_55, %c0_56] : memref<18x18x8xf32, #tpu.memory_space<vmem>>, vector<16x16x8xf32>
    %47 = vector.shape_cast %46 : vector<16x16x8xf32> to vector<256x8xf32>
    %c2_57 = arith.constant 2 : index
    %c1_58 = arith.constant 1 : index
    %c0_59 = arith.constant 0 : index
    %c0_60 = arith.constant 0 : index
    %48 = vector.load %arg4[%c2_57, %c1_58, %c0_59, %c0_60] : memref<3x3x8x8xf32, #tpu.memory_space<vmem>>, vector<1x1x8x8xf32>
    %49 = vector.shape_cast %48 : vector<1x1x8x8xf32> to vector<8x8xf32>
    %cst_61 = arith.constant dense<0.000000e+00> : vector<256x8xf32>
    %50 = tpu.matmul %47, %49, %cst_61 {dimension_numbers = #tpu.dot_dimension_numbers<[1], [0], [0], [1], [0, 0, 1, 1], [], []>} : vector<256x8xf32>, vector<8x8xf32>, vector<256x8xf32> -> vector<256x8xf32>
    %51 = arith.addf %45, %50 : vector<256x8xf32>
    %c2_62 = arith.constant 2 : index
    %c2_63 = arith.constant 2 : index
    %c0_64 = arith.constant 0 : index
    %52 = vector.load %arg12[%c2_62, %c2_63, %c0_64] : memref<18x18x8xf32, #tpu.memory_space<vmem>>, vector<16x16x8xf32>
    %53 = vector.shape_cast %52 : vector<16x16x8xf32> to vector<256x8xf32>
    %c2_65 = arith.constant 2 : index
    %c2_66 = arith.constant 2 : index
    %c0_67 = arith.constant 0 : index
    %c0_68 = arith.constant 0 : index
    %54 = vector.load %arg4[%c2_65, %c2_66, %c0_67, %c0_68] : memref<3x3x8x8xf32, #tpu.memory_space<vmem>>, vector<1x1x8x8xf32>
    %55 = vector.shape_cast %54 : vector<1x1x8x8xf32> to vector<8x8xf32>
    %cst_69 = arith.constant dense<0.000000e+00> : vector<256x8xf32>
    %56 = tpu.matmul %53, %55, %cst_69 {dimension_numbers = #tpu.dot_dimension_numbers<[1], [0], [0], [1], [0, 0, 1, 1], [], []>} : vector<256x8xf32>, vector<8x8xf32>, vector<256x8xf32> -> vector<256x8xf32>
    %57 = arith.addf %51, %56 : vector<256x8xf32>
    %c1_70 = arith.constant 1 : index
    %c1_71 = arith.constant 1 : index
    %c0_72 = arith.constant 0 : index
    %58 = vector.load %arg11[%c1_70, %c1_71, %c0_72] : memref<18x18x4xf32, #tpu.memory_space<vmem>>, vector<16x16x4xf32>
    %59 = vector.shape_cast %58 : vector<16x16x4xf32> to vector<256x4xf32>
    %c0_73 = arith.constant 0 : index
    %c0_74 = arith.constant 0 : index
    %60 = vector.load %arg5[%c0_73, %c0_74] : memref<4x8xf32, #tpu.memory_space<vmem>>, vector<4x8xf32>
    %cst_75 = arith.constant dense<0.000000e+00> : vector<256x8xf32>
    %61 = tpu.matmul %59, %60, %cst_75 {dimension_numbers = #tpu.dot_dimension_numbers<[1], [0], [0], [1], [0, 0, 1, 1], [], []>} : vector<256x4xf32>, vector<4x8xf32>, vector<256x8xf32> -> vector<256x8xf32>
    %62 = arith.addf %57, %61 : vector<256x8xf32>
    %63 = vector.shape_cast %62 : vector<256x8xf32> to vector<16x16x8xf32>
    %c0_76 = arith.constant 0 : index
    %c0_77 = arith.constant 0 : index
    %c0_78 = arith.constant 0 : index
    %c0_79 = arith.constant 0 : index
    %64 = vector.load %arg10[%c0_76, %c0_77, %c0_78, %c0_79] : memref<1x16x16x8xf32, #tpu.memory_space<vmem>>, vector<1x16x16x8xf32>
    %65 = vector.shape_cast %64 : vector<1x16x16x8xf32> to vector<16x16x8xf32>
    %66 = vector.shape_cast %63 : vector<16x16x8xf32> to vector<1x16x16x8xf32>
    tpu.vector_store %arg10[%c0_76, %c0_77, %c0_78, %c0_79], %66 {strides = array<i32>} : memref<1x16x16x8xf32, #tpu.memory_space<vmem>>, vector<1x16x16x8xf32>,
    return
  }
  func.func @transform_0(%arg0: i32, %arg1: i32) -> (i32, i32, i32, i32) {
    %c0_i32 = arith.constant 0 : i32
    %c0_i32_0 = arith.constant 0 : i32
    %c0_i32_1 = arith.constant 0 : i32
    %c0_i32_2 = arith.constant 0 : i32
    return %arg0, %c0_i32, %c0_i32_0, %c0_i32_1 : i32, i32, i32, i32
  }
  func.func @transform_1(%arg0: i32, %arg1: i32) -> (i32, i32, i32, i32) {
    %c0_i32 = arith.constant 0 : i32
    %c0_i32_0 = arith.constant 0 : i32
    %c0_i32_1 = arith.constant 0 : i32
    %c0_i32_2 = arith.constant 0 : i32
    %c0_i32_3 = arith.constant 0 : i32
    return %c0_i32, %c0_i32_0, %c0_i32_1, %c0_i32_2 : i32, i32, i32, i32
  }
  func.func @transform_2(%arg0: i32, %arg1: i32) -> (i32, i32, i32, i32) {
    %c0_i32 = arith.constant 0 : i32
    %c0_i32_0 = arith.constant 0 : i32
    %c0_i32_1 = arith.constant 0 : i32
    %c0_i32_2 = arith.constant 0 : i32
    return %c0_i32, %c0_i32_0, %c0_i32_1, %arg1 : i32, i32, i32, i32
  }
  func.func @transform_3(%arg0: i32, %arg1: i32) -> (i32, i32) {
    %c0_i32 = arith.constant 0 : i32
    %c0_i32_0 = arith.constant 0 : i32
    return %c0_i32, %arg1 : i32, i32
  }
  func.func @transform_4(%arg0: i32, %arg1: i32) -> (i32, i32) {
    %c0_i32 = arith.constant 0 : i32
    %c0_i32_0 = arith.constant 0 : i32
    %c0_i32_1 = arith.constant 0 : i32
    return %c0_i32, %c0_i32_0 : i32, i32
  }
  func.func @transform_5(%arg0: i32, %arg1: i32) -> (i32, i32) {
    %c0_i32 = arith.constant 0 : i32
    %c0_i32_0 = arith.constant 0 : i32
    %c0_i32_1 = arith.constant 0 : i32
    return %c0_i32, %c0_i32_0 : i32, i32
  }
  func.func @transform_6(%arg0: i32, %arg1: i32) -> (i32, i32) {
    %c0_i32 = arith.constant 0 : i32
    %c0_i32_0 = arith.constant 0 : i32
    %c0_i32_1 = arith.constant 0 : i32
    return %c0_i32, %c0_i32_0 : i32, i32
  }
  func.func @transform_7(%arg0: i32, %arg1: i32) -> (i32, i32) {
    %c0_i32 = arith.constant 0 : i32
    %c0_i32_0 = arith.constant 0 : i32
    %c0_i32_1 = arith.constant 0 : i32
    return %c0_i32, %c0_i32_0 : i32, i32
  }
  func.func @transform_8(%arg0: i32, %arg1: i32) -> (i32, i32, i32, i32) {
    %c0_i32 = arith.constant 0 : i32
    %c0_i32_0 = arith.constant 0 : i32
    %c0_i32_1 = arith.constant 0 : i32
    return %arg0, %c0_i32, %c0_i32_0, %arg1 : i32, i32, i32, i32
  }
}

</mosaic_0001>

<llo_original>
// kernel: tpu_custom_call.1
$region0: #{tpu_custom_call.1}
  #allocation0 [shape = 'u32[]', space=smem, size = 0x4, offset = 0x4, fixed_abs, tag = 'smem constant byte address 0x4 - core index']
  #allocation1 [shape = 'u32[72,128]{1,0:T(1,128)}', space=vmem, size = 0x9000, scoped, tag = 'internal scratch']
  #allocation2 [shape = 'f32[18,18,4]{2,1,0:T(8,128)}', space=vmem, size = 0x36000, scoped, tag = 'scratch operand']
  #allocation3 [shape = 'f32[18,18,8]{2,1,0:T(8,128)}', space=vmem, size = 0x36000, scoped, tag = 'scratch operand']
  %s0 = inlined_call_operand.vmem [shape: f32[2,16,16,4], index: 0, kind: input, shape index: {}]
  %s1 = inlined_call_operand.vmem [shape: f32[3,3,4,8], index: 1, kind: input, shape index: {}]
  %s2 = inlined_call_operand.vmem [shape: f32[3,3,8,8], index: 2, kind: input, shape index: {}]
  %s3 = inlined_call_operand.vmem [shape: f32[4,8], index: 3, kind: input, shape index: {}]
  %s4 = inlined_call_operand.vmem [shape: f32[1,4], index: 4, kind: input, shape index: {}]
  %s5 = inlined_call_operand.vmem [shape: f32[1,4], index: 5, kind: input, shape index: {}]
  %s6 = inlined_call_operand.vmem [shape: f32[1,8], index: 6, kind: input, shape index: {}]
  %s7 = inlined_call_operand.vmem [shape: f32[1,8], index: 7, kind: input, shape index: {}]
  %s8 = inlined_call_operand.vmem [shape: f32[2,16,16,8], index: 8, kind: output, shape index: {}]
  %s9 = sld [smem:[#allocation0]]
  $region69: #{tpu_custom_call.1} parent=0
    _
  %s11 = ssub.s32 1, %s9
  %s12 = scalar_select 0, %s11, %s9
  loop: start=0, step=1, limit=4
  $region2: #{tpu_custom_call.1} parent=0 // loop_pre_header
    _
  $region3: #{tpu_custom_call.1} parent=0 // loop_header
    %s14 = sphi 0, %s18
    %p15 = scmp.ge.s32.totalorder %s14, 4
    %s21 = sphi 0, %s33
    %s22 = sphi 0, %s29
    %s23 = sphi 0, %s21
    %s24 = sphi 0, %s22
    %s25 = sphi 0, %s23
    %s26 = sphi 0, %s24
    %s36 = sphi 0, %s38
    %s39 = sphi 0, %s36
    %s40 = sphi 0, %s39
    %s56 = sphi 0, %s40
    %s60 = sphi 0, %s60
    %s62 = sphi 0, %s60
    %s63 = sphi 0, %s62
    %s77 = sphi 0, %s63
    %s83 = sphi 0, %s85
    %s86 = sphi 0, %s83
    %s87 = sphi 0, %s86
    %s103 = sphi 0, %s87
    %s109 = sphi 0, %s111
    %s112 = sphi 0, %s109
    %s113 = sphi 0, %s112
    %s129 = sphi 0, %s113
    %s133 = sphi 0, %s133
    %s135 = sphi 0, %s133
    %s136 = sphi 0, %s135
    %s150 = sphi 0, %s136
    %s154 = sphi 0, %s154
    %s156 = sphi 0, %s154
    %s157 = sphi 0, %s156
    %s171 = sphi 0, %s157
    %s175 = sphi 0, %s175
    %s177 = sphi 0, %s175
    %s178 = sphi 0, %s177
    %s192 = sphi 0, %s178
    %s196 = sphi 0, %s196
    %s198 = sphi 0, %s196
    %s199 = sphi 0, %s198
    %s213 = sphi 0, %s199
    %s221 = sphi 0, %s223
    %s224 = sphi 0, %s221
    %s225 = sphi 0, %s224
    %s241 = sphi 0, %s225
  $region4: #{tpu_custom_call.1} parent=0 // loop_header_branch
    %17 = sbr.rel (%p15) target = $region8
  $region5: #{tpu_custom_call.1} parent=0 // loop_body
    %s19 = ssub.s32 %s14, 1
    %s20 = ssub.s32 %s14, 2
    %s27 = sadd.s32 1, %s22
    %p28 = scmp.ge.s32.totalorder %s27, 1
    %s29 = scalar_select %p28, 0, %s27
    %s30 = sadd.s32 1, %s21
    %s31 = scalar_select %p28, %s30, %s21
    %p32 = scmp.ge.s32.totalorder %s31, 2
    %s33 = scalar_select %p32, 0, %s31
    %s34 = ssub.s32 %s21, %s33
    %p35 = scmp.eq.s32.totalorder %s34, 0
    %s37 = sadd.s32 %s36, 1
    %s38 = scalar_select %p35, %s36, %s37
    %p41 = pneg %p35
    %p42 = scmp.eq.s32.totalorder %s14, 1
    %p43 = por %p41, %p42
    %p44 = scmp.ne.s32.totalorder %s36, %s39
    %p45 = scmp.eq.s32.totalorder %s14, 0
    %p46 = por %p44, %p45
    %p47 = scmp.ne.s32.totalorder %s36, %s39
    %p48 = scmp.eq.s32.totalorder %s19, 1
    %p49 = por %p47, %p48
    %p50 = scmp.ne.s32.totalorder %s39, %s40
    %p51 = scmp.eq.s32.totalorder %s19, 0
    %p52 = por %p50, %p51
    %p53 = scmp.ne.s32.totalorder %s39, %s40
    %p54 = scmp.eq.s32.totalorder %s20, 1
    %p55 = por %p53, %p54
    %p57 = scmp.ne.s32.totalorder %s40, %s56
    %p58 = scmp.eq.s32.totalorder %s20, 0
    %p59 = por %p57, %p58
    %s61 = sadd.s32 %s60, 1
    %p64 = scmp.eq.s32.totalorder %s14, 1
    %p65 = scmp.ne.s32.totalorder %s60, %s62
    %p66 = scmp.eq.s32.totalorder %s14, 0
    %p67 = por %p65, %p66
    %p68 = scmp.ne.s32.totalorder %s60, %s62
    %p69 = scmp.eq.s32.totalorder %s19, 1
    %p70 = por %p68, %p69
    %p71 = scmp.ne.s32.totalorder %s62, %s63
    %p72 = scmp.eq.s32.totalorder %s19, 0
    %p73 = por %p71, %p72
    %p74 = scmp.ne.s32.totalorder %s62, %s63
    %p75 = scmp.eq.s32.totalorder %s20, 1
    %p76 = por %p74, %p75
    %p78 = scmp.ne.s32.totalorder %s63, %s77
    %p79 = scmp.eq.s32.totalorder %s20, 0
    %p80 = por %p78, %p79
    %s81 = ssub.s32 %s22, %s29
    %p82 = scmp.eq.s32.totalorder %s81, 0
    %s84 = sadd.s32 %s83, 1
    %s85 = scalar_select %p82, %s83, %s84
    %p88 = pneg %p82
    %p89 = scmp.eq.s32.totalorder %s14, 1
    %p90 = por %p88, %p89
    %p91 = scmp.ne.s32.totalorder %s83, %s86
    %p92 = scmp.eq.s32.totalorder %s14, 0
    %p93 = por %p91, %p92
    %p94 = scmp.ne.s32.totalorder %s83, %s86
    %p95 = scmp.eq.s32.totalorder %s19, 1
    %p96 = por %p94, %p95
    %p97 = scmp.ne.s32.totalorder %s86, %s87
    %p98 = scmp.eq.s32.totalorder %s19, 0
    %p99 = por %p97, %p98
    %p100 = scmp.ne.s32.totalorder %s86, %s87
    %p101 = scmp.eq.s32.totalorder %s20, 1
    %p102 = por %p100, %p101
    %p104 = scmp.ne.s32.totalorder %s87, %s103
    %p105 = scmp.eq.s32.totalorder %s20, 0
    %p106 = por %p104, %p105
    %s107 = ssub.s32 %s22, %s29
    %p108 = scmp.eq.s32.totalorder %s107, 0
    %s110 = sadd.s32 %s109, 1
    %s111 = scalar_select %p108, %s109, %s110
    %p114 = pneg %p108
    %p115 = scmp.eq.s32.totalorder %s14, 1
    %p116 = por %p114, %p115
    %p117 = scmp.ne.s32.totalorder %s109, %s112
    %p118 = scmp.eq.s32.totalorder %s14, 0
    %p119 = por %p117, %p118
    %p120 = scmp.ne.s32.totalorder %s109, %s112
    %p121 = scmp.eq.s32.totalorder %s19, 1
    %p122 = por %p120, %p121
    %p123 = scmp.ne.s32.totalorder %s112, %s113
    %p124 = scmp.eq.s32.totalorder %s19, 0
    %p125 = por %p123, %p124
    %p126 = scmp.ne.s32.totalorder %s112, %s113
    %p127 = scmp.eq.s32.totalorder %s20, 1
    %p128 = por %p126, %p127
    %p130 = scmp.ne.s32.totalorder %s113, %s129
    %p131 = scmp.eq.s32.totalorder %s20, 0
    %p132 = por %p130, %p131
    %s134 = sadd.s32 %s133, 1
    %p137 = scmp.eq.s32.totalorder %s14, 1
    %p138 = scmp.ne.s32.totalorder %s133, %s135
    %p139 = scmp.eq.s32.totalorder %s14, 0
    %p140 = por %p138, %p139
    %p141 = scmp.ne.s32.totalorder %s133, %s135
    %p142 = scmp.eq.s32.totalorder %s19, 1
    %p143 = por %p141, %p142
    %p144 = scmp.ne.s32.totalorder %s135, %s136
    %p145 = scmp.eq.s32.totalorder %s19, 0
    %p146 = por %p144, %p145
    %p147 = scmp.ne.s32.totalorder %s135, %s136
    %p148 = scmp.eq.s32.totalorder %s20, 1
    %p149 = por %p147, %p148
    %p151 = scmp.ne.s32.totalorder %s136, %s150
    %p152 = scmp.eq.s32.totalorder %s20, 0
    %p153 = por %p151, %p152
    %s155 = sadd.s32 %s154, 1
    %p158 = scmp.eq.s32.totalorder %s14, 1
    %p159 = scmp.ne.s32.totalorder %s154, %s156
    %p160 = scmp.eq.s32.totalorder %s14, 0
    %p161 = por %p159, %p160
    %p162 = scmp.ne.s32.totalorder %s154, %s156
    %p163 = scmp.eq.s32.totalorder %s19, 1
    %p164 = por %p162, %p163
    %p165 = scmp.ne.s32.totalorder %s156, %s157
    %p166 = scmp.eq.s32.totalorder %s19, 0
    %p167 = por %p165, %p166
    %p168 = scmp.ne.s32.totalorder %s156, %s157
    %p169 = scmp.eq.s32.totalorder %s20, 1
    %p170 = por %p168, %p169
    %p172 = scmp.ne.s32.totalorder %s157, %s171
    %p173 = scmp.eq.s32.totalorder %s20, 0
    %p174 = por %p172, %p173
    %s176 = sadd.s32 %s175, 1
    %p179 = scmp.eq.s32.totalorder %s14, 1
    %p180 = scmp.ne.s32.totalorder %s175, %s177
    %p181 = scmp.eq.s32.totalorder %s14, 0
    %p182 = por %p180, %p181
    %p183 = scmp.ne.s32.totalorder %s175, %s177
    %p184 = scmp.eq.s32.totalorder %s19, 1
    %p185 = por %p183, %p184
    %p186 = scmp.ne.s32.totalorder %s177, %s178
    %p187 = scmp.eq.s32.totalorder %s19, 0
    %p188 = por %p186, %p187
    %p189 = scmp.ne.s32.totalorder %s177, %s178
    %p190 = scmp.eq.s32.totalorder %s20, 1
    %p191 = por %p189, %p190
    %p193 = scmp.ne.s32.totalorder %s178, %s192
    %p194 = scmp.eq.s32.totalorder %s20, 0
    %p195 = por %p193, %p194
    %s197 = sadd.s32 %s196, 1
    %p200 = scmp.eq.s32.totalorder %s14, 1
    %p201 = scmp.ne.s32.totalorder %s196, %s198
    %p202 = scmp.eq.s32.totalorder %s14, 0
    %p203 = por %p201, %p202
    %p204 = scmp.ne.s32.totalorder %s196, %s198
    %p205 = scmp.eq.s32.totalorder %s19, 1
    %p206 = por %p204, %p205
    %p207 = scmp.ne.s32.totalorder %s198, %s199
    %p208 = scmp.eq.s32.totalorder %s19, 0
    %p209 = por %p207, %p208
    %p210 = scmp.ne.s32.totalorder %s198, %s199
    %p211 = scmp.eq.s32.totalorder %s20, 1
    %p212 = por %p210, %p211
    %p214 = scmp.ne.s32.totalorder %s199, %s213
    %p215 = scmp.eq.s32.totalorder %s20, 0
    %p216 = por %p214, %p215
    %s217 = ssub.s32 %s21, %s33
    %s218 = ssub.s32 %s22, %s29
    %s219 = sor.u32 %s217, %s218
    %p220 = scmp.eq.s32.totalorder %s219, 0
    %s222 = sadd.s32 %s221, 1
    %s223 = scalar_select %p220, %s221, %s222
    %p226 = pneg %p220
    %p227 = scmp.eq.s32.totalorder %s14, 1
    %p228 = por %p226, %p227
    %p229 = scmp.ne.s32.totalorder %s221, %s224
    %p230 = scmp.eq.s32.totalorder %s14, 0
    %p231 = por %p229, %p230
    %p232 = scmp.ne.s32.totalorder %s221, %s224
    %p233 = scmp.eq.s32.totalorder %s19, 1
    %p234 = por %p232, %p233
    %p235 = scmp.ne.s32.totalorder %s224, %s225
    %p236 = scmp.eq.s32.totalorder %s19, 0
    %p237 = por %p235, %p236
    %p238 = scmp.ne.s32.totalorder %s224, %s225
    %p239 = scmp.eq.s32.totalorder %s20, 1
    %p240 = por %p238, %p239
    %p242 = scmp.ne.s32.totalorder %s225, %s241
    %p243 = scmp.eq.s32.totalorder %s20, 0
    %p244 = por %p242, %p243
    %p245 = scmp.le.s32.totalorder 1, %s14
    %p246 = scmp.lt.s32.totalorder %s14, 3
    %p247 = pnand %p245, %p246
    %p248 = pneg %p247
    // Predicated region
    $region9: #{tpu_custom_call.1} parent=5 // pred_check
      _
    $region10: #{tpu_custom_call.1} parent=5 // pred_check_branch
      %250 = sbr.rel (%p247) target = $region12
    $region11: #{tpu_custom_call.1} parent=5 // pred_region
      %s251 = ssub.s32 %s14, 1
      // Predicated region
      $region13: #{tpu_custom_call.1} parent=11 // pred_check
        %p252 = pneg %p73
      $region14: #{tpu_custom_call.1} parent=11 // pred_check_branch
        %254 = sbr.rel (%p252) target = $region16
      $region15: #{tpu_custom_call.1} parent=11 // pred_region
        _
      $region16: #{tpu_custom_call.1} parent=11 // pred_fallthru
        _
      // Predicated region
      $region17: #{tpu_custom_call.1} parent=11 // pred_check
        %p255 = pneg %p99
      $region18: #{tpu_custom_call.1} parent=11 // pred_check_branch
        %257 = sbr.rel (%p255) target = $region20
      $region19: #{tpu_custom_call.1} parent=11 // pred_region
        %p258 = scmp.lt.s32.totalorder %s24, 0
        %s259 = scalar_select %p258, %s24, 0
        %s260 = smul.addr %s259, 8
        %s261 = scalar_lea.vmem %s2, %s260
      $region20: #{tpu_custom_call.1} parent=11 // pred_fallthru
        _
      // Predicated region
      $region21: #{tpu_custom_call.1} parent=11 // pred_check
        %p262 = pneg %p125
      $region22: #{tpu_custom_call.1} parent=11 // pred_check_branch
        %264 = sbr.rel (%p262) target = $region24
      $region23: #{tpu_custom_call.1} parent=11 // pred_region
        %p265 = scmp.lt.s32.totalorder %s24, 0
        %s266 = scalar_select %p265, %s24, 0
        %s267 = smul.addr %s266, 4
        %s268 = scalar_lea.vmem %s3, %s267
      $region24: #{tpu_custom_call.1} parent=11 // pred_fallthru
        _
      // Predicated region
      $region25: #{tpu_custom_call.1} parent=11 // pred_check
        %p269 = pneg %p146
      $region26: #{tpu_custom_call.1} parent=11 // pred_check_branch
        %271 = sbr.rel (%p269) target = $region28
      $region27: #{tpu_custom_call.1} parent=11 // pred_region
        _
      $region28: #{tpu_custom_call.1} parent=11 // pred_fallthru
        _
      // Predicated region
      $region29: #{tpu_custom_call.1} parent=11 // pred_check
        %p272 = pneg %p167
      $region30: #{tpu_custom_call.1} parent=11 // pred_check_branch
        %274 = sbr.rel (%p272) target = $region32
      $region31: #{tpu_custom_call.1} parent=11 // pred_region
        _
      $region32: #{tpu_custom_call.1} parent=11 // pred_fallthru
        _
      // Predicated region
      $region33: #{tpu_custom_call.1} parent=11 // pred_check
        %p275 = pneg %p188
      $region34: #{tpu_custom_call.1} parent=11 // pred_check_branch
        %277 = sbr.rel (%p275) target = $region36
      $region35: #{tpu_custom_call.1} parent=11 // pred_region
        _
      $region36: #{tpu_custom_call.1} parent=11 // pred_fallthru
        _
      // Predicated region
      $region37: #{tpu_custom_call.1} parent=11 // pred_check
        %p278 = pneg %p209
      $region38: #{tpu_custom_call.1} parent=11 // pred_check_branch
        %280 = sbr.rel (%p278) target = $region40
      $region39: #{tpu_custom_call.1} parent=11 // pred_region
        _
      $region40: #{tpu_custom_call.1} parent=11 // pred_fallthru
        _
    $region12: #{tpu_custom_call.1} parent=5 // pred_fallthru
      _
    %p281 = scmp.lt.s32.totalorder %s14, 2
    // Predicated region
    $region41: #{tpu_custom_call.1} parent=5 // pred_check
      %p282 = pneg %p281
    $region42: #{tpu_custom_call.1} parent=5 // pred_check_branch
      %284 = sbr.rel (%p282) target = $region44
    $region43: #{tpu_custom_call.1} parent=5 // pred_region
      // Predicated region
      $region45: #{tpu_custom_call.1} parent=43 // pred_check
        %p285 = pneg %p46
      $region46: #{tpu_custom_call.1} parent=43 // pred_check_branch
        %287 = sbr.rel (%p285) target = $region48
      $region47: #{tpu_custom_call.1} parent=43 // pred_region
        %p288 = scmp.lt.s32.totalorder %s21, 1
        %s289 = scalar_select %p288, %s21, 1
        %s290 = smul.addr %s289, 32
        %s291 = smul.addr %s290, 8
        %s292 = scalar_lea.vmem %s0, %s291
      $region48: #{tpu_custom_call.1} parent=43 // pred_fallthru
        _
    $region44: #{tpu_custom_call.1} parent=5 // pred_fallthru
      _
    %p293 = scmp.le.s32.totalorder 1, %s14
    %p294 = scmp.lt.s32.totalorder %s14, 3
    %p295 = pnand %p293, %p294
    %p296 = pneg %p295
    // Predicated region
    $region49: #{tpu_custom_call.1} parent=5 // pred_check
      _
    $region50: #{tpu_custom_call.1} parent=5 // pred_check_branch
      %298 = sbr.rel (%p295) target = $region52
    $region51: #{tpu_custom_call.1} parent=5 // pred_region
      %s299 = ssub.s32 %s14, 1
      %p300 = scmp.lt.s32.totalorder %s23, 1
      %s301 = scalar_select %p300, %s23, 1
      %s302 = smul.addr %s301, 32
      %s303 = smul.addr %s302, 8
      %s304 = scalar_lea.vmem %s0, %s303
      %p305 = pneg %p52
      %p306 = pneg %p49
      %p307 = pneg %p73
      %p308 = pneg %p70
      %p309 = scmp.lt.s32.totalorder %s24, 0
      %s310 = scalar_select %p309, %s24, 0
      %s311 = smul.addr %s310, 8
      %s312 = scalar_lea.vmem %s2, %s311
      %p313 = pneg %p99
      %p314 = pneg %p96
      %p315 = scmp.lt.s32.totalorder %s24, 0
      %s316 = scalar_select %p315, %s24, 0
      %s317 = smul.addr %s316, 4
      %s318 = scalar_lea.vmem %s3, %s317
      %p319 = pneg %p125
      %p320 = pneg %p122
      %p321 = pneg %p146
      %p322 = pneg %p143
      %p323 = pneg %p167
      %p324 = pneg %p164
      %p325 = pneg %p188
      %p326 = pneg %p185
      %p327 = pneg %p209
      %p328 = pneg %p206
      %p329 = pneg %p237
      %p330 = pneg %p234
      %p331 = scmp.lt.s32.totalorder %s23, 1
      %s332 = scalar_select %p331, %s23, 1
      %p333 = scmp.lt.s32.totalorder %s24, 0
      %s334 = scalar_select %p333, %s24, 0
      %s335 = smul.addr %s332, 32
      %s336 = sadd.s32 %s334, %s335
      %s337 = smul.addr %s336, 8
      %s338 = scalar_lea.vmem %s8, %s337
      %p339 = scmp.lt.s32.totalorder %s23, 1
      %s340 = scalar_select %p339, %s23, 1
      %s341 = smul.addr %s340, 32
      %s342 = smul.addr %s341, 8
      %s343 = scalar_lea.vmem %s0, %s342
      %p344 = scmp.lt.s32.totalorder %s24, 0
      %s345 = scalar_select %p344, %s24, 0
      %s346 = smul.addr %s345, 8
      %s347 = scalar_lea.vmem %s2, %s346
      %p348 = scmp.lt.s32.totalorder %s24, 0
      %s349 = scalar_select %p348, %s24, 0
      %s350 = smul.addr %s349, 4
      %s351 = scalar_lea.vmem %s3, %s350
      %p352 = scmp.lt.s32.totalorder %s23, 1
      %s353 = scalar_select %p352, %s23, 1
      %p354 = scmp.lt.s32.totalorder %s24, 0
      %s355 = scalar_select %p354, %s24, 0
      %s356 = smul.addr %s353, 32
      %s357 = sadd.s32 %s355, %s356
      %s358 = smul.addr %s357, 8
      %s359 = scalar_lea.vmem %s8, %s358
      %p360 = scmp.eq.s32.totalorder %s24, 0
      // Predicated region
      $region53: #{tpu_custom_call.1} parent=51 // pred_check
        %p361 = pneg %p360
      $region54: #{tpu_custom_call.1} parent=51 // pred_check_branch
        %363 = sbr.rel (%p361) target = $region56
      $region55: #{tpu_custom_call.1} parent=51 // pred_region
        %vm364 = vcmask 31744
        %365 = vst.msk [vmem:[#allocation2] sm:$0xff] %vm364, 0.0
        %366 = vst.msk [vmem:[#allocation2 + $0x8] sm:$0xff] %vm364, 0.0
        %vm367 = vcmask 25600
        %368 = vst.msk [vmem:[#allocation2 + $0x10] sm:$0x3] %vm367, 0.0
        %369 = vst.msk [vmem:[#allocation2 + $0x18] sm:$0xff] %vm364, 0.0
        %370 = vst.msk [vmem:[#allocation2 + $0x20] sm:$0xff] %vm364, 0.0
        %371 = vst.msk [vmem:[#allocation2 + $0x28] sm:$0x3] %vm367, 0.0
        %372 = vst.msk [vmem:[#allocation2 + $0x30] sm:$0xff] %vm364, 0.0
        %373 = vst.msk [vmem:[#allocation2 + $0x38] sm:$0xff] %vm364, 0.0
        %374 = vst.msk [vmem:[#allocation2 + $0x40] sm:$0x3] %vm367, 0.0
        %375 = vst.msk [vmem:[#allocation2 + $0x48] sm:$0xff] %vm364, 0.0
        %376 = vst.msk [vmem:[#allocation2 + $0x50] sm:$0xff] %vm364, 0.0
        %377 = vst.msk [vmem:[#allocation2 + $0x58] sm:$0x3] %vm367, 0.0
        %378 = vst.msk [vmem:[#allocation2 + $0x60] sm:$0xff] %vm364, 0.0
        %379 = vst.msk [vmem:[#allocation2 + $0x68] sm:$0xff] %vm364, 0.0
        %380 = vst.msk [vmem:[#allocation2 + $0x70] sm:$0x3] %vm367, 0.0
        %381 = vst.msk [vmem:[#allocation2 + $0x78] sm:$0xff] %vm364, 0.0
        %382 = vst.msk [vmem:[#allocation2 + $0x80] sm:$0xff] %vm364, 0.0
        %383 = vst.msk [vmem:[#allocation2 + $0x88] sm:$0x3] %vm367, 0.0
        %384 = vst.msk [vmem:[#allocation2 + $0x90] sm:$0xff] %vm364, 0.0
        %385 = vst.msk [vmem:[#allocation2 + $0x98] sm:$0xff] %vm364, 0.0
        %386 = vst.msk [vmem:[#allocation2 + $0xa0] sm:$0x3] %vm367, 0.0
        %387 = vst.msk [vmem:[#allocation2 + $0xa8] sm:$0xff] %vm364, 0.0
        %388 = vst.msk [vmem:[#allocation2 + $0xb0] sm:$0xff] %vm364, 0.0
        %389 = vst.msk [vmem:[#allocation2 + $0xb8] sm:$0x3] %vm367, 0.0
        %390 = vst.msk [vmem:[#allocation2 + $0xc0] sm:$0xff] %vm364, 0.0
        %391 = vst.msk [vmem:[#allocation2 + $0xc8] sm:$0xff] %vm364, 0.0
        %392 = vst.msk [vmem:[#allocation2 + $0xd0] sm:$0x3] %vm367, 0.0
        %393 = vst.msk [vmem:[#allocation2 + $0xd8] sm:$0xff] %vm364, 0.0
        %394 = vst.msk [vmem:[#allocation2 + $0xe0] sm:$0xff] %vm364, 0.0
        %395 = vst.msk [vmem:[#allocation2 + $0xe8] sm:$0x3] %vm367, 0.0
        %396 = vst.msk [vmem:[#allocation2 + $0xf0] sm:$0xff] %vm364, 0.0
        %397 = vst.msk [vmem:[#allocation2 + $0xf8] sm:$0xff] %vm364, 0.0
        %398 = vst.msk [vmem:[#allocation2 + $0x100] sm:$0x3] %vm367, 0.0
        %399 = vst.msk [vmem:[#allocation2 + $0x108] sm:$0xff] %vm364, 0.0
        %400 = vst.msk [vmem:[#allocation2 + $0x110] sm:$0xff] %vm364, 0.0
        %401 = vst.msk [vmem:[#allocation2 + $0x118] sm:$0x3] %vm367, 0.0
        %402 = vst.msk [vmem:[#allocation2 + $0x120] sm:$0xff] %vm364, 0.0
        %403 = vst.msk [vmem:[#allocation2 + $0x128] sm:$0xff] %vm364, 0.0
        %404 = vst.msk [vmem:[#allocation2 + $0x130] sm:$0x3] %vm367, 0.0
        %405 = vst.msk [vmem:[#allocation2 + $0x138] sm:$0xff] %vm364, 0.0
        %406 = vst.msk [vmem:[#allocation2 + $0x140] sm:$0xff] %vm364, 0.0
        %407 = vst.msk [vmem:[#allocation2 + $0x148] sm:$0x3] %vm367, 0.0
        %408 = vst.msk [vmem:[#allocation2 + $0x150] sm:$0xff] %vm364, 0.0
        %409 = vst.msk [vmem:[#allocation2 + $0x158] sm:$0xff] %vm364, 0.0
        %410 = vst.msk [vmem:[#allocation2 + $0x160] sm:$0x3] %vm367, 0.0
        %411 = vst.msk [vmem:[#allocation2 + $0x168] sm:$0xff] %vm364, 0.0
        %412 = vst.msk [vmem:[#allocation2 + $0x170] sm:$0xff] %vm364, 0.0
        %413 = vst.msk [vmem:[#allocation2 + $0x178] sm:$0x3] %vm367, 0.0
        %414 = vst.msk [vmem:[#allocation2 + $0x180] sm:$0xff] %vm364, 0.0
        %415 = vst.msk [vmem:[#allocation2 + $0x188] sm:$0xff] %vm364, 0.0
        %416 = vst.msk [vmem:[#allocation2 + $0x190] sm:$0x3] %vm367, 0.0
        %417 = vst.msk [vmem:[#allocation2 + $0x198] sm:$0xff] %vm364, 0.0
        %418 = vst.msk [vmem:[#allocation2 + $0x1a0] sm:$0xff] %vm364, 0.0
        %419 = vst.msk [vmem:[#allocation2 + $0x1a8] sm:$0x3] %vm367, 0.0
        %vm420 = vcmask 64512
        %421 = vst.msk [vmem:[#allocation3] sm:$0xff] %vm420, 0.0
        %422 = vst.msk [vmem:[#allocation3 + $0x8] sm:$0xff] %vm420, 0.0
        %vm423 = vcmask 58368
        %424 = vst.msk [vmem:[#allocation3 + $0x10] sm:$0x3] %vm423, 0.0
        %425 = vst.msk [vmem:[#allocation3 + $0x18] sm:$0xff] %vm420, 0.0
        %426 = vst.msk [vmem:[#allocation3 + $0x20] sm:$0xff] %vm420, 0.0
        %427 = vst.msk [vmem:[#allocation3 + $0x28] sm:$0x3] %vm423, 0.0
        %428 = vst.msk [vmem:[#allocation3 + $0x30] sm:$0xff] %vm420, 0.0
        %429 = vst.msk [vmem:[#allocation3 + $0x38] sm:$0xff] %vm420, 0.0
        %430 = vst.msk [vmem:[#allocation3 + $0x40] sm:$0x3] %vm423, 0.0
        %431 = vst.msk [vmem:[#allocation3 + $0x48] sm:$0xff] %vm420, 0.0
        %432 = vst.msk [vmem:[#allocation3 + $0x50] sm:$0xff] %vm420, 0.0
        %433 = vst.msk [vmem:[#allocation3 + $0x58] sm:$0x3] %vm423, 0.0
        %434 = vst.msk [vmem:[#allocation3 + $0x60] sm:$0xff] %vm420, 0.0
        %435 = vst.msk [vmem:[#allocation3 + $0x68] sm:$0xff] %vm420, 0.0
        %436 = vst.msk [vmem:[#allocation3 + $0x70] sm:$0x3] %vm423, 0.0
        %437 = vst.msk [vmem:[#allocation3 + $0x78] sm:$0xff] %vm420, 0.0
        %438 = vst.msk [vmem:[#allocation3 + $0x80] sm:$0xff] %vm420, 0.0
        %439 = vst.msk [vmem:[#allocation3 + $0x88] sm:$0x3] %vm423, 0.0
        %440 = vst.msk [vmem:[#allocation3 + $0x90] sm:$0xff] %vm420, 0.0
        %441 = vst.msk [vmem:[#allocation3 + $0x98] sm:$0xff] %vm420, 0.0
        %442 = vst.msk [vmem:[#allocation3 + $0xa0] sm:$0x3] %vm423, 0.0
        %443 = vst.msk [vmem:[#allocation3 + $0xa8] sm:$0xff] %vm420, 0.0
        %444 = vst.msk [vmem:[#allocation3 + $0xb0] sm:$0xff] %vm420, 0.0
        %445 = vst.msk [vmem:[#allocation3 + $0xb8] sm:$0x3] %vm423, 0.0
        %446 = vst.msk [vmem:[#allocation3 + $0xc0] sm:$0xff] %vm420, 0.0
        %447 = vst.msk [vmem:[#allocation3 + $0xc8] sm:$0xff] %vm420, 0.0
        %448 = vst.msk [vmem:[#allocation3 + $0xd0] sm:$0x3] %vm423, 0.0
        %449 = vst.msk [vmem:[#allocation3 + $0xd8] sm:$0xff] %vm420, 0.0
        %450 = vst.msk [vmem:[#allocation3 + $0xe0] sm:$0xff] %vm420, 0.0
        %451 = vst.msk [vmem:[#allocation3 + $0xe8] sm:$0x3] %vm423, 0.0
        %452 = vst.msk [vmem:[#allocation3 + $0xf0] sm:$0xff] %vm420, 0.0
        %453 = vst.msk [vmem:[#allocation3 + $0xf8] sm:$0xff] %vm420, 0.0
        %454 = vst.msk [vmem:[#allocation3 + $0x100] sm:$0x3] %vm423, 0.0
        %455 = vst.msk [vmem:[#allocation3 + $0x108] sm:$0xff] %vm420, 0.0
        %456 = vst.msk [vmem:[#allocation3 + $0x110] sm:$0xff] %vm420, 0.0
        %457 = vst.msk [vmem:[#allocation3 + $0x118] sm:$0x3] %vm423, 0.0
        %458 = vst.msk [vmem:[#allocation3 + $0x120] sm:$0xff] %vm420, 0.0
        %459 = vst.msk [vmem:[#allocation3 + $0x128] sm:$0xff] %vm420, 0.0
        %460 = vst.msk [vmem:[#allocation3 + $0x130] sm:$0x3] %vm423, 0.0
        %461 = vst.msk [vmem:[#allocation3 + $0x138] sm:$0xff] %vm420, 0.0
        %462 = vst.msk [vmem:[#allocation3 + $0x140] sm:$0xff] %vm420, 0.0
        %463 = vst.msk [vmem:[#allocation3 + $0x148] sm:$0x3] %vm423, 0.0
        %464 = vst.msk [vmem:[#allocation3 + $0x150] sm:$0xff] %vm420, 0.0
        %465 = vst.msk [vmem:[#allocation3 + $0x158] sm:$0xff] %vm420, 0.0
        %466 = vst.msk [vmem:[#allocation3 + $0x160] sm:$0x3] %vm423, 0.0
        %467 = vst.msk [vmem:[#allocation3 + $0x168] sm:$0xff] %vm420, 0.0
        %468 = vst.msk [vmem:[#allocation3 + $0x170] sm:$0xff] %vm420, 0.0
        %469 = vst.msk [vmem:[#allocation3 + $0x178] sm:$0x3] %vm423, 0.0
        %470 = vst.msk [vmem:[#allocation3 + $0x180] sm:$0xff] %vm420, 0.0
        %471 = vst.msk [vmem:[#allocation3 + $0x188] sm:$0xff] %vm420, 0.0
        %472 = vst.msk [vmem:[#allocation3 + $0x190] sm:$0x3] %vm423, 0.0
        %473 = vst.msk [vmem:[#allocation3 + $0x198] sm:$0xff] %vm420, 0.0
        %474 = vst.msk [vmem:[#allocation3 + $0x1a0] sm:$0xff] %vm420, 0.0
        %475 = vst.msk [vmem:[#allocation3 + $0x1a8] sm:$0x3] %vm423, 0.0
        %v476 = vld [vmem:[%s343] sm:$0xff]
        %v477 = vld [vmem:[%s343 + $0x8] sm:$0xff]
        %v478 = vld [vmem:[%s343 + $0x10] sm:$0xff]
        %v479 = vld [vmem:[%s343 + $0x18] sm:$0xff]
        %v480 = vld [vmem:[%s343 + $0x20] sm:$0xff]
        %v481 = vld [vmem:[%s343 + $0x28] sm:$0xff]
        %v482 = vld [vmem:[%s343 + $0x30] sm:$0xff]
        %v483 = vld [vmem:[%s343 + $0x38] sm:$0xff]
        %v484 = vld [vmem:[%s343 + $0x40] sm:$0xff]
        %v485 = vld [vmem:[%s343 + $0x48] sm:$0xff]
        %v486 = vld [vmem:[%s343 + $0x50] sm:$0xff]
        %v487 = vld [vmem:[%s343 + $0x58] sm:$0xff]
        %v488 = vld [vmem:[%s343 + $0x60] sm:$0xff]
        %v489 = vld [vmem:[%s343 + $0x68] sm:$0xff]
        %v490 = vld [vmem:[%s343 + $0x70] sm:$0xff]
        %v491 = vld [vmem:[%s343 + $0x78] sm:$0xff]
        %v492 = vld [vmem:[%s343 + $0x80] sm:$0xff]
        %v493 = vld [vmem:[%s343 + $0x88] sm:$0xff]
        %v494 = vld [vmem:[%s343 + $0x90] sm:$0xff]
        %v495 = vld [vmem:[%s343 + $0x98] sm:$0xff]
        %v496 = vld [vmem:[%s343 + $0xa0] sm:$0xff]
        %v497 = vld [vmem:[%s343 + $0xa8] sm:$0xff]
        %v498 = vld [vmem:[%s343 + $0xb0] sm:$0xff]
        %v499 = vld [vmem:[%s343 + $0xb8] sm:$0xff]
        %v500 = vld [vmem:[%s343 + $0xc0] sm:$0xff]
        %v501 = vld [vmem:[%s343 + $0xc8] sm:$0xff]
        %v502 = vld [vmem:[%s343 + $0xd0] sm:$0xff]
        %v503 = vld [vmem:[%s343 + $0xd8] sm:$0xff]
        %v504 = vld [vmem:[%s343 + $0xe0] sm:$0xff]
        %v505 = vld [vmem:[%s343 + $0xe8] sm:$0xff]
        %v506 = vld [vmem:[%s343 + $0xf0] sm:$0xff]
        %v507 = vld [vmem:[%s343 + $0xf8] sm:$0xff]
        %v508 = vld [vmem:[%s4] sm:$0x1]
        %v510 = vperm.slane %v508, 0
        %v512 = vmul.f32 %v476, %v510
        %v513 = vmul.f32 %v477, %v510
        %v514 = vmul.f32 %v478, %v510
        %v515 = vmul.f32 %v479, %v510
        %v516 = vmul.f32 %v480, %v510
        %v517 = vmul.f32 %v481, %v510
        %v518 = vmul.f32 %v482, %v510
        %v519 = vmul.f32 %v483, %v510
        %v520 = vmul.f32 %v484, %v510
        %v521 = vmul.f32 %v485, %v510
        %v522 = vmul.f32 %v486, %v510
        %v523 = vmul.f32 %v487, %v510
        %v524 = vmul.f32 %v488, %v510
        %v525 = vmul.f32 %v489, %v510
        %v526 = vmul.f32 %v490, %v510
        %v527 = vmul.f32 %v491, %v510
        %v528 = vmul.f32 %v492, %v510
        %v529 = vmul.f32 %v493, %v510
        %v530 = vmul.f32 %v494, %v510
        %v531 = vmul.f32 %v495, %v510
        %v532 = vmul.f32 %v496, %v510
        %v533 = vmul.f32 %v497, %v510
        %v534 = vmul.f32 %v498, %v510
        %v535 = vmul.f32 %v499, %v510
        %v536 = vmul.f32 %v500, %v510
        %v537 = vmul.f32 %v501, %v510
        %v538 = vmul.f32 %v502, %v510
        %v539 = vmul.f32 %v503, %v510
        %v540 = vmul.f32 %v504, %v510
        %v541 = vmul.f32 %v505, %v510
        %v542 = vmul.f32 %v506, %v510
        %v543 = vmul.f32 %v507, %v510
        %v544 = vld [vmem:[%s5] sm:$0x1]
        %v546 = vperm.slane %v544, 0
        %v548 = vadd.f32 %v512, %v546
        %v549 = vadd.f32 %v513, %v546
        %v550 = vadd.f32 %v514, %v546
        %v551 = vadd.f32 %v515, %v546
        %v552 = vadd.f32 %v516, %v546
        %v553 = vadd.f32 %v517, %v546
        %v554 = vadd.f32 %v518, %v546
        %v555 = vadd.f32 %v519, %v546
        %v556 = vadd.f32 %v520, %v546
        %v557 = vadd.f32 %v521, %v546
        %v558 = vadd.f32 %v522, %v546
        %v559 = vadd.f32 %v523, %v546
        %v560 = vadd.f32 %v524, %v546
        %v561 = vadd.f32 %v525, %v546
        %v562 = vadd.f32 %v526, %v546
        %v563 = vadd.f32 %v527, %v546
        %v564 = vadd.f32 %v528, %v546
        %v565 = vadd.f32 %v529, %v546
        %v566 = vadd.f32 %v530, %v546
        %v567 = vadd.f32 %v531, %v546
        %v568 = vadd.f32 %v532, %v546
        %v569 = vadd.f32 %v533, %v546
        %v570 = vadd.f32 %v534, %v546
        %v571 = vadd.f32 %v535, %v546
        %v572 = vadd.f32 %v536, %v546
        %v573 = vadd.f32 %v537, %v546
        %v574 = vadd.f32 %v538, %v546
        %v575 = vadd.f32 %v539, %v546
        %v576 = vadd.f32 %v540, %v546
        %v577 = vadd.f32 %v541, %v546
        %v578 = vadd.f32 %v542, %v546
        %v579 = vadd.f32 %v543, %v546
        %v580 = vmax.f32 %v548, 0.0
        %v581 = vmax.f32 %v549, 0.0
        %v582 = vmax.f32 %v550, 0.0
        %v583 = vmax.f32 %v551, 0.0
        %v584 = vmax.f32 %v552, 0.0
        %v585 = vmax.f32 %v553, 0.0
        %v586 = vmax.f32 %v554, 0.0
        %v587 = vmax.f32 %v555, 0.0
        %v588 = vmax.f32 %v556, 0.0
        %v589 = vmax.f32 %v557, 0.0
        %v590 = vmax.f32 %v558, 0.0
        %v591 = vmax.f32 %v559, 0.0
        %v592 = vmax.f32 %v560, 0.0
        %v593 = vmax.f32 %v561, 0.0
        %v594 = vmax.f32 %v562, 0.0
        %v595 = vmax.f32 %v563, 0.0
        %v596 = vmax.f32 %v564, 0.0
        %v597 = vmax.f32 %v565, 0.0
        %v598 = vmax.f32 %v566, 0.0
        %v599 = vmax.f32 %v567, 0.0
        %v600 = vmax.f32 %v568, 0.0
        %v601 = vmax.f32 %v569, 0.0
        %v602 = vmax.f32 %v570, 0.0
        %v603 = vmax.f32 %v571, 0.0
        %v604 = vmax.f32 %v572, 0.0
        %v605 = vmax.f32 %v573, 0.0
        %v606 = vmax.f32 %v574, 0.0
        %v607 = vmax.f32 %v575, 0.0
        %v608 = vmax.f32 %v576, 0.0
        %v609 = vmax.f32 %v577, 0.0
        %v610 = vmax.f32 %v578, 0.0
        %v611 = vmax.f32 %v579, 0.0
        %s612 = scalar_lea.vmem [#allocation2], 24
        %613 = vst.msk [vmem:[%s612 + $0x1] sm:$0xff] %vm364, %v580
        %614 = vst.msk [vmem:[%s612 + $0x9] sm:$0xff] %vm364, %v581
        %615 = vst.msk [vmem:[%s612 + $0x19] sm:$0xff] %vm364, %v582
        %616 = vst.msk [vmem:[%s612 + $0x21] sm:$0xff] %vm364, %v583
        %617 = vst.msk [vmem:[%s612 + $0x31] sm:$0xff] %vm364, %v584
        %618 = vst.msk [vmem:[%s612 + $0x39] sm:$0xff] %vm364, %v585
        %619 = vst.msk [vmem:[%s612 + $0x49] sm:$0xff] %vm364, %v586
        %620 = vst.msk [vmem:[%s612 + $0x51] sm:$0xff] %vm364, %v587
        %621 = vst.msk [vmem:[%s612 + $0x61] sm:$0xff] %vm364, %v588
        %622 = vst.msk [vmem:[%s612 + $0x69] sm:$0xff] %vm364, %v589
        %623 = vst.msk [vmem:[%s612 + $0x79] sm:$0xff] %vm364, %v590
        %624 = vst.msk [vmem:[%s612 + $0x81] sm:$0xff] %vm364, %v591
        %625 = vst.msk [vmem:[%s612 + $0x91] sm:$0xff] %vm364, %v592
        %626 = vst.msk [vmem:[%s612 + $0x99] sm:$0xff] %vm364, %v593
        %627 = vst.msk [vmem:[%s612 + $0xa9] sm:$0xff] %vm364, %v594
        %628 = vst.msk [vmem:[%s612 + $0xb1] sm:$0xff] %vm364, %v595
        %629 = vst.msk [vmem:[%s612 + $0xc1] sm:$0xff] %vm364, %v596
        %630 = vst.msk [vmem:[%s612 + $0xc9] sm:$0xff] %vm364, %v597
        %631 = vst.msk [vmem:[%s612 + $0xd9] sm:$0xff] %vm364, %v598
        %632 = vst.msk [vmem:[%s612 + $0xe1] sm:$0xff] %vm364, %v599
        %633 = vst.msk [vmem:[%s612 + $0xf1] sm:$0xff] %vm364, %v600
        %634 = vst.msk [vmem:[%s612 + $0xf9] sm:$0xff] %vm364, %v601
        %635 = vst.msk [vmem:[%s612 + $0x109] sm:$0xff] %vm364, %v602
        %636 = vst.msk [vmem:[%s612 + $0x111] sm:$0xff] %vm364, %v603
        %637 = vst.msk [vmem:[%s612 + $0x121] sm:$0xff] %vm364, %v604
        %638 = vst.msk [vmem:[%s612 + $0x129] sm:$0xff] %vm364, %v605
        %639 = vst.msk [vmem:[%s612 + $0x139] sm:$0xff] %vm364, %v606
        %640 = vst.msk [vmem:[%s612 + $0x141] sm:$0xff] %vm364, %v607
        %641 = vst.msk [vmem:[%s612 + $0x151] sm:$0xff] %vm364, %v608
        %642 = vst.msk [vmem:[%s612 + $0x159] sm:$0xff] %vm364, %v609
        %643 = vst.msk [vmem:[%s612 + $0x169] sm:$0xff] %vm364, %v610
        %644 = vst.msk [vmem:[%s612 + $0x171] sm:$0xff] %vm364, %v611
        %v645 = vld [vmem:[#allocation2] sm:$0xff]
        %v646 = vld [vmem:[#allocation2 + $0x8] sm:$0xff]
        %v647 = vld [vmem:[#allocation2 + $0x18] sm:$0xff]
        %v648 = vld [vmem:[#allocation2 + $0x20] sm:$0xff]
        %v649 = vld [vmem:[#allocation2 + $0x30] sm:$0xff]
        %v650 = vld [vmem:[#allocation2 + $0x38] sm:$0xff]
        %v651 = vld [vmem:[#allocation2 + $0x48] sm:$0xff]
        %v652 = vld [vmem:[#allocation2 + $0x50] sm:$0xff]
        %v653 = vld [vmem:[#allocation2 + $0x60] sm:$0xff]
        %v654 = vld [vmem:[#allocation2 + $0x68] sm:$0xff]
        %v655 = vld [vmem:[#allocation2 + $0x78] sm:$0xff]
        %v656 = vld [vmem:[#allocation2 + $0x80] sm:$0xff]
        %v657 = vld [vmem:[#allocation2 + $0x90] sm:$0xff]
        %v658 = vld [vmem:[#allocation2 + $0x98] sm:$0xff]
        %v659 = vld [vmem:[#allocation2 + $0xa8] sm:$0xff]
        %v660 = vld [vmem:[#allocation2 + $0xb0] sm:$0xff]
        %v661 = vld [vmem:[#allocation2 + $0xc0] sm:$0xff]
        %v662 = vld [vmem:[#allocation2 + $0xc8] sm:$0xff]
        %v663 = vld [vmem:[#allocation2 + $0xd8] sm:$0xff]
        %v664 = vld [vmem:[#allocation2 + $0xe0] sm:$0xff]
        %v665 = vld [vmem:[#allocation2 + $0xf0] sm:$0xff]
        %v666 = vld [vmem:[#allocation2 + $0xf8] sm:$0xff]
        %v667 = vld [vmem:[#allocation2 + $0x108] sm:$0xff]
        %v668 = vld [vmem:[#allocation2 + $0x110] sm:$0xff]
        %v669 = vld [vmem:[#allocation2 + $0x120] sm:$0xff]
        %v670 = vld [vmem:[#allocation2 + $0x128] sm:$0xff]
        %v671 = vld [vmem:[#allocation2 + $0x138] sm:$0xff]
        %v672 = vld [vmem:[#allocation2 + $0x140] sm:$0xff]
        %v673 = vld [vmem:[#allocation2 + $0x150] sm:$0xff]
        %v674 = vld [vmem:[#allocation2 + $0x158] sm:$0xff]
        %v675 = vld [vmem:[#allocation2 + $0x168] sm:$0xff]
        %v676 = vld [vmem:[#allocation2 + $0x170] sm:$0xff]
        %v677 = vld [vmem:[%s1] sm:$0xf]
        %v678 = vld [vmem:[#allocation2 + $0x1] sm:$0xff]
        %v679 = vld [vmem:[#allocation2 + $0x9] sm:$0xff]
        %v680 = vld [vmem:[#allocation2 + $0x19] sm:$0xff]
        %v681 = vld [vmem:[#allocation2 + $0x21] sm:$0xff]
        %v682 = vld [vmem:[#allocation2 + $0x31] sm:$0xff]
        %v683 = vld [vmem:[#allocation2 + $0x39] sm:$0xff]
        %v684 = vld [vmem:[#allocation2 + $0x49] sm:$0xff]
        %v685 = vld [vmem:[#allocation2 + $0x51] sm:$0xff]
        %v686 = vld [vmem:[#allocation2 + $0x61] sm:$0xff]
        %v687 = vld [vmem:[#allocation2 + $0x69] sm:$0xff]
        %v688 = vld [vmem:[#allocation2 + $0x79] sm:$0xff]
        %v689 = vld [vmem:[#allocation2 + $0x81] sm:$0xff]
        %v690 = vld [vmem:[#allocation2 + $0x91] sm:$0xff]
        %v691 = vld [vmem:[#allocation2 + $0x99] sm:$0xff]
        %v692 = vld [vmem:[#allocation2 + $0xa9] sm:$0xff]
        %v693 = vld [vmem:[#allocation2 + $0xb1] sm:$0xff]
        %v694 = vld [vmem:[#allocation2 + $0xc1] sm:$0xff]
        %v695 = vld [vmem:[#allocation2 + $0xc9] sm:$0xff]
        %v696 = vld [vmem:[#allocation2 + $0xd9] sm:$0xff]
        %v697 = vld [vmem:[#allocation2 + $0xe1] sm:$0xff]
        %v698 = vld [vmem:[#allocation2 + $0xf1] sm:$0xff]
        %v699 = vld [vmem:[#allocation2 + $0xf9] sm:$0xff]
        %v700 = vld [vmem:[#allocation2 + $0x109] sm:$0xff]
        %v701 = vld [vmem:[#allocation2 + $0x111] sm:$0xff]
        %v702 = vld [vmem:[#allocation2 + $0x121] sm:$0xff]
        %v703 = vld [vmem:[#allocation2 + $0x129] sm:$0xff]
        %v704 = vld [vmem:[#allocation2 + $0x139] sm:$0xff]
        %v705 = vld [vmem:[#allocation2 + $0x141] sm:$0xff]
        %v706 = vld [vmem:[#allocation2 + $0x151] sm:$0xff]
        %v707 = vld [vmem:[#allocation2 + $0x159] sm:$0xff]
        %v708 = vld [vmem:[#allocation2 + $0x169] sm:$0xff]
        %v709 = vld [vmem:[#allocation2 + $0x171] sm:$0xff]
        %s710 = scalar_lea.vmem %s1, 4
        %v711 = vld [vmem:[%s710] sm:$0xf]
        %v713 = vsel %vm364, %v678, 0
        %v716 = vsel %vm364, %v679, 0
        %v719 = vsel %vm364, %v680, 0
        %v722 = vsel %vm364, %v681, 0
        %v725 = vsel %vm364, %v682, 0
        %v728 = vsel %vm364, %v683, 0
        %v731 = vsel %vm364, %v684, 0
        %v734 = vsel %vm364, %v685, 0
        %v737 = vsel %vm364, %v686, 0
        %v740 = vsel %vm364, %v687, 0
        %v743 = vsel %vm364, %v688, 0
        %v746 = vsel %vm364, %v689, 0
        %v749 = vsel %vm364, %v690, 0
        %v752 = vsel %vm364, %v691, 0
        %v755 = vsel %vm364, %v692, 0
        %v758 = vsel %vm364, %v693, 0
        %v761 = vsel %vm364, %v694, 0
        %v764 = vsel %vm364, %v695, 0
        %v767 = vsel %vm364, %v696, 0
        %v770 = vsel %vm364, %v697, 0
        %v773 = vsel %vm364, %v698, 0
        %v776 = vsel %vm364, %v699, 0
        %v779 = vsel %vm364, %v700, 0
        %v782 = vsel %vm364, %v701, 0
        %v785 = vsel %vm364, %v702, 0
        %v788 = vsel %vm364, %v703, 0
        %v791 = vsel %vm364, %v704, 0
        %v794 = vsel %vm364, %v705, 0
        %v797 = vsel %vm364, %v706, 0
        %v800 = vsel %vm364, %v707, 0
        %v803 = vsel %vm364, %v708, 0
        %v806 = vsel %vm364, %v709, 0
        %vm808 = vcmask 1043456
        %v810 = vsel %vm808, %v711, 0
        %812 = vmatpush.msra.mxu0 0.0
        %813 = vmatpush.msra.mxu0 0.0
        %814 = vmatpush.msra.mxu0 0.0
        %815 = vmatpush.msra.mxu0 0.0
        %816 = vmatpush.msra.mxu0 0.0
        %817 = vmatpush.msra.mxu0 0.0
        %818 = vmatpush.msra.mxu0 0.0
        %819 = vmatpush.msra.mxu0 0.0
        %820 = vmatpush.msra.mxu0 0.0
        %821 = vmatpush.msra.mxu0 0.0
        %822 = vmatpush.msra.mxu0 0.0
        %823 = vmatpush.msra.mxu0 0.0
        %824 = vmatpush.msra.mxu0 0.0
        %825 = vmatpush.msra.mxu0 0.0
        %826 = vmatpush.msra.mxu0 0.0
        %827 = vmatpush.msra.mxu0 %v810
        %828 = vmatmul.f32.gmra.mxu0 %v713
        %v829 = vpop.f32.mrf.mxu0
        %v830 = vadd.f32 0.0, %v829
        %831 = vmatmul.f32.gmra.mxu0 %v716
        %v832 = vpop.f32.mrf.mxu0
        %v833 = vadd.f32 0.0, %v832
        %834 = vmatmul.f32.gmra.mxu0 %v719
        %v835 = vpop.f32.mrf.mxu0
        %v836 = vadd.f32 0.0, %v835
        %837 = vmatmul.f32.gmra.mxu0 %v722
        %v838 = vpop.f32.mrf.mxu0
        %v839 = vadd.f32 0.0, %v838
        %840 = vmatmul.f32.gmra.mxu0 %v725
        %v841 = vpop.f32.mrf.mxu0
        %v842 = vadd.f32 0.0, %v841
        %843 = vmatmul.f32.gmra.mxu0 %v728
        %v844 = vpop.f32.mrf.mxu0
        %v845 = vadd.f32 0.0, %v844
        %846 = vmatmul.f32.gmra.mxu0 %v731
        %v847 = vpop.f32.mrf.mxu0
        %v848 = vadd.f32 0.0, %v847
        %849 = vmatmul.f32.gmra.mxu0 %v734
        %v850 = vpop.f32.mrf.mxu0
        %v851 = vadd.f32 0.0, %v850
        %852 = vmatmul.f32.gmra.mxu0 %v737
        %v853 = vpop.f32.mrf.mxu0
        %v854 = vadd.f32 0.0, %v853
        %855 = vmatmul.f32.gmra.mxu0 %v740
        %v856 = vpop.f32.mrf.mxu0
        %v857 = vadd.f32 0.0, %v856
        %858 = vmatmul.f32.gmra.mxu0 %v743
        %v859 = vpop.f32.mrf.mxu0
        %v860 = vadd.f32 0.0, %v859
        %861 = vmatmul.f32.gmra.mxu0 %v746
        %v862 = vpop.f32.mrf.mxu0
        %v863 = vadd.f32 0.0, %v862
        %864 = vmatmul.f32.gmra.mxu0 %v749
        %v865 = vpop.f32.mrf.mxu0
        %v866 = vadd.f32 0.0, %v865
        %867 = vmatmul.f32.gmra.mxu0 %v752
        %v868 = vpop.f32.mrf.mxu0
        %v869 = vadd.f32 0.0, %v868
        %870 = vmatmul.f32.gmra.mxu0 %v755
        %v871 = vpop.f32.mrf.mxu0
        %v872 = vadd.f32 0.0, %v871
        %873 = vmatmul.f32.gmra.mxu0 %v758
        %v874 = vpop.f32.mrf.mxu0
        %v875 = vadd.f32 0.0, %v874
        %876 = vmatmul.f32.gmra.mxu0 %v761
        %v877 = vpop.f32.mrf.mxu0
        %v878 = vadd.f32 0.0, %v877
        %879 = vmatmul.f32.gmra.mxu0 %v764
        %v880 = vpop.f32.mrf.mxu0
        %v881 = vadd.f32 0.0, %v880
        %882 = vmatmul.f32.gmra.mxu0 %v767
        %v883 = vpop.f32.mrf.mxu0
        %v884 = vadd.f32 0.0, %v883
        %885 = vmatmul.f32.gmra.mxu0 %v770
        %v886 = vpop.f32.mrf.mxu0
        %v887 = vadd.f32 0.0, %v886
        %888 = vmatmul.f32.gmra.mxu0 %v773
        %v889 = vpop.f32.mrf.mxu0
        %v890 = vadd.f32 0.0, %v889
        %891 = vmatmul.f32.gmra.mxu0 %v776
        %v892 = vpop.f32.mrf.mxu0
        %v893 = vadd.f32 0.0, %v892
        %894 = vmatmul.f32.gmra.mxu0 %v779
        %v895 = vpop.f32.mrf.mxu0
        %v896 = vadd.f32 0.0, %v895
        %897 = vmatmul.f32.gmra.mxu0 %v782
        %v898 = vpop.f32.mrf.mxu0
        %v899 = vadd.f32 0.0, %v898
        %900 = vmatmul.f32.gmra.mxu0 %v785
        %v901 = vpop.f32.mrf.mxu0
        %v902 = vadd.f32 0.0, %v901
        %903 = vmatmul.f32.gmra.mxu0 %v788
        %v904 = vpop.f32.mrf.mxu0
        %v905 = vadd.f32 0.0, %v904
        %906 = vmatmul.f32.gmra.mxu0 %v791
        %v907 = vpop.f32.mrf.mxu0
        %v908 = vadd.f32 0.0, %v907
        %909 = vmatmul.f32.gmra.mxu0 %v794
        %v910 = vpop.f32.mrf.mxu0
        %v911 = vadd.f32 0.0, %v910
        %912 = vmatmul.f32.gmra.mxu0 %v797
        %v913 = vpop.f32.mrf.mxu0
        %v914 = vadd.f32 0.0, %v913
        %915 = vmatmul.f32.gmra.mxu0 %v800
        %v916 = vpop.f32.mrf.mxu0
        %v917 = vadd.f32 0.0, %v916
        %918 = vmatmul.f32.gmra.mxu0 %v803
        %v919 = vpop.f32.mrf.mxu0
        %v920 = vadd.f32 0.0, %v919
        %921 = vmatmul.f32.gmra.mxu0 %v806
        %v922 = vpop.f32.mrf.mxu0
        %v923 = vadd.f32 0.0, %v922
        %924 = vdwg.mxu0
        %v926 = vsel %vm364, %v645, 0
        %v929 = vsel %vm364, %v646, 0
        %v932 = vsel %vm364, %v647, 0
        %v935 = vsel %vm364, %v648, 0
        %v938 = vsel %vm364, %v649, 0
        %v941 = vsel %vm364, %v650, 0
        %v944 = vsel %vm364, %v651, 0
        %v947 = vsel %vm364, %v652, 0
        %v950 = vsel %vm364, %v653, 0
        %v953 = vsel %vm364, %v654, 0
        %v956 = vsel %vm364, %v655, 0
        %v959 = vsel %vm364, %v656, 0
        %v962 = vsel %vm364, %v657, 0
        %v965 = vsel %vm364, %v658, 0
        %v968 = vsel %vm364, %v659, 0
        %v971 = vsel %vm364, %v660, 0
        %v974 = vsel %vm364, %v661, 0
        %v977 = vsel %vm364, %v662, 0
        %v980 = vsel %vm364, %v663, 0
        %v983 = vsel %vm364, %v664, 0
        %v986 = vsel %vm364, %v665, 0
        %v989 = vsel %vm364, %v666, 0
        %v992 = vsel %vm364, %v667, 0
        %v995 = vsel %vm364, %v668, 0
        %v998 = vsel %vm364, %v669, 0
        %v1001 = vsel %vm364, %v670, 0
        %v1004 = vsel %vm364, %v671, 0
        %v1007 = vsel %vm364, %v672, 0
        %v1010 = vsel %vm364, %v673, 0
        %v1013 = vsel %vm364, %v674, 0
        %v1016 = vsel %vm364, %v675, 0
        %v1019 = vsel %vm364, %v676, 0
        %v1022 = vsel %vm808, %v677, 0
        %1024 = vmatpush.msra.mxu0 0.0
        %1025 = vmatpush.msra.mxu0 0.0
        %1026 = vmatpush.msra.mxu0 0.0
        %1027 = vmatpush.msra.mxu0 0.0
        %1028 = vmatpush.msra.mxu0 0.0
        %1029 = vmatpush.msra.mxu0 0.0
        %1030 = vmatpush.msra.mxu0 0.0
        %1031 = vmatpush.msra.mxu0 0.0
        %1032 = vmatpush.msra.mxu0 0.0
        %1033 = vmatpush.msra.mxu0 0.0
        %1034 = vmatpush.msra.mxu0 0.0
        %1035 = vmatpush.msra.mxu0 0.0
        %1036 = vmatpush.msra.mxu0 0.0
        %1037 = vmatpush.msra.mxu0 0.0
        %1038 = vmatpush.msra.mxu0 0.0
        %1039 = vmatpush.msra.mxu0 %v1022
        %1040 = vmatmul.f32.gmra.mxu0 %v926
        %v1041 = vpop.f32.mrf.mxu0
        %v1042 = vadd.f32 %v830, %v1041
        %1043 = vmatmul.f32.gmra.mxu0 %v929
        %v1044 = vpop.f32.mrf.mxu0
        %v1045 = vadd.f32 %v833, %v1044
        %1046 = vmatmul.f32.gmra.mxu0 %v932
        %v1047 = vpop.f32.mrf.mxu0
        %v1048 = vadd.f32 %v836, %v1047
        %1049 = vmatmul.f32.gmra.mxu0 %v935
        %v1050 = vpop.f32.mrf.mxu0
        %v1051 = vadd.f32 %v839, %v1050
        %1052 = vmatmul.f32.gmra.mxu0 %v938
        %v1053 = vpop.f32.mrf.mxu0
        %v1054 = vadd.f32 %v842, %v1053
        %1055 = vmatmul.f32.gmra.mxu0 %v941
        %v1056 = vpop.f32.mrf.mxu0
        %v1057 = vadd.f32 %v845, %v1056
        %1058 = vmatmul.f32.gmra.mxu0 %v944
        %v1059 = vpop.f32.mrf.mxu0
        %v1060 = vadd.f32 %v848, %v1059
        %1061 = vmatmul.f32.gmra.mxu0 %v947
        %v1062 = vpop.f32.mrf.mxu0
        %v1063 = vadd.f32 %v851, %v1062
        %1064 = vmatmul.f32.gmra.mxu0 %v950
        %v1065 = vpop.f32.mrf.mxu0
        %v1066 = vadd.f32 %v854, %v1065
        %1067 = vmatmul.f32.gmra.mxu0 %v953
        %v1068 = vpop.f32.mrf.mxu0
        %v1069 = vadd.f32 %v857, %v1068
        %1070 = vmatmul.f32.gmra.mxu0 %v956
        %v1071 = vpop.f32.mrf.mxu0
        %v1072 = vadd.f32 %v860, %v1071
        %1073 = vmatmul.f32.gmra.mxu0 %v959
        %v1074 = vpop.f32.mrf.mxu0
        %v1075 = vadd.f32 %v863, %v1074
        %1076 = vmatmul.f32.gmra.mxu0 %v962
        %v1077 = vpop.f32.mrf.mxu0
        %v1078 = vadd.f32 %v866, %v1077
        %1079 = vmatmul.f32.gmra.mxu0 %v965
        %v1080 = vpop.f32.mrf.mxu0
        %v1081 = vadd.f32 %v869, %v1080
        %1082 = vmatmul.f32.gmra.mxu0 %v968
        %v1083 = vpop.f32.mrf.mxu0
        %v1084 = vadd.f32 %v872, %v1083
        %1085 = vmatmul.f32.gmra.mxu0 %v971
        %v1086 = vpop.f32.mrf.mxu0
        %v1087 = vadd.f32 %v875, %v1086
        %1088 = vmatmul.f32.gmra.mxu0 %v974
        %v1089 = vpop.f32.mrf.mxu0
        %v1090 = vadd.f32 %v878, %v1089
        %1091 = vmatmul.f32.gmra.mxu0 %v977
        %v1092 = vpop.f32.mrf.mxu0
        %v1093 = vadd.f32 %v881, %v1092
        %1094 = vmatmul.f32.gmra.mxu0 %v980
        %v1095 = vpop.f32.mrf.mxu0
        %v1096 = vadd.f32 %v884, %v1095
        %1097 = vmatmul.f32.gmra.mxu0 %v983
        %v1098 = vpop.f32.mrf.mxu0
        %v1099 = vadd.f32 %v887, %v1098
        %1100 = vmatmul.f32.gmra.mxu0 %v986
        %v1101 = vpop.f32.mrf.mxu0
        %v1102 = vadd.f32 %v890, %v1101
        %1103 = vmatmul.f32.gmra.mxu0 %v989
        %v1104 = vpop.f32.mrf.mxu0
        %v1105 = vadd.f32 %v893, %v1104
        %1106 = vmatmul.f32.gmra.mxu0 %v992
        %v1107 = vpop.f32.mrf.mxu0
        %v1108 = vadd.f32 %v896, %v1107
        %1109 = vmatmul.f32.gmra.mxu0 %v995
        %v1110 = vpop.f32.mrf.mxu0
        %v1111 = vadd.f32 %v899, %v1110
        %1112 = vmatmul.f32.gmra.mxu0 %v998
        %v1113 = vpop.f32.mrf.mxu0
        %v1114 = vadd.f32 %v902, %v1113
        %1115 = vmatmul.f32.gmra.mxu0 %v1001
        %v1116 = vpop.f32.mrf.mxu0
        %v1117 = vadd.f32 %v905, %v1116
        %1118 = vmatmul.f32.gmra.mxu0 %v1004
        %v1119 = vpop.f32.mrf.mxu0
        %v1120 = vadd.f32 %v908, %v1119
        %1121 = vmatmul.f32.gmra.mxu0 %v1007
        %v1122 = vpop.f32.mrf.mxu0
        %v1123 = vadd.f32 %v911, %v1122
        %1124 = vmatmul.f32.gmra.mxu0 %v1010
        %v1125 = vpop.f32.mrf.mxu0
        %v1126 = vadd.f32 %v914, %v1125
        %1127 = vmatmul.f32.gmra.mxu0 %v1013
        %v1128 = vpop.f32.mrf.mxu0
        %v1129 = vadd.f32 %v917, %v1128
        %1130 = vmatmul.f32.gmra.mxu0 %v1016
        %v1131 = vpop.f32.mrf.mxu0
        %v1132 = vadd.f32 %v920, %v1131
        %1133 = vmatmul.f32.gmra.mxu0 %v1019
        %v1134 = vpop.f32.mrf.mxu0
        %v1135 = vadd.f32 %v923, %v1134
        %1136 = vdwg.mxu0
        %v1137 = vld [vmem:[#allocation2 + $0x2] sm:$0xff]
        %v1138 = vld [vmem:[#allocation2 + $0xa] sm:$0xff]
        %v1139 = vld [vmem:[#allocation2 + $0x1a] sm:$0xff]
        %v1140 = vld [vmem:[#allocation2 + $0x22] sm:$0xff]
        %v1141 = vld [vmem:[#allocation2 + $0x32] sm:$0xff]
        %v1142 = vld [vmem:[#allocation2 + $0x3a] sm:$0xff]
        %v1143 = vld [vmem:[#allocation2 + $0x4a] sm:$0xff]
        %v1144 = vld [vmem:[#allocation2 + $0x52] sm:$0xff]
        %v1145 = vld [vmem:[#allocation2 + $0x62] sm:$0xff]
        %v1146 = vld [vmem:[#allocation2 + $0x6a] sm:$0xff]
        %v1147 = vld [vmem:[#allocation2 + $0x7a] sm:$0xff]
        %v1148 = vld [vmem:[#allocation2 + $0x82] sm:$0xff]
        %v1149 = vld [vmem:[#allocation2 + $0x92] sm:$0xff]
        %v1150 = vld [vmem:[#allocation2 + $0x9a] sm:$0xff]
        %v1151 = vld [vmem:[#allocation2 + $0xaa] sm:$0xff]
        %v1152 = vld [vmem:[#allocation2 + $0xb2] sm:$0xff]
        %v1153 = vld [vmem:[#allocation2 + $0xc2] sm:$0xff]
        %v1154 = vld [vmem:[#allocation2 + $0xca] sm:$0xff]
        %v1155 = vld [vmem:[#allocation2 + $0xda] sm:$0xff]
        %v1156 = vld [vmem:[#allocation2 + $0xe2] sm:$0xff]
        %v1157 = vld [vmem:[#allocation2 + $0xf2] sm:$0xff]
        %v1158 = vld [vmem:[#allocation2 + $0xfa] sm:$0xff]
        %v1159 = vld [vmem:[#allocation2 + $0x10a] sm:$0xff]
        %v1160 = vld [vmem:[#allocation2 + $0x112] sm:$0xff]
        %v1161 = vld [vmem:[#allocation2 + $0x122] sm:$0xff]
        %v1162 = vld [vmem:[#allocation2 + $0x12a] sm:$0xff]
        %v1163 = vld [vmem:[#allocation2 + $0x13a] sm:$0xff]
        %v1164 = vld [vmem:[#allocation2 + $0x142] sm:$0xff]
        %v1165 = vld [vmem:[#allocation2 + $0x152] sm:$0xff]
        %v1166 = vld [vmem:[#allocation2 + $0x15a] sm:$0xff]
        %v1167 = vld [vmem:[#allocation2 + $0x16a] sm:$0xff]
        %v1168 = vld [vmem:[#allocation2 + $0x172] sm:$0xff]
        %s1169 = scalar_lea.vmem %s1, 8
        %v1170 = vld [vmem:[%s1169] sm:$0xf]
        %v1172 = vsel %vm364, %v1137, 0
        %v1175 = vsel %vm364, %v1138, 0
        %v1178 = vsel %vm364, %v1139, 0
        %v1181 = vsel %vm364, %v1140, 0
        %v1184 = vsel %vm364, %v1141, 0
        %v1187 = vsel %vm364, %v1142, 0
        %v1190 = vsel %vm364, %v1143, 0
        %v1193 = vsel %vm364, %v1144, 0
        %v1196 = vsel %vm364, %v1145, 0
        %v1199 = vsel %vm364, %v1146, 0
        %v1202 = vsel %vm364, %v1147, 0
        %v1205 = vsel %vm364, %v1148, 0
        %v1208 = vsel %vm364, %v1149, 0
        %v1211 = vsel %vm364, %v1150, 0
        %v1214 = vsel %vm364, %v1151, 0
        %v1217 = vsel %vm364, %v1152, 0
        %v1220 = vsel %vm364, %v1153, 0
        %v1223 = vsel %vm364, %v1154, 0
        %v1226 = vsel %vm364, %v1155, 0
        %v1229 = vsel %vm364, %v1156, 0
        %v1232 = vsel %vm364, %v1157, 0
        %v1235 = vsel %vm364, %v1158, 0
        %v1238 = vsel %vm364, %v1159, 0
        %v1241 = vsel %vm364, %v1160, 0
        %v1244 = vsel %vm364, %v1161, 0
        %v1247 = vsel %vm364, %v1162, 0
        %v1250 = vsel %vm364, %v1163, 0
        %v1253 = vsel %vm364, %v1164, 0
        %v1256 = vsel %vm364, %v1165, 0
        %v1259 = vsel %vm364, %v1166, 0
        %v1262 = vsel %vm364, %v1167, 0
        %v1265 = vsel %vm364, %v1168, 0
        %v1268 = vsel %vm808, %v1170, 0
        %1270 = vmatpush.msra.mxu0 0.0
        %1271 = vmatpush.msra.mxu0 0.0
        %1272 = vmatpush.msra.mxu0 0.0
        %1273 = vmatpush.msra.mxu0 0.0
        %1274 = vmatpush.msra.mxu0 0.0
        %1275 = vmatpush.msra.mxu0 0.0
        %1276 = vmatpush.msra.mxu0 0.0
        %1277 = vmatpush.msra.mxu0 0.0
        %1278 = vmatpush.msra.mxu0 0.0
        %1279 = vmatpush.msra.mxu0 0.0
        %1280 = vmatpush.msra.mxu0 0.0
        %1281 = vmatpush.msra.mxu0 0.0
        %1282 = vmatpush.msra.mxu0 0.0
        %1283 = vmatpush.msra.mxu0 0.0
        %1284 = vmatpush.msra.mxu0 0.0
        %1285 = vmatpush.msra.mxu0 %v1268
        %1286 = vmatmul.f32.gmra.mxu0 %v1172
        %v1287 = vpop.f32.mrf.mxu0
        %v1288 = vadd.f32 0.0, %v1287
        %1289 = vmatmul.f32.gmra.mxu0 %v1175
        %v1290 = vpop.f32.mrf.mxu0
        %v1291 = vadd.f32 0.0, %v1290
        %1292 = vmatmul.f32.gmra.mxu0 %v1178
        %v1293 = vpop.f32.mrf.mxu0
        %v1294 = vadd.f32 0.0, %v1293
        %1295 = vmatmul.f32.gmra.mxu0 %v1181
        %v1296 = vpop.f32.mrf.mxu0
        %v1297 = vadd.f32 0.0, %v1296
        %1298 = vmatmul.f32.gmra.mxu0 %v1184
        %v1299 = vpop.f32.mrf.mxu0
        %v1300 = vadd.f32 0.0, %v1299
        %1301 = vmatmul.f32.gmra.mxu0 %v1187
        %v1302 = vpop.f32.mrf.mxu0
        %v1303 = vadd.f32 0.0, %v1302
        %1304 = vmatmul.f32.gmra.mxu0 %v1190
        %v1305 = vpop.f32.mrf.mxu0
        %v1306 = vadd.f32 0.0, %v1305
        %1307 = vmatmul.f32.gmra.mxu0 %v1193
        %v1308 = vpop.f32.mrf.mxu0
        %v1309 = vadd.f32 0.0, %v1308
        %1310 = vmatmul.f32.gmra.mxu0 %v1196
        %v1311 = vpop.f32.mrf.mxu0
        %v1312 = vadd.f32 0.0, %v1311
        %1313 = vmatmul.f32.gmra.mxu0 %v1199
        %v1314 = vpop.f32.mrf.mxu0
        %v1315 = vadd.f32 0.0, %v1314
        %1316 = vmatmul.f32.gmra.mxu0 %v1202
        %v1317 = vpop.f32.mrf.mxu0
        %v1318 = vadd.f32 0.0, %v1317
        %1319 = vmatmul.f32.gmra.mxu0 %v1205
        %v1320 = vpop.f32.mrf.mxu0
        %v1321 = vadd.f32 0.0, %v1320
        %1322 = vmatmul.f32.gmra.mxu0 %v1208
        %v1323 = vpop.f32.mrf.mxu0
        %v1324 = vadd.f32 0.0, %v1323
        %1325 = vmatmul.f32.gmra.mxu0 %v1211
        %v1326 = vpop.f32.mrf.mxu0
        %v1327 = vadd.f32 0.0, %v1326
        %1328 = vmatmul.f32.gmra.mxu0 %v1214
        %v1329 = vpop.f32.mrf.mxu0
        %v1330 = vadd.f32 0.0, %v1329
        %1331 = vmatmul.f32.gmra.mxu0 %v1217
        %v1332 = vpop.f32.mrf.mxu0
        %v1333 = vadd.f32 0.0, %v1332
        %1334 = vmatmul.f32.gmra.mxu0 %v1220
        %v1335 = vpop.f32.mrf.mxu0
        %v1336 = vadd.f32 0.0, %v1335
        %1337 = vmatmul.f32.gmra.mxu0 %v1223
        %v1338 = vpop.f32.mrf.mxu0
        %v1339 = vadd.f32 0.0, %v1338
        %1340 = vmatmul.f32.gmra.mxu0 %v1226
        %v1341 = vpop.f32.mrf.mxu0
        %v1342 = vadd.f32 0.0, %v1341
        %1343 = vmatmul.f32.gmra.mxu0 %v1229
        %v1344 = vpop.f32.mrf.mxu0
        %v1345 = vadd.f32 0.0, %v1344
        %1346 = vmatmul.f32.gmra.mxu0 %v1232
        %v1347 = vpop.f32.mrf.mxu0
        %v1348 = vadd.f32 0.0, %v1347
        %1349 = vmatmul.f32.gmra.mxu0 %v1235
        %v1350 = vpop.f32.mrf.mxu0
        %v1351 = vadd.f32 0.0, %v1350
        %1352 = vmatmul.f32.gmra.mxu0 %v1238
        %v1353 = vpop.f32.mrf.mxu0
        %v1354 = vadd.f32 0.0, %v1353
        %1355 = vmatmul.f32.gmra.mxu0 %v1241
        %v1356 = vpop.f32.mrf.mxu0
        %v1357 = vadd.f32 0.0, %v1356
        %1358 = vmatmul.f32.gmra.mxu0 %v1244
        %v1359 = vpop.f32.mrf.mxu0
        %v1360 = vadd.f32 0.0, %v1359
        %1361 = vmatmul.f32.gmra.mxu0 %v1247
        %v1362 = vpop.f32.mrf.mxu0
        %v1363 = vadd.f32 0.0, %v1362
        %1364 = vmatmul.f32.gmra.mxu0 %v1250
        %v1365 = vpop.f32.mrf.mxu0
        %v1366 = vadd.f32 0.0, %v1365
        %1367 = vmatmul.f32.gmra.mxu0 %v1253
        %v1368 = vpop.f32.mrf.mxu0
        %v1369 = vadd.f32 0.0, %v1368
        %1370 = vmatmul.f32.gmra.mxu0 %v1256
        %v1371 = vpop.f32.mrf.mxu0
        %v1372 = vadd.f32 0.0, %v1371
        %1373 = vmatmul.f32.gmra.mxu0 %v1259
        %v1374 = vpop.f32.mrf.mxu0
        %v1375 = vadd.f32 0.0, %v1374
        %1376 = vmatmul.f32.gmra.mxu0 %v1262
        %v1377 = vpop.f32.mrf.mxu0
        %v1378 = vadd.f32 0.0, %v1377
        %1379 = vmatmul.f32.gmra.mxu0 %v1265
        %v1380 = vpop.f32.mrf.mxu0
        %v1381 = vadd.f32 0.0, %v1380
        %1382 = vdwg.mxu0
        %v1383 = vadd.f32 %v1042, %v1288
        %v1384 = vadd.f32 %v1045, %v1291
        %v1385 = vadd.f32 %v1048, %v1294
        %v1386 = vadd.f32 %v1051, %v1297
        %v1387 = vadd.f32 %v1054, %v1300
        %v1388 = vadd.f32 %v1057, %v1303
        %v1389 = vadd.f32 %v1060, %v1306
        %v1390 = vadd.f32 %v1063, %v1309
        %v1391 = vadd.f32 %v1066, %v1312
        %v1392 = vadd.f32 %v1069, %v1315
        %v1393 = vadd.f32 %v1072, %v1318
        %v1394 = vadd.f32 %v1075, %v1321
        %v1395 = vadd.f32 %v1078, %v1324
        %v1396 = vadd.f32 %v1081, %v1327
        %v1397 = vadd.f32 %v1084, %v1330
        %v1398 = vadd.f32 %v1087, %v1333
        %v1399 = vadd.f32 %v1090, %v1336
        %v1400 = vadd.f32 %v1093, %v1339
        %v1401 = vadd.f32 %v1096, %v1342
        %v1402 = vadd.f32 %v1099, %v1345
        %v1403 = vadd.f32 %v1102, %v1348
        %v1404 = vadd.f32 %v1105, %v1351
        %v1405 = vadd.f32 %v1108, %v1354
        %v1406 = vadd.f32 %v1111, %v1357
        %v1407 = vadd.f32 %v1114, %v1360
        %v1408 = vadd.f32 %v1117, %v1363
        %v1409 = vadd.f32 %v1120, %v1366
        %v1410 = vadd.f32 %v1123, %v1369
        %v1411 = vadd.f32 %v1126, %v1372
        %v1412 = vadd.f32 %v1129, %v1375
        %v1413 = vadd.f32 %v1132, %v1378
        %v1414 = vadd.f32 %v1135, %v1381
        %v1415 = vld [vmem:[%s612] sm:$0xff]
        %v1416 = vld [vmem:[%s612 + $0x8] sm:$0xff]
        %v1417 = vld [vmem:[%s612 + $0x18] sm:$0xff]
        %v1418 = vld [vmem:[%s612 + $0x20] sm:$0xff]
        %v1419 = vld [vmem:[%s612 + $0x30] sm:$0xff]
        %v1420 = vld [vmem:[%s612 + $0x38] sm:$0xff]
        %v1421 = vld [vmem:[%s612 + $0x48] sm:$0xff]
        %v1422 = vld [vmem:[%s612 + $0x50] sm:$0xff]
        %v1423 = vld [vmem:[%s612 + $0x60] sm:$0xff]
        %v1424 = vld [vmem:[%s612 + $0x68] sm:$0xff]
        %v1425 = vld [vmem:[%s612 + $0x78] sm:$0xff]
        %v1426 = vld [vmem:[%s612 + $0x80] sm:$0xff]
        %v1427 = vld [vmem:[%s612 + $0x90] sm:$0xff]
        %v1428 = vld [vmem:[%s612 + $0x98] sm:$0xff]
        %v1429 = vld [vmem:[%s612 + $0xa8] sm:$0xff]
        %v1430 = vld [vmem:[%s612 + $0xb0] sm:$0xff]
        %v1431 = vld [vmem:[%s612 + $0xc0] sm:$0xff]
        %v1432 = vld [vmem:[%s612 + $0xc8] sm:$0xff]
        %v1433 = vld [vmem:[%s612 + $0xd8] sm:$0xff]
        %v1434 = vld [vmem:[%s612 + $0xe0] sm:$0xff]
        %v1435 = vld [vmem:[%s612 + $0xf0] sm:$0xff]
        %v1436 = vld [vmem:[%s612 + $0xf8] sm:$0xff]
        %v1437 = vld [vmem:[%s612 + $0x108] sm:$0xff]
        %v1438 = vld [vmem:[%s612 + $0x110] sm:$0xff]
        %v1439 = vld [vmem:[%s612 + $0x120] sm:$0xff]
        %v1440 = vld [vmem:[%s612 + $0x128] sm:$0xff]
        %v1441 = vld [vmem:[%s612 + $0x138] sm:$0xff]
        %v1442 = vld [vmem:[%s612 + $0x140] sm:$0xff]
        %v1443 = vld [vmem:[%s612 + $0x150] sm:$0xff]
        %v1444 = vld [vmem:[%s612 + $0x158] sm:$0xff]
        %v1445 = vld [vmem:[%s612 + $0x168] sm:$0xff]
        %v1446 = vld [vmem:[%s612 + $0x170] sm:$0xff]
        %s1447 = scalar_lea.vmem %s1, 12
        %v1448 = vld [vmem:[%s1447] sm:$0xf]
        %v1450 = vsel %vm364, %v1415, 0
        %v1453 = vsel %vm364, %v1416, 0
        %v1456 = vsel %vm364, %v1417, 0
        %v1459 = vsel %vm364, %v1418, 0
        %v1462 = vsel %vm364, %v1419, 0
        %v1465 = vsel %vm364, %v1420, 0
        %v1468 = vsel %vm364, %v1421, 0
        %v1471 = vsel %vm364, %v1422, 0
        %v1474 = vsel %vm364, %v1423, 0
        %v1477 = vsel %vm364, %v1424, 0
        %v1480 = vsel %vm364, %v1425, 0
        %v1483 = vsel %vm364, %v1426, 0
        %v1486 = vsel %vm364, %v1427, 0
        %v1489 = vsel %vm364, %v1428, 0
        %v1492 = vsel %vm364, %v1429, 0
        %v1495 = vsel %vm364, %v1430, 0
        %v1498 = vsel %vm364, %v1431, 0
        %v1501 = vsel %vm364, %v1432, 0
        %v1504 = vsel %vm364, %v1433, 0
        %v1507 = vsel %vm364, %v1434, 0
        %v1510 = vsel %vm364, %v1435, 0
        %v1513 = vsel %vm364, %v1436, 0
        %v1516 = vsel %vm364, %v1437, 0
        %v1519 = vsel %vm364, %v1438, 0
        %v1522 = vsel %vm364, %v1439, 0
        %v1525 = vsel %vm364, %v1440, 0
        %v1528 = vsel %vm364, %v1441, 0
        %v1531 = vsel %vm364, %v1442, 0
        %v1534 = vsel %vm364, %v1443, 0
        %v1537 = vsel %vm364, %v1444, 0
        %v1540 = vsel %vm364, %v1445, 0
        %v1543 = vsel %vm364, %v1446, 0
        %v1546 = vsel %vm808, %v1448, 0
        %1548 = vmatpush.msra.mxu0 0.0
        %1549 = vmatpush.msra.mxu0 0.0
        %1550 = vmatpush.msra.mxu0 0.0
        %1551 = vmatpush.msra.mxu0 0.0
        %1552 = vmatpush.msra.mxu0 0.0
        %1553 = vmatpush.msra.mxu0 0.0
        %1554 = vmatpush.msra.mxu0 0.0
        %1555 = vmatpush.msra.mxu0 0.0
        %1556 = vmatpush.msra.mxu0 0.0
        %1557 = vmatpush.msra.mxu0 0.0
        %1558 = vmatpush.msra.mxu0 0.0
        %1559 = vmatpush.msra.mxu0 0.0
        %1560 = vmatpush.msra.mxu0 0.0
        %1561 = vmatpush.msra.mxu0 0.0
        %1562 = vmatpush.msra.mxu0 0.0
        %1563 = vmatpush.msra.mxu0 %v1546
        %1564 = vmatmul.f32.gmra.mxu0 %v1450
        %v1565 = vpop.f32.mrf.mxu0
        %v1566 = vadd.f32 0.0, %v1565
        %1567 = vmatmul.f32.gmra.mxu0 %v1453
        %v1568 = vpop.f32.mrf.mxu0
        %v1569 = vadd.f32 0.0, %v1568
        %1570 = vmatmul.f32.gmra.mxu0 %v1456
        %v1571 = vpop.f32.mrf.mxu0
        %v1572 = vadd.f32 0.0, %v1571
        %1573 = vmatmul.f32.gmra.mxu0 %v1459
        %v1574 = vpop.f32.mrf.mxu0
        %v1575 = vadd.f32 0.0, %v1574
        %1576 = vmatmul.f32.gmra.mxu0 %v1462
        %v1577 = vpop.f32.mrf.mxu0
        %v1578 = vadd.f32 0.0, %v1577
        %1579 = vmatmul.f32.gmra.mxu0 %v1465
        %v1580 = vpop.f32.mrf.mxu0
        %v1581 = vadd.f32 0.0, %v1580
        %1582 = vmatmul.f32.gmra.mxu0 %v1468
        %v1583 = vpop.f32.mrf.mxu0
        %v1584 = vadd.f32 0.0, %v1583
        %1585 = vmatmul.f32.gmra.mxu0 %v1471
        %v1586 = vpop.f32.mrf.mxu0
        %v1587 = vadd.f32 0.0, %v1586
        %1588 = vmatmul.f32.gmra.mxu0 %v1474
        %v1589 = vpop.f32.mrf.mxu0
        %v1590 = vadd.f32 0.0, %v1589
        %1591 = vmatmul.f32.gmra.mxu0 %v1477
        %v1592 = vpop.f32.mrf.mxu0
        %v1593 = vadd.f32 0.0, %v1592
        %1594 = vmatmul.f32.gmra.mxu0 %v1480
        %v1595 = vpop.f32.mrf.mxu0
        %v1596 = vadd.f32 0.0, %v1595
        %1597 = vmatmul.f32.gmra.mxu0 %v1483
        %v1598 = vpop.f32.mrf.mxu0
        %v1599 = vadd.f32 0.0, %v1598
        %1600 = vmatmul.f32.gmra.mxu0 %v1486
        %v1601 = vpop.f32.mrf.mxu0
        %v1602 = vadd.f32 0.0, %v1601
        %1603 = vmatmul.f32.gmra.mxu0 %v1489
        %v1604 = vpop.f32.mrf.mxu0
        %v1605 = vadd.f32 0.0, %v1604
        %1606 = vmatmul.f32.gmra.mxu0 %v1492
        %v1607 = vpop.f32.mrf.mxu0
        %v1608 = vadd.f32 0.0, %v1607
        %1609 = vmatmul.f32.gmra.mxu0 %v1495
        %v1610 = vpop.f32.mrf.mxu0
        %v1611 = vadd.f32 0.0, %v1610
        %1612 = vmatmul.f32.gmra.mxu0 %v1498
        %v1613 = vpop.f32.mrf.mxu0
        %v1614 = vadd.f32 0.0, %v1613
        %1615 = vmatmul.f32.gmra.mxu0 %v1501
        %v1616 = vpop.f32.mrf.mxu0
        %v1617 = vadd.f32 0.0, %v1616
        %1618 = vmatmul.f32.gmra.mxu0 %v1504
        %v1619 = vpop.f32.mrf.mxu0
        %v1620 = vadd.f32 0.0, %v1619
        %1621 = vmatmul.f32.gmra.mxu0 %v1507
        %v1622 = vpop.f32.mrf.mxu0
        %v1623 = vadd.f32 0.0, %v1622
        %1624 = vmatmul.f32.gmra.mxu0 %v1510
        %v1625 = vpop.f32.mrf.mxu0
        %v1626 = vadd.f32 0.0, %v1625
        %1627 = vmatmul.f32.gmra.mxu0 %v1513
        %v1628 = vpop.f32.mrf.mxu0
        %v1629 = vadd.f32 0.0, %v1628
        %1630 = vmatmul.f32.gmra.mxu0 %v1516
        %v1631 = vpop.f32.mrf.mxu0
        %v1632 = vadd.f32 0.0, %v1631
        %1633 = vmatmul.f32.gmra.mxu0 %v1519
        %v1634 = vpop.f32.mrf.mxu0
        %v1635 = vadd.f32 0.0, %v1634
        %1636 = vmatmul.f32.gmra.mxu0 %v1522
        %v1637 = vpop.f32.mrf.mxu0
        %v1638 = vadd.f32 0.0, %v1637
        %1639 = vmatmul.f32.gmra.mxu0 %v1525
        %v1640 = vpop.f32.mrf.mxu0
        %v1641 = vadd.f32 0.0, %v1640
        %1642 = vmatmul.f32.gmra.mxu0 %v1528
        %v1643 = vpop.f32.mrf.mxu0
        %v1644 = vadd.f32 0.0, %v1643
        %1645 = vmatmul.f32.gmra.mxu0 %v1531
        %v1646 = vpop.f32.mrf.mxu0
        %v1647 = vadd.f32 0.0, %v1646
        %1648 = vmatmul.f32.gmra.mxu0 %v1534
        %v1649 = vpop.f32.mrf.mxu0
        %v1650 = vadd.f32 0.0, %v1649
        %1651 = vmatmul.f32.gmra.mxu0 %v1537
        %v1652 = vpop.f32.mrf.mxu0
        %v1653 = vadd.f32 0.0, %v1652
        %1654 = vmatmul.f32.gmra.mxu0 %v1540
        %v1655 = vpop.f32.mrf.mxu0
        %v1656 = vadd.f32 0.0, %v1655
        %1657 = vmatmul.f32.gmra.mxu0 %v1543
        %v1658 = vpop.f32.mrf.mxu0
        %v1659 = vadd.f32 0.0, %v1658
        %1660 = vdwg.mxu0
        %v1661 = vadd.f32 %v1383, %v1566
        %v1662 = vadd.f32 %v1384, %v1569
        %v1663 = vadd.f32 %v1385, %v1572
        %v1664 = vadd.f32 %v1386, %v1575
        %v1665 = vadd.f32 %v1387, %v1578
        %v1666 = vadd.f32 %v1388, %v1581
        %v1667 = vadd.f32 %v1389, %v1584
        %v1668 = vadd.f32 %v1390, %v1587
        %v1669 = vadd.f32 %v1391, %v1590
        %v1670 = vadd.f32 %v1392, %v1593
        %v1671 = vadd.f32 %v1393, %v1596
        %v1672 = vadd.f32 %v1394, %v1599
        %v1673 = vadd.f32 %v1395, %v1602
        %v1674 = vadd.f32 %v1396, %v1605
        %v1675 = vadd.f32 %v1397, %v1608
        %v1676 = vadd.f32 %v1398, %v1611
        %v1677 = vadd.f32 %v1399, %v1614
        %v1678 = vadd.f32 %v1400, %v1617
        %v1679 = vadd.f32 %v1401, %v1620
        %v1680 = vadd.f32 %v1402, %v1623
        %v1681 = vadd.f32 %v1403, %v1626
        %v1682 = vadd.f32 %v1404, %v1629
        %v1683 = vadd.f32 %v1405, %v1632
        %v1684 = vadd.f32 %v1406, %v1635
        %v1685 = vadd.f32 %v1407, %v1638
        %v1686 = vadd.f32 %v1408, %v1641
        %v1687 = vadd.f32 %v1409, %v1644
        %v1688 = vadd.f32 %v1410, %v1647
        %v1689 = vadd.f32 %v1411, %v1650
        %v1690 = vadd.f32 %v1412, %v1653
        %v1691 = vadd.f32 %v1413, %v1656
        %v1692 = vadd.f32 %v1414, %v1659
        %v1693 = vld [vmem:[%s612 + $0x1] sm:$0xff]
        %v1694 = vld [vmem:[%s612 + $0x9] sm:$0xff]
        %v1695 = vld [vmem:[%s612 + $0x19] sm:$0xff]
        %v1696 = vld [vmem:[%s612 + $0x21] sm:$0xff]
        %v1697 = vld [vmem:[%s612 + $0x31] sm:$0xff]
        %v1698 = vld [vmem:[%s612 + $0x39] sm:$0xff]
        %v1699 = vld [vmem:[%s612 + $0x49] sm:$0xff]
        %v1700 = vld [vmem:[%s612 + $0x51] sm:$0xff]
        %v1701 = vld [vmem:[%s612 + $0x61] sm:$0xff]
        %v1702 = vld [vmem:[%s612 + $0x69] sm:$0xff]
        %v1703 = vld [vmem:[%s612 + $0x79] sm:$0xff]
        %v1704 = vld [vmem:[%s612 + $0x81] sm:$0xff]
        %v1705 = vld [vmem:[%s612 + $0x91] sm:$0xff]
        %v1706 = vld [vmem:[%s612 + $0x99] sm:$0xff]
        %v1707 = vld [vmem:[%s612 + $0xa9] sm:$0xff]
        %v1708 = vld [vmem:[%s612 + $0xb1] sm:$0xff]
        %v1709 = vld [vmem:[%s612 + $0xc1] sm:$0xff]
        %v1710 = vld [vmem:[%s612 + $0xc9] sm:$0xff]
        %v1711 = vld [vmem:[%s612 + $0xd9] sm:$0xff]
        %v1712 = vld [vmem:[%s612 + $0xe1] sm:$0xff]
        %v1713 = vld [vmem:[%s612 + $0xf1] sm:$0xff]
        %v1714 = vld [vmem:[%s612 + $0xf9] sm:$0xff]
        %v1715 = vld [vmem:[%s612 + $0x109] sm:$0xff]
        %v1716 = vld [vmem:[%s612 + $0x111] sm:$0xff]
        %v1717 = vld [vmem:[%s612 + $0x121] sm:$0xff]
        %v1718 = vld [vmem:[%s612 + $0x129] sm:$0xff]
        %v1719 = vld [vmem:[%s612 + $0x139] sm:$0xff]
        %v1720 = vld [vmem:[%s612 + $0x141] sm:$0xff]
        %v1721 = vld [vmem:[%s612 + $0x151] sm:$0xff]
        %v1722 = vld [vmem:[%s612 + $0x159] sm:$0xff]
        %v1723 = vld [vmem:[%s612 + $0x169] sm:$0xff]
        %v1724 = vld [vmem:[%s612 + $0x171] sm:$0xff]
        %s1725 = scalar_lea.vmem %s1, 16
        %v1726 = vld [vmem:[%s1725] sm:$0xf]
        %v1728 = vsel %vm364, %v1693, 0
        %v1731 = vsel %vm364, %v1694, 0
        %v1734 = vsel %vm364, %v1695, 0
        %v1737 = vsel %vm364, %v1696, 0
        %v1740 = vsel %vm364, %v1697, 0
        %v1743 = vsel %vm364, %v1698, 0
        %v1746 = vsel %vm364, %v1699, 0
        %v1749 = vsel %vm364, %v1700, 0
        %v1752 = vsel %vm364, %v1701, 0
        %v1755 = vsel %vm364, %v1702, 0
        %v1758 = vsel %vm364, %v1703, 0
        %v1761 = vsel %vm364, %v1704, 0
        %v1764 = vsel %vm364, %v1705, 0
        %v1767 = vsel %vm364, %v1706, 0
        %v1770 = vsel %vm364, %v1707, 0
        %v1773 = vsel %vm364, %v1708, 0
        %v1776 = vsel %vm364, %v1709, 0
        %v1779 = vsel %vm364, %v1710, 0
        %v1782 = vsel %vm364, %v1711, 0
        %v1785 = vsel %vm364, %v1712, 0
        %v1788 = vsel %vm364, %v1713, 0
        %v1791 = vsel %vm364, %v1714, 0
        %v1794 = vsel %vm364, %v1715, 0
        %v1797 = vsel %vm364, %v1716, 0
        %v1800 = vsel %vm364, %v1717, 0
        %v1803 = vsel %vm364, %v1718, 0
        %v1806 = vsel %vm364, %v1719, 0
        %v1809 = vsel %vm364, %v1720, 0
        %v1812 = vsel %vm364, %v1721, 0
        %v1815 = vsel %vm364, %v1722, 0
        %v1818 = vsel %vm364, %v1723, 0
        %v1821 = vsel %vm364, %v1724, 0
        %v1824 = vsel %vm808, %v1726, 0
        %1826 = vmatpush.msra.mxu0 0.0
        %1827 = vmatpush.msra.mxu0 0.0
        %1828 = vmatpush.msra.mxu0 0.0
        %1829 = vmatpush.msra.mxu0 0.0
        %1830 = vmatpush.msra.mxu0 0.0
        %1831 = vmatpush.msra.mxu0 0.0
        %1832 = vmatpush.msra.mxu0 0.0
        %1833 = vmatpush.msra.mxu0 0.0
        %1834 = vmatpush.msra.mxu0 0.0
        %1835 = vmatpush.msra.mxu0 0.0
        %1836 = vmatpush.msra.mxu0 0.0
        %1837 = vmatpush.msra.mxu0 0.0
        %1838 = vmatpush.msra.mxu0 0.0
        %1839 = vmatpush.msra.mxu0 0.0
        %1840 = vmatpush.msra.mxu0 0.0
        %1841 = vmatpush.msra.mxu0 %v1824
        %1842 = vmatmul.f32.gmra.mxu0 %v1728
        %v1843 = vpop.f32.mrf.mxu0
        %v1844 = vadd.f32 0.0, %v1843
        %1845 = vmatmul.f32.gmra.mxu0 %v1731
        %v1846 = vpop.f32.mrf.mxu0
        %v1847 = vadd.f32 0.0, %v1846
        %1848 = vmatmul.f32.gmra.mxu0 %v1734
        %v1849 = vpop.f32.mrf.mxu0
        %v1850 = vadd.f32 0.0, %v1849
        %1851 = vmatmul.f32.gmra.mxu0 %v1737
        %v1852 = vpop.f32.mrf.mxu0
        %v1853 = vadd.f32 0.0, %v1852
        %1854 = vmatmul.f32.gmra.mxu0 %v1740
        %v1855 = vpop.f32.mrf.mxu0
        %v1856 = vadd.f32 0.0, %v1855
        %1857 = vmatmul.f32.gmra.mxu0 %v1743
        %v1858 = vpop.f32.mrf.mxu0
        %v1859 = vadd.f32 0.0, %v1858
        %1860 = vmatmul.f32.gmra.mxu0 %v1746
        %v1861 = vpop.f32.mrf.mxu0
        %v1862 = vadd.f32 0.0, %v1861
        %1863 = vmatmul.f32.gmra.mxu0 %v1749
        %v1864 = vpop.f32.mrf.mxu0
        %v1865 = vadd.f32 0.0, %v1864
        %1866 = vmatmul.f32.gmra.mxu0 %v1752
        %v1867 = vpop.f32.mrf.mxu0
        %v1868 = vadd.f32 0.0, %v1867
        %1869 = vmatmul.f32.gmra.mxu0 %v1755
        %v1870 = vpop.f32.mrf.mxu0
        %v1871 = vadd.f32 0.0, %v1870
        %1872 = vmatmul.f32.gmra.mxu0 %v1758
        %v1873 = vpop.f32.mrf.mxu0
        %v1874 = vadd.f32 0.0, %v1873
        %1875 = vmatmul.f32.gmra.mxu0 %v1761
        %v1876 = vpop.f32.mrf.mxu0
        %v1877 = vadd.f32 0.0, %v1876
        %1878 = vmatmul.f32.gmra.mxu0 %v1764
        %v1879 = vpop.f32.mrf.mxu0
        %v1880 = vadd.f32 0.0, %v1879
        %1881 = vmatmul.f32.gmra.mxu0 %v1767
        %v1882 = vpop.f32.mrf.mxu0
        %v1883 = vadd.f32 0.0, %v1882
        %1884 = vmatmul.f32.gmra.mxu0 %v1770
        %v1885 = vpop.f32.mrf.mxu0
        %v1886 = vadd.f32 0.0, %v1885
        %1887 = vmatmul.f32.gmra.mxu0 %v1773
        %v1888 = vpop.f32.mrf.mxu0
        %v1889 = vadd.f32 0.0, %v1888
        %1890 = vmatmul.f32.gmra.mxu0 %v1776
        %v1891 = vpop.f32.mrf.mxu0
        %v1892 = vadd.f32 0.0, %v1891
        %1893 = vmatmul.f32.gmra.mxu0 %v1779
        %v1894 = vpop.f32.mrf.mxu0
        %v1895 = vadd.f32 0.0, %v1894
        %1896 = vmatmul.f32.gmra.mxu0 %v1782
        %v1897 = vpop.f32.mrf.mxu0
        %v1898 = vadd.f32 0.0, %v1897
        %1899 = vmatmul.f32.gmra.mxu0 %v1785
        %v1900 = vpop.f32.mrf.mxu0
        %v1901 = vadd.f32 0.0, %v1900
        %1902 = vmatmul.f32.gmra.mxu0 %v1788
        %v1903 = vpop.f32.mrf.mxu0
        %v1904 = vadd.f32 0.0, %v1903
        %1905 = vmatmul.f32.gmra.mxu0 %v1791
        %v1906 = vpop.f32.mrf.mxu0
        %v1907 = vadd.f32 0.0, %v1906
        %1908 = vmatmul.f32.gmra.mxu0 %v1794
        %v1909 = vpop.f32.mrf.mxu0
        %v1910 = vadd.f32 0.0, %v1909
        %1911 = vmatmul.f32.gmra.mxu0 %v1797
        %v1912 = vpop.f32.mrf.mxu0
        %v1913 = vadd.f32 0.0, %v1912
        %1914 = vmatmul.f32.gmra.mxu0 %v1800
        %v1915 = vpop.f32.mrf.mxu0
        %v1916 = vadd.f32 0.0, %v1915
        %1917 = vmatmul.f32.gmra.mxu0 %v1803
        %v1918 = vpop.f32.mrf.mxu0
        %v1919 = vadd.f32 0.0, %v1918
        %1920 = vmatmul.f32.gmra.mxu0 %v1806
        %v1921 = vpop.f32.mrf.mxu0
        %v1922 = vadd.f32 0.0, %v1921
        %1923 = vmatmul.f32.gmra.mxu0 %v1809
        %v1924 = vpop.f32.mrf.mxu0
        %v1925 = vadd.f32 0.0, %v1924
        %1926 = vmatmul.f32.gmra.mxu0 %v1812
        %v1927 = vpop.f32.mrf.mxu0
        %v1928 = vadd.f32 0.0, %v1927
        %1929 = vmatmul.f32.gmra.mxu0 %v1815
        %v1930 = vpop.f32.mrf.mxu0
        %v1931 = vadd.f32 0.0, %v1930
        %1932 = vmatmul.f32.gmra.mxu0 %v1818
        %v1933 = vpop.f32.mrf.mxu0
        %v1934 = vadd.f32 0.0, %v1933
        %1935 = vmatmul.f32.gmra.mxu0 %v1821
        %v1936 = vpop.f32.mrf.mxu0
        %v1937 = vadd.f32 0.0, %v1936
        %1938 = vdwg.mxu0
        %v1939 = vadd.f32 %v1661, %v1844
        %v1940 = vadd.f32 %v1662, %v1847
        %v1941 = vadd.f32 %v1663, %v1850
        %v1942 = vadd.f32 %v1664, %v1853
        %v1943 = vadd.f32 %v1665, %v1856
        %v1944 = vadd.f32 %v1666, %v1859
        %v1945 = vadd.f32 %v1667, %v1862
        %v1946 = vadd.f32 %v1668, %v1865
        %v1947 = vadd.f32 %v1669, %v1868
        %v1948 = vadd.f32 %v1670, %v1871
        %v1949 = vadd.f32 %v1671, %v1874
        %v1950 = vadd.f32 %v1672, %v1877
        %v1951 = vadd.f32 %v1673, %v1880
        %v1952 = vadd.f32 %v1674, %v1883
        %v1953 = vadd.f32 %v1675, %v1886
        %v1954 = vadd.f32 %v1676, %v1889
        %v1955 = vadd.f32 %v1677, %v1892
        %v1956 = vadd.f32 %v1678, %v1895
        %v1957 = vadd.f32 %v1679, %v1898
        %v1958 = vadd.f32 %v1680, %v1901
        %v1959 = vadd.f32 %v1681, %v1904
        %v1960 = vadd.f32 %v1682, %v1907
        %v1961 = vadd.f32 %v1683, %v1910
        %v1962 = vadd.f32 %v1684, %v1913
        %v1963 = vadd.f32 %v1685, %v1916
        %v1964 = vadd.f32 %v1686, %v1919
        %v1965 = vadd.f32 %v1687, %v1922
        %v1966 = vadd.f32 %v1688, %v1925
        %v1967 = vadd.f32 %v1689, %v1928
        %v1968 = vadd.f32 %v1690, %v1931
        %v1969 = vadd.f32 %v1691, %v1934
        %v1970 = vadd.f32 %v1692, %v1937
        %v1971 = vld [vmem:[%s612 + $0x2] sm:$0xff]
        %v1972 = vld [vmem:[%s612 + $0xa] sm:$0xff]
        %v1973 = vld [vmem:[%s612 + $0x1a] sm:$0xff]
        %v1974 = vld [vmem:[%s612 + $0x22] sm:$0xff]
        %v1975 = vld [vmem:[%s612 + $0x32] sm:$0xff]
        %v1976 = vld [vmem:[%s612 + $0x3a] sm:$0xff]
        %v1977 = vld [vmem:[%s612 + $0x4a] sm:$0xff]
        %v1978 = vld [vmem:[%s612 + $0x52] sm:$0xff]
        %v1979 = vld [vmem:[%s612 + $0x62] sm:$0xff]
        %v1980 = vld [vmem:[%s612 + $0x6a] sm:$0xff]
        %v1981 = vld [vmem:[%s612 + $0x7a] sm:$0xff]
        %v1982 = vld [vmem:[%s612 + $0x82] sm:$0xff]
        %v1983 = vld [vmem:[%s612 + $0x92] sm:$0xff]
        %v1984 = vld [vmem:[%s612 + $0x9a] sm:$0xff]
        %v1985 = vld [vmem:[%s612 + $0xaa] sm:$0xff]
        %v1986 = vld [vmem:[%s612 + $0xb2] sm:$0xff]
        %v1987 = vld [vmem:[%s612 + $0xc2] sm:$0xff]
        %v1988 = vld [vmem:[%s612 + $0xca] sm:$0xff]
        %v1989 = vld [vmem:[%s612 + $0xda] sm:$0xff]
        %v1990 = vld [vmem:[%s612 + $0xe2] sm:$0xff]
        %v1991 = vld [vmem:[%s612 + $0xf2] sm:$0xff]
        %v1992 = vld [vmem:[%s612 + $0xfa] sm:$0xff]
        %v1993 = vld [vmem:[%s612 + $0x10a] sm:$0xff]
        %v1994 = vld [vmem:[%s612 + $0x112] sm:$0xff]
        %v1995 = vld [vmem:[%s612 + $0x122] sm:$0xff]
        %v1996 = vld [vmem:[%s612 + $0x12a] sm:$0xff]
        %v1997 = vld [vmem:[%s612 + $0x13a] sm:$0xff]
        %v1998 = vld [vmem:[%s612 + $0x142] sm:$0xff]
        %v1999 = vld [vmem:[%s612 + $0x152] sm:$0xff]
        %v2000 = vld [vmem:[%s612 + $0x15a] sm:$0xff]
        %v2001 = vld [vmem:[%s612 + $0x16a] sm:$0xff]
        %v2002 = vld [vmem:[%s612 + $0x172] sm:$0xff]
        %s2003 = scalar_lea.vmem %s1, 20
        %v2004 = vld [vmem:[%s2003] sm:$0xf]
        %v2006 = vsel %vm364, %v1971, 0
        %v2009 = vsel %vm364, %v1972, 0
        %v2012 = vsel %vm364, %v1973, 0
        %v2015 = vsel %vm364, %v1974, 0
        %v2018 = vsel %vm364, %v1975, 0
        %v2021 = vsel %vm364, %v1976, 0
        %v2024 = vsel %vm364, %v1977, 0
        %v2027 = vsel %vm364, %v1978, 0
        %v2030 = vsel %vm364, %v1979, 0
        %v2033 = vsel %vm364, %v1980, 0
        %v2036 = vsel %vm364, %v1981, 0
        %v2039 = vsel %vm364, %v1982, 0
        %v2042 = vsel %vm364, %v1983, 0
        %v2045 = vsel %vm364, %v1984, 0
        %v2048 = vsel %vm364, %v1985, 0
        %v2051 = vsel %vm364, %v1986, 0
        %v2054 = vsel %vm364, %v1987, 0
        %v2057 = vsel %vm364, %v1988, 0
        %v2060 = vsel %vm364, %v1989, 0
        %v2063 = vsel %vm364, %v1990, 0
        %v2066 = vsel %vm364, %v1991, 0
        %v2069 = vsel %vm364, %v1992, 0
        %v2072 = vsel %vm364, %v1993, 0
        %v2075 = vsel %vm364, %v1994, 0
        %v2078 = vsel %vm364, %v1995, 0
        %v2081 = vsel %vm364, %v1996, 0
        %v2084 = vsel %vm364, %v1997, 0
        %v2087 = vsel %vm364, %v1998, 0
        %v2090 = vsel %vm364, %v1999, 0
        %v2093 = vsel %vm364, %v2000, 0
        %v2096 = vsel %vm364, %v2001, 0
        %v2099 = vsel %vm364, %v2002, 0
        %v2102 = vsel %vm808, %v2004, 0
        %2104 = vmatpush.msra.mxu0 0.0
        %2105 = vmatpush.msra.mxu0 0.0
        %2106 = vmatpush.msra.mxu0 0.0
        %2107 = vmatpush.msra.mxu0 0.0
        %2108 = vmatpush.msra.mxu0 0.0
        %2109 = vmatpush.msra.mxu0 0.0
        %2110 = vmatpush.msra.mxu0 0.0
        %2111 = vmatpush.msra.mxu0 0.0
        %2112 = vmatpush.msra.mxu0 0.0
        %2113 = vmatpush.msra.mxu0 0.0
        %2114 = vmatpush.msra.mxu0 0.0
        %2115 = vmatpush.msra.mxu0 0.0
        %2116 = vmatpush.msra.mxu0 0.0
        %2117 = vmatpush.msra.mxu0 0.0
        %2118 = vmatpush.msra.mxu0 0.0
        %2119 = vmatpush.msra.mxu0 %v2102
        %2120 = vmatmul.f32.gmra.mxu0 %v2006
        %v2121 = vpop.f32.mrf.mxu0
        %v2122 = vadd.f32 0.0, %v2121
        %2123 = vmatmul.f32.gmra.mxu0 %v2009
        %v2124 = vpop.f32.mrf.mxu0
        %v2125 = vadd.f32 0.0, %v2124
        %2126 = vmatmul.f32.gmra.mxu0 %v2012
        %v2127 = vpop.f32.mrf.mxu0
        %v2128 = vadd.f32 0.0, %v2127
        %2129 = vmatmul.f32.gmra.mxu0 %v2015
        %v2130 = vpop.f32.mrf.mxu0
        %v2131 = vadd.f32 0.0, %v2130
        %2132 = vmatmul.f32.gmra.mxu0 %v2018
        %v2133 = vpop.f32.mrf.mxu0
        %v2134 = vadd.f32 0.0, %v2133
        %2135 = vmatmul.f32.gmra.mxu0 %v2021
        %v2136 = vpop.f32.mrf.mxu0
        %v2137 = vadd.f32 0.0, %v2136
        %2138 = vmatmul.f32.gmra.mxu0 %v2024
        %v2139 = vpop.f32.mrf.mxu0
        %v2140 = vadd.f32 0.0, %v2139
        %2141 = vmatmul.f32.gmra.mxu0 %v2027
        %v2142 = vpop.f32.mrf.mxu0
        %v2143 = vadd.f32 0.0, %v2142
        %2144 = vmatmul.f32.gmra.mxu0 %v2030
        %v2145 = vpop.f32.mrf.mxu0
        %v2146 = vadd.f32 0.0, %v2145
        %2147 = vmatmul.f32.gmra.mxu0 %v2033
        %v2148 = vpop.f32.mrf.mxu0
        %v2149 = vadd.f32 0.0, %v2148
        %2150 = vmatmul.f32.gmra.mxu0 %v2036
        %v2151 = vpop.f32.mrf.mxu0
        %v2152 = vadd.f32 0.0, %v2151
        %2153 = vmatmul.f32.gmra.mxu0 %v2039
        %v2154 = vpop.f32.mrf.mxu0
        %v2155 = vadd.f32 0.0, %v2154
        %2156 = vmatmul.f32.gmra.mxu0 %v2042
        %v2157 = vpop.f32.mrf.mxu0
        %v2158 = vadd.f32 0.0, %v2157
        %2159 = vmatmul.f32.gmra.mxu0 %v2045
        %v2160 = vpop.f32.mrf.mxu0
        %v2161 = vadd.f32 0.0, %v2160
        %2162 = vmatmul.f32.gmra.mxu0 %v2048
        %v2163 = vpop.f32.mrf.mxu0
        %v2164 = vadd.f32 0.0, %v2163
        %2165 = vmatmul.f32.gmra.mxu0 %v2051
        %v2166 = vpop.f32.mrf.mxu0
        %v2167 = vadd.f32 0.0, %v2166
        %2168 = vmatmul.f32.gmra.mxu0 %v2054
        %v2169 = vpop.f32.mrf.mxu0
        %v2170 = vadd.f32 0.0, %v2169
        %2171 = vmatmul.f32.gmra.mxu0 %v2057
        %v2172 = vpop.f32.mrf.mxu0
        %v2173 = vadd.f32 0.0, %v2172
        %2174 = vmatmul.f32.gmra.mxu0 %v2060
        %v2175 = vpop.f32.mrf.mxu0
        %v2176 = vadd.f32 0.0, %v2175
        %2177 = vmatmul.f32.gmra.mxu0 %v2063
        %v2178 = vpop.f32.mrf.mxu0
        %v2179 = vadd.f32 0.0, %v2178
        %2180 = vmatmul.f32.gmra.mxu0 %v2066
        %v2181 = vpop.f32.mrf.mxu0
        %v2182 = vadd.f32 0.0, %v2181
        %2183 = vmatmul.f32.gmra.mxu0 %v2069
        %v2184 = vpop.f32.mrf.mxu0
        %v2185 = vadd.f32 0.0, %v2184
        %2186 = vmatmul.f32.gmra.mxu0 %v2072
        %v2187 = vpop.f32.mrf.mxu0
        %v2188 = vadd.f32 0.0, %v2187
        %2189 = vmatmul.f32.gmra.mxu0 %v2075
        %v2190 = vpop.f32.mrf.mxu0
        %v2191 = vadd.f32 0.0, %v2190
        %2192 = vmatmul.f32.gmra.mxu0 %v2078
        %v2193 = vpop.f32.mrf.mxu0
        %v2194 = vadd.f32 0.0, %v2193
        %2195 = vmatmul.f32.gmra.mxu0 %v2081
        %v2196 = vpop.f32.mrf.mxu0
        %v2197 = vadd.f32 0.0, %v2196
        %2198 = vmatmul.f32.gmra.mxu0 %v2084
        %v2199 = vpop.f32.mrf.mxu0
        %v2200 = vadd.f32 0.0, %v2199
        %2201 = vmatmul.f32.gmra.mxu0 %v2087
        %v2202 = vpop.f32.mrf.mxu0
        %v2203 = vadd.f32 0.0, %v2202
        %2204 = vmatmul.f32.gmra.mxu0 %v2090
        %v2205 = vpop.f32.mrf.mxu0
        %v2206 = vadd.f32 0.0, %v2205
        %2207 = vmatmul.f32.gmra.mxu0 %v2093
        %v2208 = vpop.f32.mrf.mxu0
        %v2209 = vadd.f32 0.0, %v2208
        %2210 = vmatmul.f32.gmra.mxu0 %v2096
        %v2211 = vpop.f32.mrf.mxu0
        %v2212 = vadd.f32 0.0, %v2211
        %2213 = vmatmul.f32.gmra.mxu0 %v2099
        %v2214 = vpop.f32.mrf.mxu0
        %v2215 = vadd.f32 0.0, %v2214
        %2216 = vdwg.mxu0
        %v2217 = vadd.f32 %v1939, %v2122
        %v2218 = vadd.f32 %v1940, %v2125
        %v2219 = vadd.f32 %v1941, %v2128
        %v2220 = vadd.f32 %v1942, %v2131
        %v2221 = vadd.f32 %v1943, %v2134
        %v2222 = vadd.f32 %v1944, %v2137
        %v2223 = vadd.f32 %v1945, %v2140
        %v2224 = vadd.f32 %v1946, %v2143
        %v2225 = vadd.f32 %v1947, %v2146
        %v2226 = vadd.f32 %v1948, %v2149
        %v2227 = vadd.f32 %v1949, %v2152
        %v2228 = vadd.f32 %v1950, %v2155
        %v2229 = vadd.f32 %v1951, %v2158
        %v2230 = vadd.f32 %v1952, %v2161
        %v2231 = vadd.f32 %v1953, %v2164
        %v2232 = vadd.f32 %v1954, %v2167
        %v2233 = vadd.f32 %v1955, %v2170
        %v2234 = vadd.f32 %v1956, %v2173
        %v2235 = vadd.f32 %v1957, %v2176
        %v2236 = vadd.f32 %v1958, %v2179
        %v2237 = vadd.f32 %v1959, %v2182
        %v2238 = vadd.f32 %v1960, %v2185
        %v2239 = vadd.f32 %v1961, %v2188
        %v2240 = vadd.f32 %v1962, %v2191
        %v2241 = vadd.f32 %v1963, %v2194
        %v2242 = vadd.f32 %v1964, %v2197
        %v2243 = vadd.f32 %v1965, %v2200
        %v2244 = vadd.f32 %v1966, %v2203
        %v2245 = vadd.f32 %v1967, %v2206
        %v2246 = vadd.f32 %v1968, %v2209
        %v2247 = vadd.f32 %v1969, %v2212
        %v2248 = vadd.f32 %v1970, %v2215
        %s2249 = scalar_lea.vmem [#allocation2], 48
        %v2250 = vld [vmem:[%s2249] sm:$0xff]
        %v2251 = vld [vmem:[%s2249 + $0x8] sm:$0xff]
        %v2252 = vld [vmem:[%s2249 + $0x18] sm:$0xff]
        %v2253 = vld [vmem:[%s2249 + $0x20] sm:$0xff]
        %v2254 = vld [vmem:[%s2249 + $0x30] sm:$0xff]
        %v2255 = vld [vmem:[%s2249 + $0x38] sm:$0xff]
        %v2256 = vld [vmem:[%s2249 + $0x48] sm:$0xff]
        %v2257 = vld [vmem:[%s2249 + $0x50] sm:$0xff]
        %v2258 = vld [vmem:[%s2249 + $0x60] sm:$0xff]
        %v2259 = vld [vmem:[%s2249 + $0x68] sm:$0xff]
        %v2260 = vld [vmem:[%s2249 + $0x78] sm:$0xff]
        %v2261 = vld [vmem:[%s2249 + $0x80] sm:$0xff]
        %v2262 = vld [vmem:[%s2249 + $0x90] sm:$0xff]
        %v2263 = vld [vmem:[%s2249 + $0x98] sm:$0xff]
        %v2264 = vld [vmem:[%s2249 + $0xa8] sm:$0xff]
        %v2265 = vld [vmem:[%s2249 + $0xb0] sm:$0xff]
        %v2266 = vld [vmem:[%s2249 + $0xc0] sm:$0xff]
        %v2267 = vld [vmem:[%s2249 + $0xc8] sm:$0xff]
        %v2268 = vld [vmem:[%s2249 + $0xd8] sm:$0xff]
        %v2269 = vld [vmem:[%s2249 + $0xe0] sm:$0xff]
        %v2270 = vld [vmem:[%s2249 + $0xf0] sm:$0xff]
        %v2271 = vld [vmem:[%s2249 + $0xf8] sm:$0xff]
        %v2272 = vld [vmem:[%s2249 + $0x108] sm:$0xff]
        %v2273 = vld [vmem:[%s2249 + $0x110] sm:$0xff]
        %v2274 = vld [vmem:[%s2249 + $0x120] sm:$0xff]
        %v2275 = vld [vmem:[%s2249 + $0x128] sm:$0xff]
        %v2276 = vld [vmem:[%s2249 + $0x138] sm:$0xff]
        %v2277 = vld [vmem:[%s2249 + $0x140] sm:$0xff]
        %v2278 = vld [vmem:[%s2249 + $0x150] sm:$0xff]
        %v2279 = vld [vmem:[%s2249 + $0x158] sm:$0xff]
        %v2280 = vld [vmem:[%s2249 + $0x168] sm:$0xff]
        %v2281 = vld [vmem:[%s2249 + $0x170] sm:$0xff]
        %s2282 = scalar_lea.vmem %s1, 24
        %v2283 = vld [vmem:[%s2282] sm:$0xf]
        %v2285 = vsel %vm364, %v2250, 0
        %v2288 = vsel %vm364, %v2251, 0
        %v2291 = vsel %vm364, %v2252, 0
        %v2294 = vsel %vm364, %v2253, 0
        %v2297 = vsel %vm364, %v2254, 0
        %v2300 = vsel %vm364, %v2255, 0
        %v2303 = vsel %vm364, %v2256, 0
        %v2306 = vsel %vm364, %v2257, 0
        %v2309 = vsel %vm364, %v2258, 0
        %v2312 = vsel %vm364, %v2259, 0
        %v2315 = vsel %vm364, %v2260, 0
        %v2318 = vsel %vm364, %v2261, 0
        %v2321 = vsel %vm364, %v2262, 0
        %v2324 = vsel %vm364, %v2263, 0
        %v2327 = vsel %vm364, %v2264, 0
        %v2330 = vsel %vm364, %v2265, 0
        %v2333 = vsel %vm364, %v2266, 0
        %v2336 = vsel %vm364, %v2267, 0
        %v2339 = vsel %vm364, %v2268, 0
        %v2342 = vsel %vm364, %v2269, 0
        %v2345 = vsel %vm364, %v2270, 0
        %v2348 = vsel %vm364, %v2271, 0
        %v2351 = vsel %vm364, %v2272, 0
        %v2354 = vsel %vm364, %v2273, 0
        %v2357 = vsel %vm364, %v2274, 0
        %v2360 = vsel %vm364, %v2275, 0
        %v2363 = vsel %vm364, %v2276, 0
        %v2366 = vsel %vm364, %v2277, 0
        %v2369 = vsel %vm364, %v2278, 0
        %v2372 = vsel %vm364, %v2279, 0
        %v2375 = vsel %vm364, %v2280, 0
        %v2378 = vsel %vm364, %v2281, 0
        %v2381 = vsel %vm808, %v2283, 0
        %2383 = vmatpush.msra.mxu0 0.0
        %2384 = vmatpush.msra.mxu0 0.0
        %2385 = vmatpush.msra.mxu0 0.0
        %2386 = vmatpush.msra.mxu0 0.0
        %2387 = vmatpush.msra.mxu0 0.0
        %2388 = vmatpush.msra.mxu0 0.0
        %2389 = vmatpush.msra.mxu0 0.0
        %2390 = vmatpush.msra.mxu0 0.0
        %2391 = vmatpush.msra.mxu0 0.0
        %2392 = vmatpush.msra.mxu0 0.0
        %2393 = vmatpush.msra.mxu0 0.0
        %2394 = vmatpush.msra.mxu0 0.0
        %2395 = vmatpush.msra.mxu0 0.0
        %2396 = vmatpush.msra.mxu0 0.0
        %2397 = vmatpush.msra.mxu0 0.0
        %2398 = vmatpush.msra.mxu0 %v2381
        %2399 = vmatmul.f32.gmra.mxu0 %v2285
        %v2400 = vpop.f32.mrf.mxu0
        %v2401 = vadd.f32 0.0, %v2400
        %2402 = vmatmul.f32.gmra.mxu0 %v2288
        %v2403 = vpop.f32.mrf.mxu0
        %v2404 = vadd.f32 0.0, %v2403
        %2405 = vmatmul.f32.gmra.mxu0 %v2291
        %v2406 = vpop.f32.mrf.mxu0
        %v2407 = vadd.f32 0.0, %v2406
        %2408 = vmatmul.f32.gmra.mxu0 %v2294
        %v2409 = vpop.f32.mrf.mxu0
        %v2410 = vadd.f32 0.0, %v2409
        %2411 = vmatmul.f32.gmra.mxu0 %v2297
        %v2412 = vpop.f32.mrf.mxu0
        %v2413 = vadd.f32 0.0, %v2412
        %2414 = vmatmul.f32.gmra.mxu0 %v2300
        %v2415 = vpop.f32.mrf.mxu0
        %v2416 = vadd.f32 0.0, %v2415
        %2417 = vmatmul.f32.gmra.mxu0 %v2303
        %v2418 = vpop.f32.mrf.mxu0
        %v2419 = vadd.f32 0.0, %v2418
        %2420 = vmatmul.f32.gmra.mxu0 %v2306
        %v2421 = vpop.f32.mrf.mxu0
        %v2422 = vadd.f32 0.0, %v2421
        %2423 = vmatmul.f32.gmra.mxu0 %v2309
        %v2424 = vpop.f32.mrf.mxu0
        %v2425 = vadd.f32 0.0, %v2424
        %2426 = vmatmul.f32.gmra.mxu0 %v2312
        %v2427 = vpop.f32.mrf.mxu0
        %v2428 = vadd.f32 0.0, %v2427
        %2429 = vmatmul.f32.gmra.mxu0 %v2315
        %v2430 = vpop.f32.mrf.mxu0
        %v2431 = vadd.f32 0.0, %v2430
        %2432 = vmatmul.f32.gmra.mxu0 %v2318
        %v2433 = vpop.f32.mrf.mxu0
        %v2434 = vadd.f32 0.0, %v2433
        %2435 = vmatmul.f32.gmra.mxu0 %v2321
        %v2436 = vpop.f32.mrf.mxu0
        %v2437 = vadd.f32 0.0, %v2436
        %2438 = vmatmul.f32.gmra.mxu0 %v2324
        %v2439 = vpop.f32.mrf.mxu0
        %v2440 = vadd.f32 0.0, %v2439
        %2441 = vmatmul.f32.gmra.mxu0 %v2327
        %v2442 = vpop.f32.mrf.mxu0
        %v2443 = vadd.f32 0.0, %v2442
        %2444 = vmatmul.f32.gmra.mxu0 %v2330
        %v2445 = vpop.f32.mrf.mxu0
        %v2446 = vadd.f32 0.0, %v2445
        %2447 = vmatmul.f32.gmra.mxu0 %v2333
        %v2448 = vpop.f32.mrf.mxu0
        %v2449 = vadd.f32 0.0, %v2448
        %2450 = vmatmul.f32.gmra.mxu0 %v2336
        %v2451 = vpop.f32.mrf.mxu0
        %v2452 = vadd.f32 0.0, %v2451
        %2453 = vmatmul.f32.gmra.mxu0 %v2339
        %v2454 = vpop.f32.mrf.mxu0
        %v2455 = vadd.f32 0.0, %v2454
        %2456 = vmatmul.f32.gmra.mxu0 %v2342
        %v2457 = vpop.f32.mrf.mxu0
        %v2458 = vadd.f32 0.0, %v2457
        %2459 = vmatmul.f32.gmra.mxu0 %v2345
        %v2460 = vpop.f32.mrf.mxu0
        %v2461 = vadd.f32 0.0, %v2460
        %2462 = vmatmul.f32.gmra.mxu0 %v2348
        %v2463 = vpop.f32.mrf.mxu0
        %v2464 = vadd.f32 0.0, %v2463
        %2465 = vmatmul.f32.gmra.mxu0 %v2351
        %v2466 = vpop.f32.mrf.mxu0
        %v2467 = vadd.f32 0.0, %v2466
        %2468 = vmatmul.f32.gmra.mxu0 %v2354
        %v2469 = vpop.f32.mrf.mxu0
        %v2470 = vadd.f32 0.0, %v2469
        %2471 = vmatmul.f32.gmra.mxu0 %v2357
        %v2472 = vpop.f32.mrf.mxu0
        %v2473 = vadd.f32 0.0, %v2472
        %2474 = vmatmul.f32.gmra.mxu0 %v2360
        %v2475 = vpop.f32.mrf.mxu0
        %v2476 = vadd.f32 0.0, %v2475
        %2477 = vmatmul.f32.gmra.mxu0 %v2363
        %v2478 = vpop.f32.mrf.mxu0
        %v2479 = vadd.f32 0.0, %v2478
        %2480 = vmatmul.f32.gmra.mxu0 %v2366
        %v2481 = vpop.f32.mrf.mxu0
        %v2482 = vadd.f32 0.0, %v2481
        %2483 = vmatmul.f32.gmra.mxu0 %v2369
        %v2484 = vpop.f32.mrf.mxu0
        %v2485 = vadd.f32 0.0, %v2484
        %2486 = vmatmul.f32.gmra.mxu0 %v2372
        %v2487 = vpop.f32.mrf.mxu0
        %v2488 = vadd.f32 0.0, %v2487
        %2489 = vmatmul.f32.gmra.mxu0 %v2375
        %v2490 = vpop.f32.mrf.mxu0
        %v2491 = vadd.f32 0.0, %v2490
        %2492 = vmatmul.f32.gmra.mxu0 %v2378
        %v2493 = vpop.f32.mrf.mxu0
        %v2494 = vadd.f32 0.0, %v2493
        %2495 = vdwg.mxu0
        %v2496 = vadd.f32 %v2217, %v2401
        %v2497 = vadd.f32 %v2218, %v2404
        %v2498 = vadd.f32 %v2219, %v2407
        %v2499 = vadd.f32 %v2220, %v2410
        %v2500 = vadd.f32 %v2221, %v2413
        %v2501 = vadd.f32 %v2222, %v2416
        %v2502 = vadd.f32 %v2223, %v2419
        %v2503 = vadd.f32 %v2224, %v2422
        %v2504 = vadd.f32 %v2225, %v2425
        %v2505 = vadd.f32 %v2226, %v2428
        %v2506 = vadd.f32 %v2227, %v2431
        %v2507 = vadd.f32 %v2228, %v2434
        %v2508 = vadd.f32 %v2229, %v2437
        %v2509 = vadd.f32 %v2230, %v2440
        %v2510 = vadd.f32 %v2231, %v2443
        %v2511 = vadd.f32 %v2232, %v2446
        %v2512 = vadd.f32 %v2233, %v2449
        %v2513 = vadd.f32 %v2234, %v2452
        %v2514 = vadd.f32 %v2235, %v2455
        %v2515 = vadd.f32 %v2236, %v2458
        %v2516 = vadd.f32 %v2237, %v2461
        %v2517 = vadd.f32 %v2238, %v2464
        %v2518 = vadd.f32 %v2239, %v2467
        %v2519 = vadd.f32 %v2240, %v2470
        %v2520 = vadd.f32 %v2241, %v2473
        %v2521 = vadd.f32 %v2242, %v2476
        %v2522 = vadd.f32 %v2243, %v2479
        %v2523 = vadd.f32 %v2244, %v2482
        %v2524 = vadd.f32 %v2245, %v2485
        %v2525 = vadd.f32 %v2246, %v2488
        %v2526 = vadd.f32 %v2247, %v2491
        %v2527 = vadd.f32 %v2248, %v2494
        %v2528 = vld [vmem:[%s2249 + $0x1] sm:$0xff]
        %v2529 = vld [vmem:[%s2249 + $0x9] sm:$0xff]
        %v2530 = vld [vmem:[%s2249 + $0x19] sm:$0xff]
        %v2531 = vld [vmem:[%s2249 + $0x21] sm:$0xff]
        %v2532 = vld [vmem:[%s2249 + $0x31] sm:$0xff]
        %v2533 = vld [vmem:[%s2249 + $0x39] sm:$0xff]
        %v2534 = vld [vmem:[%s2249 + $0x49] sm:$0xff]
        %v2535 = vld [vmem:[%s2249 + $0x51] sm:$0xff]
        %v2536 = vld [vmem:[%s2249 + $0x61] sm:$0xff]
        %v2537 = vld [vmem:[%s2249 + $0x69] sm:$0xff]
        %v2538 = vld [vmem:[%s2249 + $0x79] sm:$0xff]
        %v2539 = vld [vmem:[%s2249 + $0x81] sm:$0xff]
        %v2540 = vld [vmem:[%s2249 + $0x91] sm:$0xff]
        %v2541 = vld [vmem:[%s2249 + $0x99] sm:$0xff]
        %v2542 = vld [vmem:[%s2249 + $0xa9] sm:$0xff]
        %v2543 = vld [vmem:[%s2249 + $0xb1] sm:$0xff]
        %v2544 = vld [vmem:[%s2249 + $0xc1] sm:$0xff]
        %v2545 = vld [vmem:[%s2249 + $0xc9] sm:$0xff]
        %v2546 = vld [vmem:[%s2249 + $0xd9] sm:$0xff]
        %v2547 = vld [vmem:[%s2249 + $0xe1] sm:$0xff]
        %v2548 = vld [vmem:[%s2249 + $0xf1] sm:$0xff]
        %v2549 = vld [vmem:[%s2249 + $0xf9] sm:$0xff]
        %v2550 = vld [vmem:[%s2249 + $0x109] sm:$0xff]
        %v2551 = vld [vmem:[%s2249 + $0x111] sm:$0xff]
        %v2552 = vld [vmem:[%s2249 + $0x121] sm:$0xff]
        %v2553 = vld [vmem:[%s2249 + $0x129] sm:$0xff]
        %v2554 = vld [vmem:[%s2249 + $0x139] sm:$0xff]
        %v2555 = vld [vmem:[%s2249 + $0x141] sm:$0xff]
        %v2556 = vld [vmem:[%s2249 + $0x151] sm:$0xff]
        %v2557 = vld [vmem:[%s2249 + $0x159] sm:$0xff]
        %v2558 = vld [vmem:[%s2249 + $0x169] sm:$0xff]
        %v2559 = vld [vmem:[%s2249 + $0x171] sm:$0xff]
        %s2560 = scalar_lea.vmem %s1, 28
        %v2561 = vld [vmem:[%s2560] sm:$0xf]
        %v2563 = vsel %vm364, %v2528, 0
        %v2566 = vsel %vm364, %v2529, 0
        %v2569 = vsel %vm364, %v2530, 0
        %v2572 = vsel %vm364, %v2531, 0
        %v2575 = vsel %vm364, %v2532, 0
        %v2578 = vsel %vm364, %v2533, 0
        %v2581 = vsel %vm364, %v2534, 0
        %v2584 = vsel %vm364, %v2535, 0
        %v2587 = vsel %vm364, %v2536, 0
        %v2590 = vsel %vm364, %v2537, 0
        %v2593 = vsel %vm364, %v2538, 0
        %v2596 = vsel %vm364, %v2539, 0
        %v2599 = vsel %vm364, %v2540, 0
        %v2602 = vsel %vm364, %v2541, 0
        %v2605 = vsel %vm364, %v2542, 0
        %v2608 = vsel %vm364, %v2543, 0
        %v2611 = vsel %vm364, %v2544, 0
        %v2614 = vsel %vm364, %v2545, 0
        %v2617 = vsel %vm364, %v2546, 0
        %v2620 = vsel %vm364, %v2547, 0
        %v2623 = vsel %vm364, %v2548, 0
        %v2626 = vsel %vm364, %v2549, 0
        %v2629 = vsel %vm364, %v2550, 0
        %v2632 = vsel %vm364, %v2551, 0
        %v2635 = vsel %vm364, %v2552, 0
        %v2638 = vsel %vm364, %v2553, 0
        %v2641 = vsel %vm364, %v2554, 0
        %v2644 = vsel %vm364, %v2555, 0
        %v2647 = vsel %vm364, %v2556, 0
        %v2650 = vsel %vm364, %v2557, 0
        %v2653 = vsel %vm364, %v2558, 0
        %v2656 = vsel %vm364, %v2559, 0
        %v2659 = vsel %vm808, %v2561, 0
        %2661 = vmatpush.msra.mxu0 0.0
        %2662 = vmatpush.msra.mxu0 0.0
        %2663 = vmatpush.msra.mxu0 0.0
        %2664 = vmatpush.msra.mxu0 0.0
        %2665 = vmatpush.msra.mxu0 0.0
        %2666 = vmatpush.msra.mxu0 0.0
        %2667 = vmatpush.msra.mxu0 0.0
        %2668 = vmatpush.msra.mxu0 0.0
        %2669 = vmatpush.msra.mxu0 0.0
        %2670 = vmatpush.msra.mxu0 0.0
        %2671 = vmatpush.msra.mxu0 0.0
        %2672 = vmatpush.msra.mxu0 0.0
        %2673 = vmatpush.msra.mxu0 0.0
        %2674 = vmatpush.msra.mxu0 0.0
        %2675 = vmatpush.msra.mxu0 0.0
        %2676 = vmatpush.msra.mxu0 %v2659
        %2677 = vmatmul.f32.gmra.mxu0 %v2563
        %v2678 = vpop.f32.mrf.mxu0
        %v2679 = vadd.f32 0.0, %v2678
        %2680 = vmatmul.f32.gmra.mxu0 %v2566
        %v2681 = vpop.f32.mrf.mxu0
        %v2682 = vadd.f32 0.0, %v2681
        %2683 = vmatmul.f32.gmra.mxu0 %v2569
        %v2684 = vpop.f32.mrf.mxu0
        %v2685 = vadd.f32 0.0, %v2684
        %2686 = vmatmul.f32.gmra.mxu0 %v2572
        %v2687 = vpop.f32.mrf.mxu0
        %v2688 = vadd.f32 0.0, %v2687
        %2689 = vmatmul.f32.gmra.mxu0 %v2575
        %v2690 = vpop.f32.mrf.mxu0
        %v2691 = vadd.f32 0.0, %v2690
        %2692 = vmatmul.f32.gmra.mxu0 %v2578
        %v2693 = vpop.f32.mrf.mxu0
        %v2694 = vadd.f32 0.0, %v2693
        %2695 = vmatmul.f32.gmra.mxu0 %v2581
        %v2696 = vpop.f32.mrf.mxu0
        %v2697 = vadd.f32 0.0, %v2696
        %2698 = vmatmul.f32.gmra.mxu0 %v2584
        %v2699 = vpop.f32.mrf.mxu0
        %v2700 = vadd.f32 0.0, %v2699
        %2701 = vmatmul.f32.gmra.mxu0 %v2587
        %v2702 = vpop.f32.mrf.mxu0
        %v2703 = vadd.f32 0.0, %v2702
        %2704 = vmatmul.f32.gmra.mxu0 %v2590
        %v2705 = vpop.f32.mrf.mxu0
        %v2706 = vadd.f32 0.0, %v2705
        %2707 = vmatmul.f32.gmra.mxu0 %v2593
        %v2708 = vpop.f32.mrf.mxu0
        %v2709 = vadd.f32 0.0, %v2708
        %2710 = vmatmul.f32.gmra.mxu0 %v2596
        %v2711 = vpop.f32.mrf.mxu0
        %v2712 = vadd.f32 0.0, %v2711
        %2713 = vmatmul.f32.gmra.mxu0 %v2599
        %v2714 = vpop.f32.mrf.mxu0
        %v2715 = vadd.f32 0.0, %v2714
        %2716 = vmatmul.f32.gmra.mxu0 %v2602
        %v2717 = vpop.f32.mrf.mxu0
        %v2718 = vadd.f32 0.0, %v2717
        %2719 = vmatmul.f32.gmra.mxu0 %v2605
        %v2720 = vpop.f32.mrf.mxu0
        %v2721 = vadd.f32 0.0, %v2720
        %2722 = vmatmul.f32.gmra.mxu0 %v2608
        %v2723 = vpop.f32.mrf.mxu0
        %v2724 = vadd.f32 0.0, %v2723
        %2725 = vmatmul.f32.gmra.mxu0 %v2611
        %v2726 = vpop.f32.mrf.mxu0
        %v2727 = vadd.f32 0.0, %v2726
        %2728 = vmatmul.f32.gmra.mxu0 %v2614
        %v2729 = vpop.f32.mrf.mxu0
        %v2730 = vadd.f32 0.0, %v2729
        %2731 = vmatmul.f32.gmra.mxu0 %v2617
        %v2732 = vpop.f32.mrf.mxu0
        %v2733 = vadd.f32 0.0, %v2732
        %2734 = vmatmul.f32.gmra.mxu0 %v2620
        %v2735 = vpop.f32.mrf.mxu0
        %v2736 = vadd.f32 0.0, %v2735
        %2737 = vmatmul.f32.gmra.mxu0 %v2623
        %v2738 = vpop.f32.mrf.mxu0
        %v2739 = vadd.f32 0.0, %v2738
        %2740 = vmatmul.f32.gmra.mxu0 %v2626
        %v2741 = vpop.f32.mrf.mxu0
        %v2742 = vadd.f32 0.0, %v2741
        %2743 = vmatmul.f32.gmra.mxu0 %v2629
        %v2744 = vpop.f32.mrf.mxu0
        %v2745 = vadd.f32 0.0, %v2744
        %2746 = vmatmul.f32.gmra.mxu0 %v2632
        %v2747 = vpop.f32.mrf.mxu0
        %v2748 = vadd.f32 0.0, %v2747
        %2749 = vmatmul.f32.gmra.mxu0 %v2635
        %v2750 = vpop.f32.mrf.mxu0
        %v2751 = vadd.f32 0.0, %v2750
        %2752 = vmatmul.f32.gmra.mxu0 %v2638
        %v2753 = vpop.f32.mrf.mxu0
        %v2754 = vadd.f32 0.0, %v2753
        %2755 = vmatmul.f32.gmra.mxu0 %v2641
        %v2756 = vpop.f32.mrf.mxu0
        %v2757 = vadd.f32 0.0, %v2756
        %2758 = vmatmul.f32.gmra.mxu0 %v2644
        %v2759 = vpop.f32.mrf.mxu0
        %v2760 = vadd.f32 0.0, %v2759
        %2761 = vmatmul.f32.gmra.mxu0 %v2647
        %v2762 = vpop.f32.mrf.mxu0
        %v2763 = vadd.f32 0.0, %v2762
        %2764 = vmatmul.f32.gmra.mxu0 %v2650
        %v2765 = vpop.f32.mrf.mxu0
        %v2766 = vadd.f32 0.0, %v2765
        %2767 = vmatmul.f32.gmra.mxu0 %v2653
        %v2768 = vpop.f32.mrf.mxu0
        %v2769 = vadd.f32 0.0, %v2768
        %2770 = vmatmul.f32.gmra.mxu0 %v2656
        %v2771 = vpop.f32.mrf.mxu0
        %v2772 = vadd.f32 0.0, %v2771
        %2773 = vdwg.mxu0
        %v2774 = vadd.f32 %v2496, %v2679
        %v2775 = vadd.f32 %v2497, %v2682
        %v2776 = vadd.f32 %v2498, %v2685
        %v2777 = vadd.f32 %v2499, %v2688
        %v2778 = vadd.f32 %v2500, %v2691
        %v2779 = vadd.f32 %v2501, %v2694
        %v2780 = vadd.f32 %v2502, %v2697
        %v2781 = vadd.f32 %v2503, %v2700
        %v2782 = vadd.f32 %v2504, %v2703
        %v2783 = vadd.f32 %v2505, %v2706
        %v2784 = vadd.f32 %v2506, %v2709
        %v2785 = vadd.f32 %v2507, %v2712
        %v2786 = vadd.f32 %v2508, %v2715
        %v2787 = vadd.f32 %v2509, %v2718
        %v2788 = vadd.f32 %v2510, %v2721
        %v2789 = vadd.f32 %v2511, %v2724
        %v2790 = vadd.f32 %v2512, %v2727
        %v2791 = vadd.f32 %v2513, %v2730
        %v2792 = vadd.f32 %v2514, %v2733
        %v2793 = vadd.f32 %v2515, %v2736
        %v2794 = vadd.f32 %v2516, %v2739
        %v2795 = vadd.f32 %v2517, %v2742
        %v2796 = vadd.f32 %v2518, %v2745
        %v2797 = vadd.f32 %v2519, %v2748
        %v2798 = vadd.f32 %v2520, %v2751
        %v2799 = vadd.f32 %v2521, %v2754
        %v2800 = vadd.f32 %v2522, %v2757
        %v2801 = vadd.f32 %v2523, %v2760
        %v2802 = vadd.f32 %v2524, %v2763
        %v2803 = vadd.f32 %v2525, %v2766
        %v2804 = vadd.f32 %v2526, %v2769
        %v2805 = vadd.f32 %v2527, %v2772
        %v2806 = vld [vmem:[%s2249 + $0x2] sm:$0xff]
        %v2807 = vld [vmem:[%s2249 + $0xa] sm:$0xff]
        %v2808 = vld [vmem:[%s2249 + $0x1a] sm:$0xff]
        %v2809 = vld [vmem:[%s2249 + $0x22] sm:$0xff]
        %v2810 = vld [vmem:[%s2249 + $0x32] sm:$0xff]
        %v2811 = vld [vmem:[%s2249 + $0x3a] sm:$0xff]
        %v2812 = vld [vmem:[%s2249 + $0x4a] sm:$0xff]
        %v2813 = vld [vmem:[%s2249 + $0x52] sm:$0xff]
        %v2814 = vld [vmem:[%s2249 + $0x62] sm:$0xff]
        %v2815 = vld [vmem:[%s2249 + $0x6a] sm:$0xff]
        %v2816 = vld [vmem:[%s2249 + $0x7a] sm:$0xff]
        %v2817 = vld [vmem:[%s2249 + $0x82] sm:$0xff]
        %v2818 = vld [vmem:[%s2249 + $0x92] sm:$0xff]
        %v2819 = vld [vmem:[%s2249 + $0x9a] sm:$0xff]
        %v2820 = vld [vmem:[%s2249 + $0xaa] sm:$0xff]
        %v2821 = vld [vmem:[%s2249 + $0xb2] sm:$0xff]
        %v2822 = vld [vmem:[%s2249 + $0xc2] sm:$0xff]
        %v2823 = vld [vmem:[%s2249 + $0xca] sm:$0xff]
        %v2824 = vld [vmem:[%s2249 + $0xda] sm:$0xff]
        %v2825 = vld [vmem:[%s2249 + $0xe2] sm:$0xff]
        %v2826 = vld [vmem:[%s2249 + $0xf2] sm:$0xff]
        %v2827 = vld [vmem:[%s2249 + $0xfa] sm:$0xff]
        %v2828 = vld [vmem:[%s2249 + $0x10a] sm:$0xff]
        %v2829 = vld [vmem:[%s2249 + $0x112] sm:$0xff]
        %v2830 = vld [vmem:[%s2249 + $0x122] sm:$0xff]
        %v2831 = vld [vmem:[%s2249 + $0x12a] sm:$0xff]
        %v2832 = vld [vmem:[%s2249 + $0x13a] sm:$0xff]
        %v2833 = vld [vmem:[%s2249 + $0x142] sm:$0xff]
        %v2834 = vld [vmem:[%s2249 + $0x152] sm:$0xff]
        %v2835 = vld [vmem:[%s2249 + $0x15a] sm:$0xff]
        %v2836 = vld [vmem:[%s2249 + $0x16a] sm:$0xff]
        %v2837 = vld [vmem:[%s2249 + $0x172] sm:$0xff]
        %s2838 = scalar_lea.vmem %s1, 32
        %v2839 = vld [vmem:[%s2838] sm:$0xf]
        %v2841 = vsel %vm364, %v2806, 0
        %v2844 = vsel %vm364, %v2807, 0
        %v2847 = vsel %vm364, %v2808, 0
        %v2850 = vsel %vm364, %v2809, 0
        %v2853 = vsel %vm364, %v2810, 0
        %v2856 = vsel %vm364, %v2811, 0
        %v2859 = vsel %vm364, %v2812, 0
        %v2862 = vsel %vm364, %v2813, 0
        %v2865 = vsel %vm364, %v2814, 0
        %v2868 = vsel %vm364, %v2815, 0
        %v2871 = vsel %vm364, %v2816, 0
        %v2874 = vsel %vm364, %v2817, 0
        %v2877 = vsel %vm364, %v2818, 0
        %v2880 = vsel %vm364, %v2819, 0
        %v2883 = vsel %vm364, %v2820, 0
        %v2886 = vsel %vm364, %v2821, 0
        %v2889 = vsel %vm364, %v2822, 0
        %v2892 = vsel %vm364, %v2823, 0
        %v2895 = vsel %vm364, %v2824, 0
        %v2898 = vsel %vm364, %v2825, 0
        %v2901 = vsel %vm364, %v2826, 0
        %v2904 = vsel %vm364, %v2827, 0
        %v2907 = vsel %vm364, %v2828, 0
        %v2910 = vsel %vm364, %v2829, 0
        %v2913 = vsel %vm364, %v2830, 0
        %v2916 = vsel %vm364, %v2831, 0
        %v2919 = vsel %vm364, %v2832, 0
        %v2922 = vsel %vm364, %v2833, 0
        %v2925 = vsel %vm364, %v2834, 0
        %v2928 = vsel %vm364, %v2835, 0
        %v2931 = vsel %vm364, %v2836, 0
        %v2934 = vsel %vm364, %v2837, 0
        %v2937 = vsel %vm808, %v2839, 0
        %2939 = vmatpush.msra.mxu0 0.0
        %2940 = vmatpush.msra.mxu0 0.0
        %2941 = vmatpush.msra.mxu0 0.0
        %2942 = vmatpush.msra.mxu0 0.0
        %2943 = vmatpush.msra.mxu0 0.0
        %2944 = vmatpush.msra.mxu0 0.0
        %2945 = vmatpush.msra.mxu0 0.0
        %2946 = vmatpush.msra.mxu0 0.0
        %2947 = vmatpush.msra.mxu0 0.0
        %2948 = vmatpush.msra.mxu0 0.0
        %2949 = vmatpush.msra.mxu0 0.0
        %2950 = vmatpush.msra.mxu0 0.0
        %2951 = vmatpush.msra.mxu0 0.0
        %2952 = vmatpush.msra.mxu0 0.0
        %2953 = vmatpush.msra.mxu0 0.0
        %2954 = vmatpush.msra.mxu0 %v2937
        %2955 = vmatmul.f32.gmra.mxu0 %v2841
        %v2956 = vpop.f32.mrf.mxu0
        %v2957 = vadd.f32 0.0, %v2956
        %2958 = vmatmul.f32.gmra.mxu0 %v2844
        %v2959 = vpop.f32.mrf.mxu0
        %v2960 = vadd.f32 0.0, %v2959
        %2961 = vmatmul.f32.gmra.mxu0 %v2847
        %v2962 = vpop.f32.mrf.mxu0
        %v2963 = vadd.f32 0.0, %v2962
        %2964 = vmatmul.f32.gmra.mxu0 %v2850
        %v2965 = vpop.f32.mrf.mxu0
        %v2966 = vadd.f32 0.0, %v2965
        %2967 = vmatmul.f32.gmra.mxu0 %v2853
        %v2968 = vpop.f32.mrf.mxu0
        %v2969 = vadd.f32 0.0, %v2968
        %2970 = vmatmul.f32.gmra.mxu0 %v2856
        %v2971 = vpop.f32.mrf.mxu0
        %v2972 = vadd.f32 0.0, %v2971
        %2973 = vmatmul.f32.gmra.mxu0 %v2859
        %v2974 = vpop.f32.mrf.mxu0
        %v2975 = vadd.f32 0.0, %v2974
        %2976 = vmatmul.f32.gmra.mxu0 %v2862
        %v2977 = vpop.f32.mrf.mxu0
        %v2978 = vadd.f32 0.0, %v2977
        %2979 = vmatmul.f32.gmra.mxu0 %v2865
        %v2980 = vpop.f32.mrf.mxu0
        %v2981 = vadd.f32 0.0, %v2980
        %2982 = vmatmul.f32.gmra.mxu0 %v2868
        %v2983 = vpop.f32.mrf.mxu0
        %v2984 = vadd.f32 0.0, %v2983
        %2985 = vmatmul.f32.gmra.mxu0 %v2871
        %v2986 = vpop.f32.mrf.mxu0
        %v2987 = vadd.f32 0.0, %v2986
        %2988 = vmatmul.f32.gmra.mxu0 %v2874
        %v2989 = vpop.f32.mrf.mxu0
        %v2990 = vadd.f32 0.0, %v2989
        %2991 = vmatmul.f32.gmra.mxu0 %v2877
        %v2992 = vpop.f32.mrf.mxu0
        %v2993 = vadd.f32 0.0, %v2992
        %2994 = vmatmul.f32.gmra.mxu0 %v2880
        %v2995 = vpop.f32.mrf.mxu0
        %v2996 = vadd.f32 0.0, %v2995
        %2997 = vmatmul.f32.gmra.mxu0 %v2883
        %v2998 = vpop.f32.mrf.mxu0
        %v2999 = vadd.f32 0.0, %v2998
        %3000 = vmatmul.f32.gmra.mxu0 %v2886
        %v3001 = vpop.f32.mrf.mxu0
        %v3002 = vadd.f32 0.0, %v3001
        %3003 = vmatmul.f32.gmra.mxu0 %v2889
        %v3004 = vpop.f32.mrf.mxu0
        %v3005 = vadd.f32 0.0, %v3004
        %3006 = vmatmul.f32.gmra.mxu0 %v2892
        %v3007 = vpop.f32.mrf.mxu0
        %v3008 = vadd.f32 0.0, %v3007
        %3009 = vmatmul.f32.gmra.mxu0 %v2895
        %v3010 = vpop.f32.mrf.mxu0
        %v3011 = vadd.f32 0.0, %v3010
        %3012 = vmatmul.f32.gmra.mxu0 %v2898
        %v3013 = vpop.f32.mrf.mxu0
        %v3014 = vadd.f32 0.0, %v3013
        %3015 = vmatmul.f32.gmra.mxu0 %v2901
        %v3016 = vpop.f32.mrf.mxu0
        %v3017 = vadd.f32 0.0, %v3016
        %3018 = vmatmul.f32.gmra.mxu0 %v2904
        %v3019 = vpop.f32.mrf.mxu0
        %v3020 = vadd.f32 0.0, %v3019
        %3021 = vmatmul.f32.gmra.mxu0 %v2907
        %v3022 = vpop.f32.mrf.mxu0
        %v3023 = vadd.f32 0.0, %v3022
        %3024 = vmatmul.f32.gmra.mxu0 %v2910
        %v3025 = vpop.f32.mrf.mxu0
        %v3026 = vadd.f32 0.0, %v3025
        %3027 = vmatmul.f32.gmra.mxu0 %v2913
        %v3028 = vpop.f32.mrf.mxu0
        %v3029 = vadd.f32 0.0, %v3028
        %3030 = vmatmul.f32.gmra.mxu0 %v2916
        %v3031 = vpop.f32.mrf.mxu0
        %v3032 = vadd.f32 0.0, %v3031
        %3033 = vmatmul.f32.gmra.mxu0 %v2919
        %v3034 = vpop.f32.mrf.mxu0
        %v3035 = vadd.f32 0.0, %v3034
        %3036 = vmatmul.f32.gmra.mxu0 %v2922
        %v3037 = vpop.f32.mrf.mxu0
        %v3038 = vadd.f32 0.0, %v3037
        %3039 = vmatmul.f32.gmra.mxu0 %v2925
        %v3040 = vpop.f32.mrf.mxu0
        %v3041 = vadd.f32 0.0, %v3040
        %3042 = vmatmul.f32.gmra.mxu0 %v2928
        %v3043 = vpop.f32.mrf.mxu0
        %v3044 = vadd.f32 0.0, %v3043
        %3045 = vmatmul.f32.gmra.mxu0 %v2931
        %v3046 = vpop.f32.mrf.mxu0
        %v3047 = vadd.f32 0.0, %v3046
        %3048 = vmatmul.f32.gmra.mxu0 %v2934
        %v3049 = vpop.f32.mrf.mxu0
        %v3050 = vadd.f32 0.0, %v3049
        %3051 = vdwg.mxu0
        %v3052 = vadd.f32 %v2774, %v2957
        %v3053 = vadd.f32 %v2775, %v2960
        %v3054 = vadd.f32 %v2776, %v2963
        %v3055 = vadd.f32 %v2777, %v2966
        %v3056 = vadd.f32 %v2778, %v2969
        %v3057 = vadd.f32 %v2779, %v2972
        %v3058 = vadd.f32 %v2780, %v2975
        %v3059 = vadd.f32 %v2781, %v2978
        %v3060 = vadd.f32 %v2782, %v2981
        %v3061 = vadd.f32 %v2783, %v2984
        %v3062 = vadd.f32 %v2784, %v2987
        %v3063 = vadd.f32 %v2785, %v2990
        %v3064 = vadd.f32 %v2786, %v2993
        %v3065 = vadd.f32 %v2787, %v2996
        %v3066 = vadd.f32 %v2788, %v2999
        %v3067 = vadd.f32 %v2789, %v3002
        %v3068 = vadd.f32 %v2790, %v3005
        %v3069 = vadd.f32 %v2791, %v3008
        %v3070 = vadd.f32 %v2792, %v3011
        %v3071 = vadd.f32 %v2793, %v3014
        %v3072 = vadd.f32 %v2794, %v3017
        %v3073 = vadd.f32 %v2795, %v3020
        %v3074 = vadd.f32 %v2796, %v3023
        %v3075 = vadd.f32 %v2797, %v3026
        %v3076 = vadd.f32 %v2798, %v3029
        %v3077 = vadd.f32 %v2799, %v3032
        %v3078 = vadd.f32 %v2800, %v3035
        %v3079 = vadd.f32 %v2801, %v3038
        %v3080 = vadd.f32 %v2802, %v3041
        %v3081 = vadd.f32 %v2803, %v3044
        %v3082 = vadd.f32 %v2804, %v3047
        %v3083 = vadd.f32 %v2805, %v3050
        %v3084 = vld [vmem:[%s6] sm:$0x1]
        %v3086 = vperm.slane %v3084, 0
        %v3088 = vmul.f32 %v3052, %v3086
        %v3089 = vmul.f32 %v3053, %v3086
        %v3090 = vmul.f32 %v3054, %v3086
        %v3091 = vmul.f32 %v3055, %v3086
        %v3092 = vmul.f32 %v3056, %v3086
        %v3093 = vmul.f32 %v3057, %v3086
        %v3094 = vmul.f32 %v3058, %v3086
        %v3095 = vmul.f32 %v3059, %v3086
        %v3096 = vmul.f32 %v3060, %v3086
        %v3097 = vmul.f32 %v3061, %v3086
        %v3098 = vmul.f32 %v3062, %v3086
        %v3099 = vmul.f32 %v3063, %v3086
        %v3100 = vmul.f32 %v3064, %v3086
        %v3101 = vmul.f32 %v3065, %v3086
        %v3102 = vmul.f32 %v3066, %v3086
        %v3103 = vmul.f32 %v3067, %v3086
        %v3104 = vmul.f32 %v3068, %v3086
        %v3105 = vmul.f32 %v3069, %v3086
        %v3106 = vmul.f32 %v3070, %v3086
        %v3107 = vmul.f32 %v3071, %v3086
        %v3108 = vmul.f32 %v3072, %v3086
        %v3109 = vmul.f32 %v3073, %v3086
        %v3110 = vmul.f32 %v3074, %v3086
        %v3111 = vmul.f32 %v3075, %v3086
        %v3112 = vmul.f32 %v3076, %v3086
        %v3113 = vmul.f32 %v3077, %v3086
        %v3114 = vmul.f32 %v3078, %v3086
        %v3115 = vmul.f32 %v3079, %v3086
        %v3116 = vmul.f32 %v3080, %v3086
        %v3117 = vmul.f32 %v3081, %v3086
        %v3118 = vmul.f32 %v3082, %v3086
        %v3119 = vmul.f32 %v3083, %v3086
        %v3120 = vld [vmem:[%s7] sm:$0x1]
        %v3122 = vperm.slane %v3120, 0
        %v3124 = vadd.f32 %v3088, %v3122
        %v3125 = vadd.f32 %v3089, %v3122
        %v3126 = vadd.f32 %v3090, %v3122
        %v3127 = vadd.f32 %v3091, %v3122
        %v3128 = vadd.f32 %v3092, %v3122
        %v3129 = vadd.f32 %v3093, %v3122
        %v3130 = vadd.f32 %v3094, %v3122
        %v3131 = vadd.f32 %v3095, %v3122
        %v3132 = vadd.f32 %v3096, %v3122
        %v3133 = vadd.f32 %v3097, %v3122
        %v3134 = vadd.f32 %v3098, %v3122
        %v3135 = vadd.f32 %v3099, %v3122
        %v3136 = vadd.f32 %v3100, %v3122
        %v3137 = vadd.f32 %v3101, %v3122
        %v3138 = vadd.f32 %v3102, %v3122
        %v3139 = vadd.f32 %v3103, %v3122
        %v3140 = vadd.f32 %v3104, %v3122
        %v3141 = vadd.f32 %v3105, %v3122
        %v3142 = vadd.f32 %v3106, %v3122
        %v3143 = vadd.f32 %v3107, %v3122
        %v3144 = vadd.f32 %v3108, %v3122
        %v3145 = vadd.f32 %v3109, %v3122
        %v3146 = vadd.f32 %v3110, %v3122
        %v3147 = vadd.f32 %v3111, %v3122
        %v3148 = vadd.f32 %v3112, %v3122
        %v3149 = vadd.f32 %v3113, %v3122
        %v3150 = vadd.f32 %v3114, %v3122
        %v3151 = vadd.f32 %v3115, %v3122
        %v3152 = vadd.f32 %v3116, %v3122
        %v3153 = vadd.f32 %v3117, %v3122
        %v3154 = vadd.f32 %v3118, %v3122
        %v3155 = vadd.f32 %v3119, %v3122
        %v3156 = vmax.f32 %v3124, 0.0
        %v3157 = vmax.f32 %v3125, 0.0
        %v3158 = vmax.f32 %v3126, 0.0
        %v3159 = vmax.f32 %v3127, 0.0
        %v3160 = vmax.f32 %v3128, 0.0
        %v3161 = vmax.f32 %v3129, 0.0
        %v3162 = vmax.f32 %v3130, 0.0
        %v3163 = vmax.f32 %v3131, 0.0
        %v3164 = vmax.f32 %v3132, 0.0
        %v3165 = vmax.f32 %v3133, 0.0
        %v3166 = vmax.f32 %v3134, 0.0
        %v3167 = vmax.f32 %v3135, 0.0
        %v3168 = vmax.f32 %v3136, 0.0
        %v3169 = vmax.f32 %v3137, 0.0
        %v3170 = vmax.f32 %v3138, 0.0
        %v3171 = vmax.f32 %v3139, 0.0
        %v3172 = vmax.f32 %v3140, 0.0
        %v3173 = vmax.f32 %v3141, 0.0
        %v3174 = vmax.f32 %v3142, 0.0
        %v3175 = vmax.f32 %v3143, 0.0
        %v3176 = vmax.f32 %v3144, 0.0
        %v3177 = vmax.f32 %v3145, 0.0
        %v3178 = vmax.f32 %v3146, 0.0
        %v3179 = vmax.f32 %v3147, 0.0
        %v3180 = vmax.f32 %v3148, 0.0
        %v3181 = vmax.f32 %v3149, 0.0
        %v3182 = vmax.f32 %v3150, 0.0
        %v3183 = vmax.f32 %v3151, 0.0
        %v3184 = vmax.f32 %v3152, 0.0
        %v3185 = vmax.f32 %v3153, 0.0
        %v3186 = vmax.f32 %v3154, 0.0
        %v3187 = vmax.f32 %v3155, 0.0
        %s3188 = scalar_lea.vmem [#allocation3], 24
        %3189 = vst.msk [vmem:[%s3188 + $0x1] sm:$0xff] %vm420, %v3156
        %3190 = vst.msk [vmem:[%s3188 + $0x9] sm:$0xff] %vm420, %v3157
        %3191 = vst.msk [vmem:[%s3188 + $0x19] sm:$0xff] %vm420, %v3158
        %3192 = vst.msk [vmem:[%s3188 + $0x21] sm:$0xff] %vm420, %v3159
        %3193 = vst.msk [vmem:[%s3188 + $0x31] sm:$0xff] %vm420, %v3160
        %3194 = vst.msk [vmem:[%s3188 + $0x39] sm:$0xff] %vm420, %v3161
        %3195 = vst.msk [vmem:[%s3188 + $0x49] sm:$0xff] %vm420, %v3162
        %3196 = vst.msk [vmem:[%s3188 + $0x51] sm:$0xff] %vm420, %v3163
        %3197 = vst.msk [vmem:[%s3188 + $0x61] sm:$0xff] %vm420, %v3164
        %3198 = vst.msk [vmem:[%s3188 + $0x69] sm:$0xff] %vm420, %v3165
        %3199 = vst.msk [vmem:[%s3188 + $0x79] sm:$0xff] %vm420, %v3166
        %3200 = vst.msk [vmem:[%s3188 + $0x81] sm:$0xff] %vm420, %v3167
        %3201 = vst.msk [vmem:[%s3188 + $0x91] sm:$0xff] %vm420, %v3168
        %3202 = vst.msk [vmem:[%s3188 + $0x99] sm:$0xff] %vm420, %v3169
        %3203 = vst.msk [vmem:[%s3188 + $0xa9] sm:$0xff] %vm420, %v3170
        %3204 = vst.msk [vmem:[%s3188 + $0xb1] sm:$0xff] %vm420, %v3171
        %3205 = vst.msk [vmem:[%s3188 + $0xc1] sm:$0xff] %vm420, %v3172
        %3206 = vst.msk [vmem:[%s3188 + $0xc9] sm:$0xff] %vm420, %v3173
        %3207 = vst.msk [vmem:[%s3188 + $0xd9] sm:$0xff] %vm420, %v3174
        %3208 = vst.msk [vmem:[%s3188 + $0xe1] sm:$0xff] %vm420, %v3175
        %3209 = vst.msk [vmem:[%s3188 + $0xf1] sm:$0xff] %vm420, %v3176
        %3210 = vst.msk [vmem:[%s3188 + $0xf9] sm:$0xff] %vm420, %v3177
        %3211 = vst.msk [vmem:[%s3188 + $0x109] sm:$0xff] %vm420, %v3178
        %3212 = vst.msk [vmem:[%s3188 + $0x111] sm:$0xff] %vm420, %v3179
        %3213 = vst.msk [vmem:[%s3188 + $0x121] sm:$0xff] %vm420, %v3180
        %3214 = vst.msk [vmem:[%s3188 + $0x129] sm:$0xff] %vm420, %v3181
        %3215 = vst.msk [vmem:[%s3188 + $0x139] sm:$0xff] %vm420, %v3182
        %3216 = vst.msk [vmem:[%s3188 + $0x141] sm:$0xff] %vm420, %v3183
        %3217 = vst.msk [vmem:[%s3188 + $0x151] sm:$0xff] %vm420, %v3184
        %3218 = vst.msk [vmem:[%s3188 + $0x159] sm:$0xff] %vm420, %v3185
        %3219 = vst.msk [vmem:[%s3188 + $0x169] sm:$0xff] %vm420, %v3186
        %3220 = vst.msk [vmem:[%s3188 + $0x171] sm:$0xff] %vm420, %v3187
      $region56: #{tpu_custom_call.1} parent=51 // pred_fallthru
        _
      %v3221 = vld [vmem:[#allocation3] sm:$0xff]
      %v3222 = vld [vmem:[#allocation3 + $0x8] sm:$0xff]
      %v3223 = vld [vmem:[#allocation3 + $0x18] sm:$0xff]
      %v3224 = vld [vmem:[#allocation3 + $0x20] sm:$0xff]
      %v3225 = vld [vmem:[#allocation3 + $0x30] sm:$0xff]
      %v3226 = vld [vmem:[#allocation3 + $0x38] sm:$0xff]
      %v3227 = vld [vmem:[#allocation3 + $0x48] sm:$0xff]
      %v3228 = vld [vmem:[#allocation3 + $0x50] sm:$0xff]
      %v3229 = vld [vmem:[#allocation3 + $0x60] sm:$0xff]
      %v3230 = vld [vmem:[#allocation3 + $0x68] sm:$0xff]
      %v3231 = vld [vmem:[#allocation3 + $0x78] sm:$0xff]
      %v3232 = vld [vmem:[#allocation3 + $0x80] sm:$0xff]
      %v3233 = vld [vmem:[#allocation3 + $0x90] sm:$0xff]
      %v3234 = vld [vmem:[#allocation3 + $0x98] sm:$0xff]
      %v3235 = vld [vmem:[#allocation3 + $0xa8] sm:$0xff]
      %v3236 = vld [vmem:[#allocation3 + $0xb0] sm:$0xff]
      %v3237 = vld [vmem:[#allocation3 + $0xc0] sm:$0xff]
      %v3238 = vld [vmem:[#allocation3 + $0xc8] sm:$0xff]
      %v3239 = vld [vmem:[#allocation3 + $0xd8] sm:$0xff]
      %v3240 = vld [vmem:[#allocation3 + $0xe0] sm:$0xff]
      %v3241 = vld [vmem:[#allocation3 + $0xf0] sm:$0xff]
      %v3242 = vld [vmem:[#allocation3 + $0xf8] sm:$0xff]
      %v3243 = vld [vmem:[#allocation3 + $0x108] sm:$0xff]
      %v3244 = vld [vmem:[#allocation3 + $0x110] sm:$0xff]
      %v3245 = vld [vmem:[#allocation3 + $0x120] sm:$0xff]
      %v3246 = vld [vmem:[#allocation3 + $0x128] sm:$0xff]
      %v3247 = vld [vmem:[#allocation3 + $0x138] sm:$0xff]
      %v3248 = vld [vmem:[#allocation3 + $0x140] sm:$0xff]
      %v3249 = vld [vmem:[#allocation3 + $0x150] sm:$0xff]
      %v3250 = vld [vmem:[#allocation3 + $0x158] sm:$0xff]
      %v3251 = vld [vmem:[#allocation3 + $0x168] sm:$0xff]
      %v3252 = vld [vmem:[#allocation3 + $0x170] sm:$0xff]
      %v3253 = vld [vmem:[%s347] sm:$0xff]
      %v3254 = vld [vmem:[#allocation3 + $0x1] sm:$0xff]
      %v3255 = vld [vmem:[#allocation3 + $0x9] sm:$0xff]
      %v3256 = vld [vmem:[#allocation3 + $0x19] sm:$0xff]
      %v3257 = vld [vmem:[#allocation3 + $0x21] sm:$0xff]
      %v3258 = vld [vmem:[#allocation3 + $0x31] sm:$0xff]
      %v3259 = vld [vmem:[#allocation3 + $0x39] sm:$0xff]
      %v3260 = vld [vmem:[#allocation3 + $0x49] sm:$0xff]
      %v3261 = vld [vmem:[#allocation3 + $0x51] sm:$0xff]
      %v3262 = vld [vmem:[#allocation3 + $0x61] sm:$0xff]
      %v3263 = vld [vmem:[#allocation3 + $0x69] sm:$0xff]
      %v3264 = vld [vmem:[#allocation3 + $0x79] sm:$0xff]
      %v3265 = vld [vmem:[#allocation3 + $0x81] sm:$0xff]
      %v3266 = vld [vmem:[#allocation3 + $0x91] sm:$0xff]
      %v3267 = vld [vmem:[#allocation3 + $0x99] sm:$0xff]
      %v3268 = vld [vmem:[#allocation3 + $0xa9] sm:$0xff]
      %v3269 = vld [vmem:[#allocation3 + $0xb1] sm:$0xff]
      %v3270 = vld [vmem:[#allocation3 + $0xc1] sm:$0xff]
      %v3271 = vld [vmem:[#allocation3 + $0xc9] sm:$0xff]
      %v3272 = vld [vmem:[#allocation3 + $0xd9] sm:$0xff]
      %v3273 = vld [vmem:[#allocation3 + $0xe1] sm:$0xff]
      %v3274 = vld [vmem:[#allocation3 + $0xf1] sm:$0xff]
      %v3275 = vld [vmem:[#allocation3 + $0xf9] sm:$0xff]
      %v3276 = vld [vmem:[#allocation3 + $0x109] sm:$0xff]
      %v3277 = vld [vmem:[#allocation3 + $0x111] sm:$0xff]
      %v3278 = vld [vmem:[#allocation3 + $0x121] sm:$0xff]
      %v3279 = vld [vmem:[#allocation3 + $0x129] sm:$0xff]
      %v3280 = vld [vmem:[#allocation3 + $0x139] sm:$0xff]
      %v3281 = vld [vmem:[#allocation3 + $0x141] sm:$0xff]
      %v3282 = vld [vmem:[#allocation3 + $0x151] sm:$0xff]
      %v3283 = vld [vmem:[#allocation3 + $0x159] sm:$0xff]
      %v3284 = vld [vmem:[#allocation3 + $0x169] sm:$0xff]
      %v3285 = vld [vmem:[#allocation3 + $0x171] sm:$0xff]
      %s3286 = scalar_lea.vmem %s347, 8
      %v3287 = vld [vmem:[%s3286] sm:$0xff]
      %vm3288 = vcmask 64512
      %v3290 = vsel %vm3288, %v3254, 0
      %v3293 = vsel %vm3288, %v3255, 0
      %v3296 = vsel %vm3288, %v3256, 0
      %v3299 = vsel %vm3288, %v3257, 0
      %v3302 = vsel %vm3288, %v3258, 0
      %v3305 = vsel %vm3288, %v3259, 0
      %v3308 = vsel %vm3288, %v3260, 0
      %v3311 = vsel %vm3288, %v3261, 0
      %v3314 = vsel %vm3288, %v3262, 0
      %v3317 = vsel %vm3288, %v3263, 0
      %v3320 = vsel %vm3288, %v3264, 0
      %v3323 = vsel %vm3288, %v3265, 0
      %v3326 = vsel %vm3288, %v3266, 0
      %v3329 = vsel %vm3288, %v3267, 0
      %v3332 = vsel %vm3288, %v3268, 0
      %v3335 = vsel %vm3288, %v3269, 0
      %v3338 = vsel %vm3288, %v3270, 0
      %v3341 = vsel %vm3288, %v3271, 0
      %v3344 = vsel %vm3288, %v3272, 0
      %v3347 = vsel %vm3288, %v3273, 0
      %v3350 = vsel %vm3288, %v3274, 0
      %v3353 = vsel %vm3288, %v3275, 0
      %v3356 = vsel %vm3288, %v3276, 0
      %v3359 = vsel %vm3288, %v3277, 0
      %v3362 = vsel %vm3288, %v3278, 0
      %v3365 = vsel %vm3288, %v3279, 0
      %v3368 = vsel %vm3288, %v3280, 0
      %v3371 = vsel %vm3288, %v3281, 0
      %v3374 = vsel %vm3288, %v3282, 0
      %v3377 = vsel %vm3288, %v3283, 0
      %v3380 = vsel %vm3288, %v3284, 0
      %v3383 = vsel %vm3288, %v3285, 0
      %3385 = vmatpush.msra.mxu0 0.0
      %3386 = vmatpush.msra.mxu0 0.0
      %3387 = vmatpush.msra.mxu0 0.0
      %3388 = vmatpush.msra.mxu0 0.0
      %3389 = vmatpush.msra.mxu0 0.0
      %3390 = vmatpush.msra.mxu0 0.0
      %3391 = vmatpush.msra.mxu0 0.0
      %3392 = vmatpush.msra.mxu0 0.0
      %3393 = vmatpush.msra.mxu0 0.0
      %3394 = vmatpush.msra.mxu0 0.0
      %3395 = vmatpush.msra.mxu0 0.0
      %3396 = vmatpush.msra.mxu0 0.0
      %3397 = vmatpush.msra.mxu0 0.0
      %3398 = vmatpush.msra.mxu0 0.0
      %3399 = vmatpush.msra.mxu0 0.0
      %3400 = vmatpush.msra.mxu0 %v3287
      %3401 = vmatmul.f32.gmra.mxu0 %v3290
      %v3402 = vpop.f32.mrf.mxu0
      %v3403 = vadd.f32 0.0, %v3402
      %3404 = vmatmul.f32.gmra.mxu0 %v3293
      %v3405 = vpop.f32.mrf.mxu0
      %v3406 = vadd.f32 0.0, %v3405
      %3407 = vmatmul.f32.gmra.mxu0 %v3296
      %v3408 = vpop.f32.mrf.mxu0
      %v3409 = vadd.f32 0.0, %v3408
      %3410 = vmatmul.f32.gmra.mxu0 %v3299
      %v3411 = vpop.f32.mrf.mxu0
      %v3412 = vadd.f32 0.0, %v3411
      %3413 = vmatmul.f32.gmra.mxu0 %v3302
      %v3414 = vpop.f32.mrf.mxu0
      %v3415 = vadd.f32 0.0, %v3414
      %3416 = vmatmul.f32.gmra.mxu0 %v3305
      %v3417 = vpop.f32.mrf.mxu0
      %v3418 = vadd.f32 0.0, %v3417
      %3419 = vmatmul.f32.gmra.mxu0 %v3308
      %v3420 = vpop.f32.mrf.mxu0
      %v3421 = vadd.f32 0.0, %v3420
      %3422 = vmatmul.f32.gmra.mxu0 %v3311
      %v3423 = vpop.f32.mrf.mxu0
      %v3424 = vadd.f32 0.0, %v3423
      %3425 = vmatmul.f32.gmra.mxu0 %v3314
      %v3426 = vpop.f32.mrf.mxu0
      %v3427 = vadd.f32 0.0, %v3426
      %3428 = vmatmul.f32.gmra.mxu0 %v3317
      %v3429 = vpop.f32.mrf.mxu0
      %v3430 = vadd.f32 0.0, %v3429
      %3431 = vmatmul.f32.gmra.mxu0 %v3320
      %v3432 = vpop.f32.mrf.mxu0
      %v3433 = vadd.f32 0.0, %v3432
      %3434 = vmatmul.f32.gmra.mxu0 %v3323
      %v3435 = vpop.f32.mrf.mxu0
      %v3436 = vadd.f32 0.0, %v3435
      %3437 = vmatmul.f32.gmra.mxu0 %v3326
      %v3438 = vpop.f32.mrf.mxu0
      %v3439 = vadd.f32 0.0, %v3438
      %3440 = vmatmul.f32.gmra.mxu0 %v3329
      %v3441 = vpop.f32.mrf.mxu0
      %v3442 = vadd.f32 0.0, %v3441
      %3443 = vmatmul.f32.gmra.mxu0 %v3332
      %v3444 = vpop.f32.mrf.mxu0
      %v3445 = vadd.f32 0.0, %v3444
      %3446 = vmatmul.f32.gmra.mxu0 %v3335
      %v3447 = vpop.f32.mrf.mxu0
      %v3448 = vadd.f32 0.0, %v3447
      %3449 = vmatmul.f32.gmra.mxu0 %v3338
      %v3450 = vpop.f32.mrf.mxu0
      %v3451 = vadd.f32 0.0, %v3450
      %3452 = vmatmul.f32.gmra.mxu0 %v3341
      %v3453 = vpop.f32.mrf.mxu0
      %v3454 = vadd.f32 0.0, %v3453
      %3455 = vmatmul.f32.gmra.mxu0 %v3344
      %v3456 = vpop.f32.mrf.mxu0
      %v3457 = vadd.f32 0.0, %v3456
      %3458 = vmatmul.f32.gmra.mxu0 %v3347
      %v3459 = vpop.f32.mrf.mxu0
      %v3460 = vadd.f32 0.0, %v3459
      %3461 = vmatmul.f32.gmra.mxu0 %v3350
      %v3462 = vpop.f32.mrf.mxu0
      %v3463 = vadd.f32 0.0, %v3462
      %3464 = vmatmul.f32.gmra.mxu0 %v3353
      %v3465 = vpop.f32.mrf.mxu0
      %v3466 = vadd.f32 0.0, %v3465
      %3467 = vmatmul.f32.gmra.mxu0 %v3356
      %v3468 = vpop.f32.mrf.mxu0
      %v3469 = vadd.f32 0.0, %v3468
      %3470 = vmatmul.f32.gmra.mxu0 %v3359
      %v3471 = vpop.f32.mrf.mxu0
      %v3472 = vadd.f32 0.0, %v3471
      %3473 = vmatmul.f32.gmra.mxu0 %v3362
      %v3474 = vpop.f32.mrf.mxu0
      %v3475 = vadd.f32 0.0, %v3474
      %3476 = vmatmul.f32.gmra.mxu0 %v3365
      %v3477 = vpop.f32.mrf.mxu0
      %v3478 = vadd.f32 0.0, %v3477
      %3479 = vmatmul.f32.gmra.mxu0 %v3368
      %v3480 = vpop.f32.mrf.mxu0
      %v3481 = vadd.f32 0.0, %v3480
      %3482 = vmatmul.f32.gmra.mxu0 %v3371
      %v3483 = vpop.f32.mrf.mxu0
      %v3484 = vadd.f32 0.0, %v3483
      %3485 = vmatmul.f32.gmra.mxu0 %v3374
      %v3486 = vpop.f32.mrf.mxu0
      %v3487 = vadd.f32 0.0, %v3486
      %3488 = vmatmul.f32.gmra.mxu0 %v3377
      %v3489 = vpop.f32.mrf.mxu0
      %v3490 = vadd.f32 0.0, %v3489
      %3491 = vmatmul.f32.gmra.mxu0 %v3380
      %v3492 = vpop.f32.mrf.mxu0
      %v3493 = vadd.f32 0.0, %v3492
      %3494 = vmatmul.f32.gmra.mxu0 %v3383
      %v3495 = vpop.f32.mrf.mxu0
      %v3496 = vadd.f32 0.0, %v3495
      %3497 = vdwg.mxu0
      %v3499 = vsel %vm3288, %v3221, 0
      %v3502 = vsel %vm3288, %v3222, 0
      %v3505 = vsel %vm3288, %v3223, 0
      %v3508 = vsel %vm3288, %v3224, 0
      %v3511 = vsel %vm3288, %v3225, 0
      %v3514 = vsel %vm3288, %v3226, 0
      %v3517 = vsel %vm3288, %v3227, 0
      %v3520 = vsel %vm3288, %v3228, 0
      %v3523 = vsel %vm3288, %v3229, 0
      %v3526 = vsel %vm3288, %v3230, 0
      %v3529 = vsel %vm3288, %v3231, 0
      %v3532 = vsel %vm3288, %v3232, 0
      %v3535 = vsel %vm3288, %v3233, 0
      %v3538 = vsel %vm3288, %v3234, 0
      %v3541 = vsel %vm3288, %v3235, 0
      %v3544 = vsel %vm3288, %v3236, 0
      %v3547 = vsel %vm3288, %v3237, 0
      %v3550 = vsel %vm3288, %v3238, 0
      %v3553 = vsel %vm3288, %v3239, 0
      %v3556 = vsel %vm3288, %v3240, 0
      %v3559 = vsel %vm3288, %v3241, 0
      %v3562 = vsel %vm3288, %v3242, 0
      %v3565 = vsel %vm3288, %v3243, 0
      %v3568 = vsel %vm3288, %v3244, 0
      %v3571 = vsel %vm3288, %v3245, 0
      %v3574 = vsel %vm3288, %v3246, 0
      %v3577 = vsel %vm3288, %v3247, 0
      %v3580 = vsel %vm3288, %v3248, 0
      %v3583 = vsel %vm3288, %v3249, 0
      %v3586 = vsel %vm3288, %v3250, 0
      %v3589 = vsel %vm3288, %v3251, 0
      %v3592 = vsel %vm3288, %v3252, 0
      %3594 = vmatpush.msra.mxu0 0.0
      %3595 = vmatpush.msra.mxu0 0.0
      %3596 = vmatpush.msra.mxu0 0.0
      %3597 = vmatpush.msra.mxu0 0.0
      %3598 = vmatpush.msra.mxu0 0.0
      %3599 = vmatpush.msra.mxu0 0.0
      %3600 = vmatpush.msra.mxu0 0.0
      %3601 = vmatpush.msra.mxu0 0.0
      %3602 = vmatpush.msra.mxu0 0.0
      %3603 = vmatpush.msra.mxu0 0.0
      %3604 = vmatpush.msra.mxu0 0.0
      %3605 = vmatpush.msra.mxu0 0.0
      %3606 = vmatpush.msra.mxu0 0.0
      %3607 = vmatpush.msra.mxu0 0.0
      %3608 = vmatpush.msra.mxu0 0.0
      %3609 = vmatpush.msra.mxu0 %v3253
      %3610 = vmatmul.f32.gmra.mxu0 %v3499
      %v3611 = vpop.f32.mrf.mxu0
      %v3612 = vadd.f32 %v3403, %v3611
      %3613 = vmatmul.f32.gmra.mxu0 %v3502
      %v3614 = vpop.f32.mrf.mxu0
      %v3615 = vadd.f32 %v3406, %v3614
      %3616 = vmatmul.f32.gmra.mxu0 %v3505
      %v3617 = vpop.f32.mrf.mxu0
      %v3618 = vadd.f32 %v3409, %v3617
      %3619 = vmatmul.f32.gmra.mxu0 %v3508
      %v3620 = vpop.f32.mrf.mxu0
      %v3621 = vadd.f32 %v3412, %v3620
      %3622 = vmatmul.f32.gmra.mxu0 %v3511
      %v3623 = vpop.f32.mrf.mxu0
      %v3624 = vadd.f32 %v3415, %v3623
      %3625 = vmatmul.f32.gmra.mxu0 %v3514
      %v3626 = vpop.f32.mrf.mxu0
      %v3627 = vadd.f32 %v3418, %v3626
      %3628 = vmatmul.f32.gmra.mxu0 %v3517
      %v3629 = vpop.f32.mrf.mxu0
      %v3630 = vadd.f32 %v3421, %v3629
      %3631 = vmatmul.f32.gmra.mxu0 %v3520
      %v3632 = vpop.f32.mrf.mxu0
      %v3633 = vadd.f32 %v3424, %v3632
      %3634 = vmatmul.f32.gmra.mxu0 %v3523
      %v3635 = vpop.f32.mrf.mxu0
      %v3636 = vadd.f32 %v3427, %v3635
      %3637 = vmatmul.f32.gmra.mxu0 %v3526
      %v3638 = vpop.f32.mrf.mxu0
      %v3639 = vadd.f32 %v3430, %v3638
      %3640 = vmatmul.f32.gmra.mxu0 %v3529
      %v3641 = vpop.f32.mrf.mxu0
      %v3642 = vadd.f32 %v3433, %v3641
      %3643 = vmatmul.f32.gmra.mxu0 %v3532
      %v3644 = vpop.f32.mrf.mxu0
      %v3645 = vadd.f32 %v3436, %v3644
      %3646 = vmatmul.f32.gmra.mxu0 %v3535
      %v3647 = vpop.f32.mrf.mxu0
      %v3648 = vadd.f32 %v3439, %v3647
      %3649 = vmatmul.f32.gmra.mxu0 %v3538
      %v3650 = vpop.f32.mrf.mxu0
      %v3651 = vadd.f32 %v3442, %v3650
      %3652 = vmatmul.f32.gmra.mxu0 %v3541
      %v3653 = vpop.f32.mrf.mxu0
      %v3654 = vadd.f32 %v3445, %v3653
      %3655 = vmatmul.f32.gmra.mxu0 %v3544
      %v3656 = vpop.f32.mrf.mxu0
      %v3657 = vadd.f32 %v3448, %v3656
      %3658 = vmatmul.f32.gmra.mxu0 %v3547
      %v3659 = vpop.f32.mrf.mxu0
      %v3660 = vadd.f32 %v3451, %v3659
      %3661 = vmatmul.f32.gmra.mxu0 %v3550
      %v3662 = vpop.f32.mrf.mxu0
      %v3663 = vadd.f32 %v3454, %v3662
      %3664 = vmatmul.f32.gmra.mxu0 %v3553
      %v3665 = vpop.f32.mrf.mxu0
      %v3666 = vadd.f32 %v3457, %v3665
      %3667 = vmatmul.f32.gmra.mxu0 %v3556
      %v3668 = vpop.f32.mrf.mxu0
      %v3669 = vadd.f32 %v3460, %v3668
      %3670 = vmatmul.f32.gmra.mxu0 %v3559
      %v3671 = vpop.f32.mrf.mxu0
      %v3672 = vadd.f32 %v3463, %v3671
      %3673 = vmatmul.f32.gmra.mxu0 %v3562
      %v3674 = vpop.f32.mrf.mxu0
      %v3675 = vadd.f32 %v3466, %v3674
      %3676 = vmatmul.f32.gmra.mxu0 %v3565
      %v3677 = vpop.f32.mrf.mxu0
      %v3678 = vadd.f32 %v3469, %v3677
      %3679 = vmatmul.f32.gmra.mxu0 %v3568
      %v3680 = vpop.f32.mrf.mxu0
      %v3681 = vadd.f32 %v3472, %v3680
      %3682 = vmatmul.f32.gmra.mxu0 %v3571
      %v3683 = vpop.f32.mrf.mxu0
      %v3684 = vadd.f32 %v3475, %v3683
      %3685 = vmatmul.f32.gmra.mxu0 %v3574
      %v3686 = vpop.f32.mrf.mxu0
      %v3687 = vadd.f32 %v3478, %v3686
      %3688 = vmatmul.f32.gmra.mxu0 %v3577
      %v3689 = vpop.f32.mrf.mxu0
      %v3690 = vadd.f32 %v3481, %v3689
      %3691 = vmatmul.f32.gmra.mxu0 %v3580
      %v3692 = vpop.f32.mrf.mxu0
      %v3693 = vadd.f32 %v3484, %v3692
      %3694 = vmatmul.f32.gmra.mxu0 %v3583
      %v3695 = vpop.f32.mrf.mxu0
      %v3696 = vadd.f32 %v3487, %v3695
      %3697 = vmatmul.f32.gmra.mxu0 %v3586
      %v3698 = vpop.f32.mrf.mxu0
      %v3699 = vadd.f32 %v3490, %v3698
      %3700 = vmatmul.f32.gmra.mxu0 %v3589
      %v3701 = vpop.f32.mrf.mxu0
      %v3702 = vadd.f32 %v3493, %v3701
      %3703 = vmatmul.f32.gmra.mxu0 %v3592
      %v3704 = vpop.f32.mrf.mxu0
      %v3705 = vadd.f32 %v3496, %v3704
      %3706 = vdwg.mxu0
      %v3707 = vld [vmem:[#allocation3 + $0x2] sm:$0xff]
      %v3708 = vld [vmem:[#allocation3 + $0xa] sm:$0xff]
      %v3709 = vld [vmem:[#allocation3 + $0x1a] sm:$0xff]
      %v3710 = vld [vmem:[#allocation3 + $0x22] sm:$0xff]
      %v3711 = vld [vmem:[#allocation3 + $0x32] sm:$0xff]
      %v3712 = vld [vmem:[#allocation3 + $0x3a] sm:$0xff]
      %v3713 = vld [vmem:[#allocation3 + $0x4a] sm:$0xff]
      %v3714 = vld [vmem:[#allocation3 + $0x52] sm:$0xff]
      %v3715 = vld [vmem:[#allocation3 + $0x62] sm:$0xff]
      %v3716 = vld [vmem:[#allocation3 + $0x6a] sm:$0xff]
      %v3717 = vld [vmem:[#allocation3 + $0x7a] sm:$0xff]
      %v3718 = vld [vmem:[#allocation3 + $0x82] sm:$0xff]
      %v3719 = vld [vmem:[#allocation3 + $0x92] sm:$0xff]
      %v3720 = vld [vmem:[#allocation3 + $0x9a] sm:$0xff]
      %v3721 = vld [vmem:[#allocation3 + $0xaa] sm:$0xff]
      %v3722 = vld [vmem:[#allocation3 + $0xb2] sm:$0xff]
      %v3723 = vld [vmem:[#allocation3 + $0xc2] sm:$0xff]
      %v3724 = vld [vmem:[#allocation3 + $0xca] sm:$0xff]
      %v3725 = vld [vmem:[#allocation3 + $0xda] sm:$0xff]
      %v3726 = vld [vmem:[#allocation3 + $0xe2] sm:$0xff]
      %v3727 = vld [vmem:[#allocation3 + $0xf2] sm:$0xff]
      %v3728 = vld [vmem:[#allocation3 + $0xfa] sm:$0xff]
      %v3729 = vld [vmem:[#allocation3 + $0x10a] sm:$0xff]
      %v3730 = vld [vmem:[#allocation3 + $0x112] sm:$0xff]
      %v3731 = vld [vmem:[#allocation3 + $0x122] sm:$0xff]
      %v3732 = vld [vmem:[#allocation3 + $0x12a] sm:$0xff]
      %v3733 = vld [vmem:[#allocation3 + $0x13a] sm:$0xff]
      %v3734 = vld [vmem:[#allocation3 + $0x142] sm:$0xff]
      %v3735 = vld [vmem:[#allocation3 + $0x152] sm:$0xff]
      %v3736 = vld [vmem:[#allocation3 + $0x15a] sm:$0xff]
      %v3737 = vld [vmem:[#allocation3 + $0x16a] sm:$0xff]
      %v3738 = vld [vmem:[#allocation3 + $0x172] sm:$0xff]
      %s3739 = scalar_lea.vmem %s347, 16
      %v3740 = vld [vmem:[%s3739] sm:$0xff]
      %v3742 = vsel %vm3288, %v3707, 0
      %v3745 = vsel %vm3288, %v3708, 0
      %v3748 = vsel %vm3288, %v3709, 0
      %v3751 = vsel %vm3288, %v3710, 0
      %v3754 = vsel %vm3288, %v3711, 0
      %v3757 = vsel %vm3288, %v3712, 0
      %v3760 = vsel %vm3288, %v3713, 0
      %v3763 = vsel %vm3288, %v3714, 0
      %v3766 = vsel %vm3288, %v3715, 0
      %v3769 = vsel %vm3288, %v3716, 0
      %v3772 = vsel %vm3288, %v3717, 0
      %v3775 = vsel %vm3288, %v3718, 0
      %v3778 = vsel %vm3288, %v3719, 0
      %v3781 = vsel %vm3288, %v3720, 0
      %v3784 = vsel %vm3288, %v3721, 0
      %v3787 = vsel %vm3288, %v3722, 0
      %v3790 = vsel %vm3288, %v3723, 0
      %v3793 = vsel %vm3288, %v3724, 0
      %v3796 = vsel %vm3288, %v3725, 0
      %v3799 = vsel %vm3288, %v3726, 0
      %v3802 = vsel %vm3288, %v3727, 0
      %v3805 = vsel %vm3288, %v3728, 0
      %v3808 = vsel %vm3288, %v3729, 0
      %v3811 = vsel %vm3288, %v3730, 0
      %v3814 = vsel %vm3288, %v3731, 0
      %v3817 = vsel %vm3288, %v3732, 0
      %v3820 = vsel %vm3288, %v3733, 0
      %v3823 = vsel %vm3288, %v3734, 0
      %v3826 = vsel %vm3288, %v3735, 0
      %v3829 = vsel %vm3288, %v3736, 0
      %v3832 = vsel %vm3288, %v3737, 0
      %v3835 = vsel %vm3288, %v3738, 0
      %3837 = vmatpush.msra.mxu0 0.0
      %3838 = vmatpush.msra.mxu0 0.0
      %3839 = vmatpush.msra.mxu0 0.0
      %3840 = vmatpush.msra.mxu0 0.0
      %3841 = vmatpush.msra.mxu0 0.0
      %3842 = vmatpush.msra.mxu0 0.0
      %3843 = vmatpush.msra.mxu0 0.0
      %3844 = vmatpush.msra.mxu0 0.0
      %3845 = vmatpush.msra.mxu0 0.0
      %3846 = vmatpush.msra.mxu0 0.0
      %3847 = vmatpush.msra.mxu0 0.0
      %3848 = vmatpush.msra.mxu0 0.0
      %3849 = vmatpush.msra.mxu0 0.0
      %3850 = vmatpush.msra.mxu0 0.0
      %3851 = vmatpush.msra.mxu0 0.0
      %3852 = vmatpush.msra.mxu0 %v3740
      %3853 = vmatmul.f32.gmra.mxu0 %v3742
      %v3854 = vpop.f32.mrf.mxu0
      %v3855 = vadd.f32 0.0, %v3854
      %3856 = vmatmul.f32.gmra.mxu0 %v3745
      %v3857 = vpop.f32.mrf.mxu0
      %v3858 = vadd.f32 0.0, %v3857
      %3859 = vmatmul.f32.gmra.mxu0 %v3748
      %v3860 = vpop.f32.mrf.mxu0
      %v3861 = vadd.f32 0.0, %v3860
      %3862 = vmatmul.f32.gmra.mxu0 %v3751
      %v3863 = vpop.f32.mrf.mxu0
      %v3864 = vadd.f32 0.0, %v3863
      %3865 = vmatmul.f32.gmra.mxu0 %v3754
      %v3866 = vpop.f32.mrf.mxu0
      %v3867 = vadd.f32 0.0, %v3866
      %3868 = vmatmul.f32.gmra.mxu0 %v3757
      %v3869 = vpop.f32.mrf.mxu0
      %v3870 = vadd.f32 0.0, %v3869
      %3871 = vmatmul.f32.gmra.mxu0 %v3760
      %v3872 = vpop.f32.mrf.mxu0
      %v3873 = vadd.f32 0.0, %v3872
      %3874 = vmatmul.f32.gmra.mxu0 %v3763
      %v3875 = vpop.f32.mrf.mxu0
      %v3876 = vadd.f32 0.0, %v3875
      %3877 = vmatmul.f32.gmra.mxu0 %v3766
      %v3878 = vpop.f32.mrf.mxu0
      %v3879 = vadd.f32 0.0, %v3878
      %3880 = vmatmul.f32.gmra.mxu0 %v3769
      %v3881 = vpop.f32.mrf.mxu0
      %v3882 = vadd.f32 0.0, %v3881
      %3883 = vmatmul.f32.gmra.mxu0 %v3772
      %v3884 = vpop.f32.mrf.mxu0
      %v3885 = vadd.f32 0.0, %v3884
      %3886 = vmatmul.f32.gmra.mxu0 %v3775
      %v3887 = vpop.f32.mrf.mxu0
      %v3888 = vadd.f32 0.0, %v3887
      %3889 = vmatmul.f32.gmra.mxu0 %v3778
      %v3890 = vpop.f32.mrf.mxu0
      %v3891 = vadd.f32 0.0, %v3890
      %3892 = vmatmul.f32.gmra.mxu0 %v3781
      %v3893 = vpop.f32.mrf.mxu0
      %v3894 = vadd.f32 0.0, %v3893
      %3895 = vmatmul.f32.gmra.mxu0 %v3784
      %v3896 = vpop.f32.mrf.mxu0
      %v3897 = vadd.f32 0.0, %v3896
      %3898 = vmatmul.f32.gmra.mxu0 %v3787
      %v3899 = vpop.f32.mrf.mxu0
      %v3900 = vadd.f32 0.0, %v3899
      %3901 = vmatmul.f32.gmra.mxu0 %v3790
      %v3902 = vpop.f32.mrf.mxu0
      %v3903 = vadd.f32 0.0, %v3902
      %3904 = vmatmul.f32.gmra.mxu0 %v3793
      %v3905 = vpop.f32.mrf.mxu0
      %v3906 = vadd.f32 0.0, %v3905
      %3907 = vmatmul.f32.gmra.mxu0 %v3796
      %v3908 = vpop.f32.mrf.mxu0
      %v3909 = vadd.f32 0.0, %v3908
      %3910 = vmatmul.f32.gmra.mxu0 %v3799
      %v3911 = vpop.f32.mrf.mxu0
      %v3912 = vadd.f32 0.0, %v3911
      %3913 = vmatmul.f32.gmra.mxu0 %v3802
      %v3914 = vpop.f32.mrf.mxu0
      %v3915 = vadd.f32 0.0, %v3914
      %3916 = vmatmul.f32.gmra.mxu0 %v3805
      %v3917 = vpop.f32.mrf.mxu0
      %v3918 = vadd.f32 0.0, %v3917
      %3919 = vmatmul.f32.gmra.mxu0 %v3808
      %v3920 = vpop.f32.mrf.mxu0
      %v3921 = vadd.f32 0.0, %v3920
      %3922 = vmatmul.f32.gmra.mxu0 %v3811
      %v3923 = vpop.f32.mrf.mxu0
      %v3924 = vadd.f32 0.0, %v3923
      %3925 = vmatmul.f32.gmra.mxu0 %v3814
      %v3926 = vpop.f32.mrf.mxu0
      %v3927 = vadd.f32 0.0, %v3926
      %3928 = vmatmul.f32.gmra.mxu0 %v3817
      %v3929 = vpop.f32.mrf.mxu0
      %v3930 = vadd.f32 0.0, %v3929
      %3931 = vmatmul.f32.gmra.mxu0 %v3820
      %v3932 = vpop.f32.mrf.mxu0
      %v3933 = vadd.f32 0.0, %v3932
      %3934 = vmatmul.f32.gmra.mxu0 %v3823
      %v3935 = vpop.f32.mrf.mxu0
      %v3936 = vadd.f32 0.0, %v3935
      %3937 = vmatmul.f32.gmra.mxu0 %v3826
      %v3938 = vpop.f32.mrf.mxu0
      %v3939 = vadd.f32 0.0, %v3938
      %3940 = vmatmul.f32.gmra.mxu0 %v3829
      %v3941 = vpop.f32.mrf.mxu0
      %v3942 = vadd.f32 0.0, %v3941
      %3943 = vmatmul.f32.gmra.mxu0 %v3832
      %v3944 = vpop.f32.mrf.mxu0
      %v3945 = vadd.f32 0.0, %v3944
      %3946 = vmatmul.f32.gmra.mxu0 %v3835
      %v3947 = vpop.f32.mrf.mxu0
      %v3948 = vadd.f32 0.0, %v3947
      %3949 = vdwg.mxu0
      %v3950 = vadd.f32 %v3612, %v3855
      %v3951 = vadd.f32 %v3615, %v3858
      %v3952 = vadd.f32 %v3618, %v3861
      %v3953 = vadd.f32 %v3621, %v3864
      %v3954 = vadd.f32 %v3624, %v3867
      %v3955 = vadd.f32 %v3627, %v3870
      %v3956 = vadd.f32 %v3630, %v3873
      %v3957 = vadd.f32 %v3633, %v3876
      %v3958 = vadd.f32 %v3636, %v3879
      %v3959 = vadd.f32 %v3639, %v3882
      %v3960 = vadd.f32 %v3642, %v3885
      %v3961 = vadd.f32 %v3645, %v3888
      %v3962 = vadd.f32 %v3648, %v3891
      %v3963 = vadd.f32 %v3651, %v3894
      %v3964 = vadd.f32 %v3654, %v3897
      %v3965 = vadd.f32 %v3657, %v3900
      %v3966 = vadd.f32 %v3660, %v3903
      %v3967 = vadd.f32 %v3663, %v3906
      %v3968 = vadd.f32 %v3666, %v3909
      %v3969 = vadd.f32 %v3669, %v3912
      %v3970 = vadd.f32 %v3672, %v3915
      %v3971 = vadd.f32 %v3675, %v3918
      %v3972 = vadd.f32 %v3678, %v3921
      %v3973 = vadd.f32 %v3681, %v3924
      %v3974 = vadd.f32 %v3684, %v3927
      %v3975 = vadd.f32 %v3687, %v3930
      %v3976 = vadd.f32 %v3690, %v3933
      %v3977 = vadd.f32 %v3693, %v3936
      %v3978 = vadd.f32 %v3696, %v3939
      %v3979 = vadd.f32 %v3699, %v3942
      %v3980 = vadd.f32 %v3702, %v3945
      %v3981 = vadd.f32 %v3705, %v3948
      %s3982 = scalar_lea.vmem [#allocation3], 24
      %v3983 = vld [vmem:[%s3982] sm:$0xff]
      %v3984 = vld [vmem:[%s3982 + $0x8] sm:$0xff]
      %v3985 = vld [vmem:[%s3982 + $0x18] sm:$0xff]
      %v3986 = vld [vmem:[%s3982 + $0x20] sm:$0xff]
      %v3987 = vld [vmem:[%s3982 + $0x30] sm:$0xff]
      %v3988 = vld [vmem:[%s3982 + $0x38] sm:$0xff]
      %v3989 = vld [vmem:[%s3982 + $0x48] sm:$0xff]
      %v3990 = vld [vmem:[%s3982 + $0x50] sm:$0xff]
      %v3991 = vld [vmem:[%s3982 + $0x60] sm:$0xff]
      %v3992 = vld [vmem:[%s3982 + $0x68] sm:$0xff]
      %v3993 = vld [vmem:[%s3982 + $0x78] sm:$0xff]
      %v3994 = vld [vmem:[%s3982 + $0x80] sm:$0xff]
      %v3995 = vld [vmem:[%s3982 + $0x90] sm:$0xff]
      %v3996 = vld [vmem:[%s3982 + $0x98] sm:$0xff]
      %v3997 = vld [vmem:[%s3982 + $0xa8] sm:$0xff]
      %v3998 = vld [vmem:[%s3982 + $0xb0] sm:$0xff]
      %v3999 = vld [vmem:[%s3982 + $0xc0] sm:$0xff]
      %v4000 = vld [vmem:[%s3982 + $0xc8] sm:$0xff]
      %v4001 = vld [vmem:[%s3982 + $0xd8] sm:$0xff]
      %v4002 = vld [vmem:[%s3982 + $0xe0] sm:$0xff]
      %v4003 = vld [vmem:[%s3982 + $0xf0] sm:$0xff]
      %v4004 = vld [vmem:[%s3982 + $0xf8] sm:$0xff]
      %v4005 = vld [vmem:[%s3982 + $0x108] sm:$0xff]
      %v4006 = vld [vmem:[%s3982 + $0x110] sm:$0xff]
      %v4007 = vld [vmem:[%s3982 + $0x120] sm:$0xff]
      %v4008 = vld [vmem:[%s3982 + $0x128] sm:$0xff]
      %v4009 = vld [vmem:[%s3982 + $0x138] sm:$0xff]
      %v4010 = vld [vmem:[%s3982 + $0x140] sm:$0xff]
      %v4011 = vld [vmem:[%s3982 + $0x150] sm:$0xff]
      %v4012 = vld [vmem:[%s3982 + $0x158] sm:$0xff]
      %v4013 = vld [vmem:[%s3982 + $0x168] sm:$0xff]
      %v4014 = vld [vmem:[%s3982 + $0x170] sm:$0xff]
      %s4015 = scalar_lea.vmem %s347, 24
      %v4016 = vld [vmem:[%s4015] sm:$0xff]
      %v4018 = vsel %vm3288, %v3983, 0
      %v4021 = vsel %vm3288, %v3984, 0
      %v4024 = vsel %vm3288, %v3985, 0
      %v4027 = vsel %vm3288, %v3986, 0
      %v4030 = vsel %vm3288, %v3987, 0
      %v4033 = vsel %vm3288, %v3988, 0
      %v4036 = vsel %vm3288, %v3989, 0
      %v4039 = vsel %vm3288, %v3990, 0
      %v4042 = vsel %vm3288, %v3991, 0
      %v4045 = vsel %vm3288, %v3992, 0
      %v4048 = vsel %vm3288, %v3993, 0
      %v4051 = vsel %vm3288, %v3994, 0
      %v4054 = vsel %vm3288, %v3995, 0
      %v4057 = vsel %vm3288, %v3996, 0
      %v4060 = vsel %vm3288, %v3997, 0
      %v4063 = vsel %vm3288, %v3998, 0
      %v4066 = vsel %vm3288, %v3999, 0
      %v4069 = vsel %vm3288, %v4000, 0
      %v4072 = vsel %vm3288, %v4001, 0
      %v4075 = vsel %vm3288, %v4002, 0
      %v4078 = vsel %vm3288, %v4003, 0
      %v4081 = vsel %vm3288, %v4004, 0
      %v4084 = vsel %vm3288, %v4005, 0
      %v4087 = vsel %vm3288, %v4006, 0
      %v4090 = vsel %vm3288, %v4007, 0
      %v4093 = vsel %vm3288, %v4008, 0
      %v4096 = vsel %vm3288, %v4009, 0
      %v4099 = vsel %vm3288, %v4010, 0
      %v4102 = vsel %vm3288, %v4011, 0
      %v4105 = vsel %vm3288, %v4012, 0
      %v4108 = vsel %vm3288, %v4013, 0
      %v4111 = vsel %vm3288, %v4014, 0
      %4113 = vmatpush.msra.mxu0 0.0
      %4114 = vmatpush.msra.mxu0 0.0
      %4115 = vmatpush.msra.mxu0 0.0
      %4116 = vmatpush.msra.mxu0 0.0
      %4117 = vmatpush.msra.mxu0 0.0
      %4118 = vmatpush.msra.mxu0 0.0
      %4119 = vmatpush.msra.mxu0 0.0
      %4120 = vmatpush.msra.mxu0 0.0
      %4121 = vmatpush.msra.mxu0 0.0
      %4122 = vmatpush.msra.mxu0 0.0
      %4123 = vmatpush.msra.mxu0 0.0
      %4124 = vmatpush.msra.mxu0 0.0
      %4125 = vmatpush.msra.mxu0 0.0
      %4126 = vmatpush.msra.mxu0 0.0
      %4127 = vmatpush.msra.mxu0 0.0
      %4128 = vmatpush.msra.mxu0 %v4016
      %4129 = vmatmul.f32.gmra.mxu0 %v4018
      %v4130 = vpop.f32.mrf.mxu0
      %v4131 = vadd.f32 0.0, %v4130
      %4132 = vmatmul.f32.gmra.mxu0 %v4021
      %v4133 = vpop.f32.mrf.mxu0
      %v4134 = vadd.f32 0.0, %v4133
      %4135 = vmatmul.f32.gmra.mxu0 %v4024
      %v4136 = vpop.f32.mrf.mxu0
      %v4137 = vadd.f32 0.0, %v4136
      %4138 = vmatmul.f32.gmra.mxu0 %v4027
      %v4139 = vpop.f32.mrf.mxu0
      %v4140 = vadd.f32 0.0, %v4139
      %4141 = vmatmul.f32.gmra.mxu0 %v4030
      %v4142 = vpop.f32.mrf.mxu0
      %v4143 = vadd.f32 0.0, %v4142
      %4144 = vmatmul.f32.gmra.mxu0 %v4033
      %v4145 = vpop.f32.mrf.mxu0
      %v4146 = vadd.f32 0.0, %v4145
      %4147 = vmatmul.f32.gmra.mxu0 %v4036
      %v4148 = vpop.f32.mrf.mxu0
      %v4149 = vadd.f32 0.0, %v4148
      %4150 = vmatmul.f32.gmra.mxu0 %v4039
      %v4151 = vpop.f32.mrf.mxu0
      %v4152 = vadd.f32 0.0, %v4151
      %4153 = vmatmul.f32.gmra.mxu0 %v4042
      %v4154 = vpop.f32.mrf.mxu0
      %v4155 = vadd.f32 0.0, %v4154
      %4156 = vmatmul.f32.gmra.mxu0 %v4045
      %v4157 = vpop.f32.mrf.mxu0
      %v4158 = vadd.f32 0.0, %v4157
      %4159 = vmatmul.f32.gmra.mxu0 %v4048
      %v4160 = vpop.f32.mrf.mxu0
      %v4161 = vadd.f32 0.0, %v4160
      %4162 = vmatmul.f32.gmra.mxu0 %v4051
      %v4163 = vpop.f32.mrf.mxu0
      %v4164 = vadd.f32 0.0, %v4163
      %4165 = vmatmul.f32.gmra.mxu0 %v4054
      %v4166 = vpop.f32.mrf.mxu0
      %v4167 = vadd.f32 0.0, %v4166
      %4168 = vmatmul.f32.gmra.mxu0 %v4057
      %v4169 = vpop.f32.mrf.mxu0
      %v4170 = vadd.f32 0.0, %v4169
      %4171 = vmatmul.f32.gmra.mxu0 %v4060
      %v4172 = vpop.f32.mrf.mxu0
      %v4173 = vadd.f32 0.0, %v4172
      %4174 = vmatmul.f32.gmra.mxu0 %v4063
      %v4175 = vpop.f32.mrf.mxu0
      %v4176 = vadd.f32 0.0, %v4175
      %4177 = vmatmul.f32.gmra.mxu0 %v4066
      %v4178 = vpop.f32.mrf.mxu0
      %v4179 = vadd.f32 0.0, %v4178
      %4180 = vmatmul.f32.gmra.mxu0 %v4069
      %v4181 = vpop.f32.mrf.mxu0
      %v4182 = vadd.f32 0.0, %v4181
      %4183 = vmatmul.f32.gmra.mxu0 %v4072
      %v4184 = vpop.f32.mrf.mxu0
      %v4185 = vadd.f32 0.0, %v4184
      %4186 = vmatmul.f32.gmra.mxu0 %v4075
      %v4187 = vpop.f32.mrf.mxu0
      %v4188 = vadd.f32 0.0, %v4187
      %4189 = vmatmul.f32.gmra.mxu0 %v4078
      %v4190 = vpop.f32.mrf.mxu0
      %v4191 = vadd.f32 0.0, %v4190
      %4192 = vmatmul.f32.gmra.mxu0 %v4081
      %v4193 = vpop.f32.mrf.mxu0
      %v4194 = vadd.f32 0.0, %v4193
      %4195 = vmatmul.f32.gmra.mxu0 %v4084
      %v4196 = vpop.f32.mrf.mxu0
      %v4197 = vadd.f32 0.0, %v4196
      %4198 = vmatmul.f32.gmra.mxu0 %v4087
      %v4199 = vpop.f32.mrf.mxu0
      %v4200 = vadd.f32 0.0, %v4199
      %4201 = vmatmul.f32.gmra.mxu0 %v4090
      %v4202 = vpop.f32.mrf.mxu0
      %v4203 = vadd.f32 0.0, %v4202
      %4204 = vmatmul.f32.gmra.mxu0 %v4093
      %v4205 = vpop.f32.mrf.mxu0
      %v4206 = vadd.f32 0.0, %v4205
      %4207 = vmatmul.f32.gmra.mxu0 %v4096
      %v4208 = vpop.f32.mrf.mxu0
      %v4209 = vadd.f32 0.0, %v4208
      %4210 = vmatmul.f32.gmra.mxu0 %v4099
      %v4211 = vpop.f32.mrf.mxu0
      %v4212 = vadd.f32 0.0, %v4211
      %4213 = vmatmul.f32.gmra.mxu0 %v4102
      %v4214 = vpop.f32.mrf.mxu0
      %v4215 = vadd.f32 0.0, %v4214
      %4216 = vmatmul.f32.gmra.mxu0 %v4105
      %v4217 = vpop.f32.mrf.mxu0
      %v4218 = vadd.f32 0.0, %v4217
      %4219 = vmatmul.f32.gmra.mxu0 %v4108
      %v4220 = vpop.f32.mrf.mxu0
      %v4221 = vadd.f32 0.0, %v4220
      %4222 = vmatmul.f32.gmra.mxu0 %v4111
      %v4223 = vpop.f32.mrf.mxu0
      %v4224 = vadd.f32 0.0, %v4223
      %4225 = vdwg.mxu0
      %v4226 = vadd.f32 %v3950, %v4131
      %v4227 = vadd.f32 %v3951, %v4134
      %v4228 = vadd.f32 %v3952, %v4137
      %v4229 = vadd.f32 %v3953, %v4140
      %v4230 = vadd.f32 %v3954, %v4143
      %v4231 = vadd.f32 %v3955, %v4146
      %v4232 = vadd.f32 %v3956, %v4149
      %v4233 = vadd.f32 %v3957, %v4152
      %v4234 = vadd.f32 %v3958, %v4155
      %v4235 = vadd.f32 %v3959, %v4158
      %v4236 = vadd.f32 %v3960, %v4161
      %v4237 = vadd.f32 %v3961, %v4164
      %v4238 = vadd.f32 %v3962, %v4167
      %v4239 = vadd.f32 %v3963, %v4170
      %v4240 = vadd.f32 %v3964, %v4173
      %v4241 = vadd.f32 %v3965, %v4176
      %v4242 = vadd.f32 %v3966, %v4179
      %v4243 = vadd.f32 %v3967, %v4182
      %v4244 = vadd.f32 %v3968, %v4185
      %v4245 = vadd.f32 %v3969, %v4188
      %v4246 = vadd.f32 %v3970, %v4191
      %v4247 = vadd.f32 %v3971, %v4194
      %v4248 = vadd.f32 %v3972, %v4197
      %v4249 = vadd.f32 %v3973, %v4200
      %v4250 = vadd.f32 %v3974, %v4203
      %v4251 = vadd.f32 %v3975, %v4206
      %v4252 = vadd.f32 %v3976, %v4209
      %v4253 = vadd.f32 %v3977, %v4212
      %v4254 = vadd.f32 %v3978, %v4215
      %v4255 = vadd.f32 %v3979, %v4218
      %v4256 = vadd.f32 %v3980, %v4221
      %v4257 = vadd.f32 %v3981, %v4224
      %v4258 = vld [vmem:[%s3982 + $0x1] sm:$0xff]
      %v4259 = vld [vmem:[%s3982 + $0x9] sm:$0xff]
      %v4260 = vld [vmem:[%s3982 + $0x19] sm:$0xff]
      %v4261 = vld [vmem:[%s3982 + $0x21] sm:$0xff]
      %v4262 = vld [vmem:[%s3982 + $0x31] sm:$0xff]
      %v4263 = vld [vmem:[%s3982 + $0x39] sm:$0xff]
      %v4264 = vld [vmem:[%s3982 + $0x49] sm:$0xff]
      %v4265 = vld [vmem:[%s3982 + $0x51] sm:$0xff]
      %v4266 = vld [vmem:[%s3982 + $0x61] sm:$0xff]
      %v4267 = vld [vmem:[%s3982 + $0x69] sm:$0xff]
      %v4268 = vld [vmem:[%s3982 + $0x79] sm:$0xff]
      %v4269 = vld [vmem:[%s3982 + $0x81] sm:$0xff]
      %v4270 = vld [vmem:[%s3982 + $0x91] sm:$0xff]
      %v4271 = vld [vmem:[%s3982 + $0x99] sm:$0xff]
      %v4272 = vld [vmem:[%s3982 + $0xa9] sm:$0xff]
      %v4273 = vld [vmem:[%s3982 + $0xb1] sm:$0xff]
      %v4274 = vld [vmem:[%s3982 + $0xc1] sm:$0xff]
      %v4275 = vld [vmem:[%s3982 + $0xc9] sm:$0xff]
      %v4276 = vld [vmem:[%s3982 + $0xd9] sm:$0xff]
      %v4277 = vld [vmem:[%s3982 + $0xe1] sm:$0xff]
      %v4278 = vld [vmem:[%s3982 + $0xf1] sm:$0xff]
      %v4279 = vld [vmem:[%s3982 + $0xf9] sm:$0xff]
      %v4280 = vld [vmem:[%s3982 + $0x109] sm:$0xff]
      %v4281 = vld [vmem:[%s3982 + $0x111] sm:$0xff]
      %v4282 = vld [vmem:[%s3982 + $0x121] sm:$0xff]
      %v4283 = vld [vmem:[%s3982 + $0x129] sm:$0xff]
      %v4284 = vld [vmem:[%s3982 + $0x139] sm:$0xff]
      %v4285 = vld [vmem:[%s3982 + $0x141] sm:$0xff]
      %v4286 = vld [vmem:[%s3982 + $0x151] sm:$0xff]
      %v4287 = vld [vmem:[%s3982 + $0x159] sm:$0xff]
      %v4288 = vld [vmem:[%s3982 + $0x169] sm:$0xff]
      %v4289 = vld [vmem:[%s3982 + $0x171] sm:$0xff]
      %s4290 = scalar_lea.vmem %s347, 32
      %v4291 = vld [vmem:[%s4290] sm:$0xff]
      %v4293 = vsel %vm3288, %v4258, 0
      %v4296 = vsel %vm3288, %v4259, 0
      %v4299 = vsel %vm3288, %v4260, 0
      %v4302 = vsel %vm3288, %v4261, 0
      %v4305 = vsel %vm3288, %v4262, 0
      %v4308 = vsel %vm3288, %v4263, 0
      %v4311 = vsel %vm3288, %v4264, 0
      %v4314 = vsel %vm3288, %v4265, 0
      %v4317 = vsel %vm3288, %v4266, 0
      %v4320 = vsel %vm3288, %v4267, 0
      %v4323 = vsel %vm3288, %v4268, 0
      %v4326 = vsel %vm3288, %v4269, 0
      %v4329 = vsel %vm3288, %v4270, 0
      %v4332 = vsel %vm3288, %v4271, 0
      %v4335 = vsel %vm3288, %v4272, 0
      %v4338 = vsel %vm3288, %v4273, 0
      %v4341 = vsel %vm3288, %v4274, 0
      %v4344 = vsel %vm3288, %v4275, 0
      %v4347 = vsel %vm3288, %v4276, 0
      %v4350 = vsel %vm3288, %v4277, 0
      %v4353 = vsel %vm3288, %v4278, 0
      %v4356 = vsel %vm3288, %v4279, 0
      %v4359 = vsel %vm3288, %v4280, 0
      %v4362 = vsel %vm3288, %v4281, 0
      %v4365 = vsel %vm3288, %v4282, 0
      %v4368 = vsel %vm3288, %v4283, 0
      %v4371 = vsel %vm3288, %v4284, 0
      %v4374 = vsel %vm3288, %v4285, 0
      %v4377 = vsel %vm3288, %v4286, 0
      %v4380 = vsel %vm3288, %v4287, 0
      %v4383 = vsel %vm3288, %v4288, 0
      %v4386 = vsel %vm3288, %v4289, 0
      %4388 = vmatpush.msra.mxu0 0.0
      %4389 = vmatpush.msra.mxu0 0.0
      %4390 = vmatpush.msra.mxu0 0.0
      %4391 = vmatpush.msra.mxu0 0.0
      %4392 = vmatpush.msra.mxu0 0.0
      %4393 = vmatpush.msra.mxu0 0.0
      %4394 = vmatpush.msra.mxu0 0.0
      %4395 = vmatpush.msra.mxu0 0.0
      %4396 = vmatpush.msra.mxu0 0.0
      %4397 = vmatpush.msra.mxu0 0.0
      %4398 = vmatpush.msra.mxu0 0.0
      %4399 = vmatpush.msra.mxu0 0.0
      %4400 = vmatpush.msra.mxu0 0.0
      %4401 = vmatpush.msra.mxu0 0.0
      %4402 = vmatpush.msra.mxu0 0.0
      %4403 = vmatpush.msra.mxu0 %v4291
      %4404 = vmatmul.f32.gmra.mxu0 %v4293
      %v4405 = vpop.f32.mrf.mxu0
      %v4406 = vadd.f32 0.0, %v4405
      %4407 = vmatmul.f32.gmra.mxu0 %v4296
      %v4408 = vpop.f32.mrf.mxu0
      %v4409 = vadd.f32 0.0, %v4408
      %4410 = vmatmul.f32.gmra.mxu0 %v4299
      %v4411 = vpop.f32.mrf.mxu0
      %v4412 = vadd.f32 0.0, %v4411
      %4413 = vmatmul.f32.gmra.mxu0 %v4302
      %v4414 = vpop.f32.mrf.mxu0
      %v4415 = vadd.f32 0.0, %v4414
      %4416 = vmatmul.f32.gmra.mxu0 %v4305
      %v4417 = vpop.f32.mrf.mxu0
      %v4418 = vadd.f32 0.0, %v4417
      %4419 = vmatmul.f32.gmra.mxu0 %v4308
      %v4420 = vpop.f32.mrf.mxu0
      %v4421 = vadd.f32 0.0, %v4420
      %4422 = vmatmul.f32.gmra.mxu0 %v4311
      %v4423 = vpop.f32.mrf.mxu0
      %v4424 = vadd.f32 0.0, %v4423
      %4425 = vmatmul.f32.gmra.mxu0 %v4314
      %v4426 = vpop.f32.mrf.mxu0
      %v4427 = vadd.f32 0.0, %v4426
      %4428 = vmatmul.f32.gmra.mxu0 %v4317
      %v4429 = vpop.f32.mrf.mxu0
      %v4430 = vadd.f32 0.0, %v4429
      %4431 = vmatmul.f32.gmra.mxu0 %v4320
      %v4432 = vpop.f32.mrf.mxu0
      %v4433 = vadd.f32 0.0, %v4432
      %4434 = vmatmul.f32.gmra.mxu0 %v4323
      %v4435 = vpop.f32.mrf.mxu0
      %v4436 = vadd.f32 0.0, %v4435
      %4437 = vmatmul.f32.gmra.mxu0 %v4326
      %v4438 = vpop.f32.mrf.mxu0
      %v4439 = vadd.f32 0.0, %v4438
      %4440 = vmatmul.f32.gmra.mxu0 %v4329
      %v4441 = vpop.f32.mrf.mxu0
      %v4442 = vadd.f32 0.0, %v4441
      %4443 = vmatmul.f32.gmra.mxu0 %v4332
      %v4444 = vpop.f32.mrf.mxu0
      %v4445 = vadd.f32 0.0, %v4444
      %4446 = vmatmul.f32.gmra.mxu0 %v4335
      %v4447 = vpop.f32.mrf.mxu0
      %v4448 = vadd.f32 0.0, %v4447
      %4449 = vmatmul.f32.gmra.mxu0 %v4338
      %v4450 = vpop.f32.mrf.mxu0
      %v4451 = vadd.f32 0.0, %v4450
      %4452 = vmatmul.f32.gmra.mxu0 %v4341
      %v4453 = vpop.f32.mrf.mxu0
      %v4454 = vadd.f32 0.0, %v4453
      %4455 = vmatmul.f32.gmra.mxu0 %v4344
      %v4456 = vpop.f32.mrf.mxu0
      %v4457 = vadd.f32 0.0, %v4456
      %4458 = vmatmul.f32.gmra.mxu0 %v4347
      %v4459 = vpop.f32.mrf.mxu0
      %v4460 = vadd.f32 0.0, %v4459
      %4461 = vmatmul.f32.gmra.mxu0 %v4350
      %v4462 = vpop.f32.mrf.mxu0
      %v4463 = vadd.f32 0.0, %v4462
      %4464 = vmatmul.f32.gmra.mxu0 %v4353
      %v4465 = vpop.f32.mrf.mxu0
      %v4466 = vadd.f32 0.0, %v4465
      %4467 = vmatmul.f32.gmra.mxu0 %v4356
      %v4468 = vpop.f32.mrf.mxu0
      %v4469 = vadd.f32 0.0, %v4468
      %4470 = vmatmul.f32.gmra.mxu0 %v4359
      %v4471 = vpop.f32.mrf.mxu0
      %v4472 = vadd.f32 0.0, %v4471
      %4473 = vmatmul.f32.gmra.mxu0 %v4362
      %v4474 = vpop.f32.mrf.mxu0
      %v4475 = vadd.f32 0.0, %v4474
      %4476 = vmatmul.f32.gmra.mxu0 %v4365
      %v4477 = vpop.f32.mrf.mxu0
      %v4478 = vadd.f32 0.0, %v4477
      %4479 = vmatmul.f32.gmra.mxu0 %v4368
      %v4480 = vpop.f32.mrf.mxu0
      %v4481 = vadd.f32 0.0, %v4480
      %4482 = vmatmul.f32.gmra.mxu0 %v4371
      %v4483 = vpop.f32.mrf.mxu0
      %v4484 = vadd.f32 0.0, %v4483
      %4485 = vmatmul.f32.gmra.mxu0 %v4374
      %v4486 = vpop.f32.mrf.mxu0
      %v4487 = vadd.f32 0.0, %v4486
      %4488 = vmatmul.f32.gmra.mxu0 %v4377
      %v4489 = vpop.f32.mrf.mxu0
      %v4490 = vadd.f32 0.0, %v4489
      %4491 = vmatmul.f32.gmra.mxu0 %v4380
      %v4492 = vpop.f32.mrf.mxu0
      %v4493 = vadd.f32 0.0, %v4492
      %4494 = vmatmul.f32.gmra.mxu0 %v4383
      %v4495 = vpop.f32.mrf.mxu0
      %v4496 = vadd.f32 0.0, %v4495
      %4497 = vmatmul.f32.gmra.mxu0 %v4386
      %v4498 = vpop.f32.mrf.mxu0
      %v4499 = vadd.f32 0.0, %v4498
      %4500 = vdwg.mxu0
      %v4501 = vadd.f32 %v4226, %v4406
      %v4502 = vadd.f32 %v4227, %v4409
      %v4503 = vadd.f32 %v4228, %v4412
      %v4504 = vadd.f32 %v4229, %v4415
      %v4505 = vadd.f32 %v4230, %v4418
      %v4506 = vadd.f32 %v4231, %v4421
      %v4507 = vadd.f32 %v4232, %v4424
      %v4508 = vadd.f32 %v4233, %v4427
      %v4509 = vadd.f32 %v4234, %v4430
      %v4510 = vadd.f32 %v4235, %v4433
      %v4511 = vadd.f32 %v4236, %v4436
      %v4512 = vadd.f32 %v4237, %v4439
      %v4513 = vadd.f32 %v4238, %v4442
      %v4514 = vadd.f32 %v4239, %v4445
      %v4515 = vadd.f32 %v4240, %v4448
      %v4516 = vadd.f32 %v4241, %v4451
      %v4517 = vadd.f32 %v4242, %v4454
      %v4518 = vadd.f32 %v4243, %v4457
      %v4519 = vadd.f32 %v4244, %v4460
      %v4520 = vadd.f32 %v4245, %v4463
      %v4521 = vadd.f32 %v4246, %v4466
      %v4522 = vadd.f32 %v4247, %v4469
      %v4523 = vadd.f32 %v4248, %v4472
      %v4524 = vadd.f32 %v4249, %v4475
      %v4525 = vadd.f32 %v4250, %v4478
      %v4526 = vadd.f32 %v4251, %v4481
      %v4527 = vadd.f32 %v4252, %v4484
      %v4528 = vadd.f32 %v4253, %v4487
      %v4529 = vadd.f32 %v4254, %v4490
      %v4530 = vadd.f32 %v4255, %v4493
      %v4531 = vadd.f32 %v4256, %v4496
      %v4532 = vadd.f32 %v4257, %v4499
      %v4533 = vld [vmem:[%s3982 + $0x2] sm:$0xff]
      %v4534 = vld [vmem:[%s3982 + $0xa] sm:$0xff]
      %v4535 = vld [vmem:[%s3982 + $0x1a] sm:$0xff]
      %v4536 = vld [vmem:[%s3982 + $0x22] sm:$0xff]
      %v4537 = vld [vmem:[%s3982 + $0x32] sm:$0xff]
      %v4538 = vld [vmem:[%s3982 + $0x3a] sm:$0xff]
      %v4539 = vld [vmem:[%s3982 + $0x4a] sm:$0xff]
      %v4540 = vld [vmem:[%s3982 + $0x52] sm:$0xff]
      %v4541 = vld [vmem:[%s3982 + $0x62] sm:$0xff]
      %v4542 = vld [vmem:[%s3982 + $0x6a] sm:$0xff]
      %v4543 = vld [vmem:[%s3982 + $0x7a] sm:$0xff]
      %v4544 = vld [vmem:[%s3982 + $0x82] sm:$0xff]
      %v4545 = vld [vmem:[%s3982 + $0x92] sm:$0xff]
      %v4546 = vld [vmem:[%s3982 + $0x9a] sm:$0xff]
      %v4547 = vld [vmem:[%s3982 + $0xaa] sm:$0xff]
      %v4548 = vld [vmem:[%s3982 + $0xb2] sm:$0xff]
      %v4549 = vld [vmem:[%s3982 + $0xc2] sm:$0xff]
      %v4550 = vld [vmem:[%s3982 + $0xca] sm:$0xff]
      %v4551 = vld [vmem:[%s3982 + $0xda] sm:$0xff]
      %v4552 = vld [vmem:[%s3982 + $0xe2] sm:$0xff]
      %v4553 = vld [vmem:[%s3982 + $0xf2] sm:$0xff]
      %v4554 = vld [vmem:[%s3982 + $0xfa] sm:$0xff]
      %v4555 = vld [vmem:[%s3982 + $0x10a] sm:$0xff]
      %v4556 = vld [vmem:[%s3982 + $0x112] sm:$0xff]
      %v4557 = vld [vmem:[%s3982 + $0x122] sm:$0xff]
      %v4558 = vld [vmem:[%s3982 + $0x12a] sm:$0xff]
      %v4559 = vld [vmem:[%s3982 + $0x13a] sm:$0xff]
      %v4560 = vld [vmem:[%s3982 + $0x142] sm:$0xff]
      %v4561 = vld [vmem:[%s3982 + $0x152] sm:$0xff]
      %v4562 = vld [vmem:[%s3982 + $0x15a] sm:$0xff]
      %v4563 = vld [vmem:[%s3982 + $0x16a] sm:$0xff]
      %v4564 = vld [vmem:[%s3982 + $0x172] sm:$0xff]
      %s4565 = scalar_lea.vmem %s347, 40
      %v4566 = vld [vmem:[%s4565] sm:$0xff]
      %v4568 = vsel %vm3288, %v4533, 0
      %v4571 = vsel %vm3288, %v4534, 0
      %v4574 = vsel %vm3288, %v4535, 0
      %v4577 = vsel %vm3288, %v4536, 0
      %v4580 = vsel %vm3288, %v4537, 0
      %v4583 = vsel %vm3288, %v4538, 0
      %v4586 = vsel %vm3288, %v4539, 0
      %v4589 = vsel %vm3288, %v4540, 0
      %v4592 = vsel %vm3288, %v4541, 0
      %v4595 = vsel %vm3288, %v4542, 0
      %v4598 = vsel %vm3288, %v4543, 0
      %v4601 = vsel %vm3288, %v4544, 0
      %v4604 = vsel %vm3288, %v4545, 0
      %v4607 = vsel %vm3288, %v4546, 0
      %v4610 = vsel %vm3288, %v4547, 0
      %v4613 = vsel %vm3288, %v4548, 0
      %v4616 = vsel %vm3288, %v4549, 0
      %v4619 = vsel %vm3288, %v4550, 0
      %v4622 = vsel %vm3288, %v4551, 0
      %v4625 = vsel %vm3288, %v4552, 0
      %v4628 = vsel %vm3288, %v4553, 0
      %v4631 = vsel %vm3288, %v4554, 0
      %v4634 = vsel %vm3288, %v4555, 0
      %v4637 = vsel %vm3288, %v4556, 0
      %v4640 = vsel %vm3288, %v4557, 0
      %v4643 = vsel %vm3288, %v4558, 0
      %v4646 = vsel %vm3288, %v4559, 0
      %v4649 = vsel %vm3288, %v4560, 0
      %v4652 = vsel %vm3288, %v4561, 0
      %v4655 = vsel %vm3288, %v4562, 0
      %v4658 = vsel %vm3288, %v4563, 0
      %v4661 = vsel %vm3288, %v4564, 0
      %4663 = vmatpush.msra.mxu0 0.0
      %4664 = vmatpush.msra.mxu0 0.0
      %4665 = vmatpush.msra.mxu0 0.0
      %4666 = vmatpush.msra.mxu0 0.0
      %4667 = vmatpush.msra.mxu0 0.0
      %4668 = vmatpush.msra.mxu0 0.0
      %4669 = vmatpush.msra.mxu0 0.0
      %4670 = vmatpush.msra.mxu0 0.0
      %4671 = vmatpush.msra.mxu0 0.0
      %4672 = vmatpush.msra.mxu0 0.0
      %4673 = vmatpush.msra.mxu0 0.0
      %4674 = vmatpush.msra.mxu0 0.0
      %4675 = vmatpush.msra.mxu0 0.0
      %4676 = vmatpush.msra.mxu0 0.0
      %4677 = vmatpush.msra.mxu0 0.0
      %4678 = vmatpush.msra.mxu0 %v4566
      %4679 = vmatmul.f32.gmra.mxu0 %v4568
      %v4680 = vpop.f32.mrf.mxu0
      %v4681 = vadd.f32 0.0, %v4680
      %4682 = vmatmul.f32.gmra.mxu0 %v4571
      %v4683 = vpop.f32.mrf.mxu0
      %v4684 = vadd.f32 0.0, %v4683
      %4685 = vmatmul.f32.gmra.mxu0 %v4574
      %v4686 = vpop.f32.mrf.mxu0
      %v4687 = vadd.f32 0.0, %v4686
      %4688 = vmatmul.f32.gmra.mxu0 %v4577
      %v4689 = vpop.f32.mrf.mxu0
      %v4690 = vadd.f32 0.0, %v4689
      %4691 = vmatmul.f32.gmra.mxu0 %v4580
      %v4692 = vpop.f32.mrf.mxu0
      %v4693 = vadd.f32 0.0, %v4692
      %4694 = vmatmul.f32.gmra.mxu0 %v4583
      %v4695 = vpop.f32.mrf.mxu0
      %v4696 = vadd.f32 0.0, %v4695
      %4697 = vmatmul.f32.gmra.mxu0 %v4586
      %v4698 = vpop.f32.mrf.mxu0
      %v4699 = vadd.f32 0.0, %v4698
      %4700 = vmatmul.f32.gmra.mxu0 %v4589
      %v4701 = vpop.f32.mrf.mxu0
      %v4702 = vadd.f32 0.0, %v4701
      %4703 = vmatmul.f32.gmra.mxu0 %v4592
      %v4704 = vpop.f32.mrf.mxu0
      %v4705 = vadd.f32 0.0, %v4704
      %4706 = vmatmul.f32.gmra.mxu0 %v4595
      %v4707 = vpop.f32.mrf.mxu0
      %v4708 = vadd.f32 0.0, %v4707
      %4709 = vmatmul.f32.gmra.mxu0 %v4598
      %v4710 = vpop.f32.mrf.mxu0
      %v4711 = vadd.f32 0.0, %v4710
      %4712 = vmatmul.f32.gmra.mxu0 %v4601
      %v4713 = vpop.f32.mrf.mxu0
      %v4714 = vadd.f32 0.0, %v4713
      %4715 = vmatmul.f32.gmra.mxu0 %v4604
      %v4716 = vpop.f32.mrf.mxu0
      %v4717 = vadd.f32 0.0, %v4716
      %4718 = vmatmul.f32.gmra.mxu0 %v4607
      %v4719 = vpop.f32.mrf.mxu0
      %v4720 = vadd.f32 0.0, %v4719
      %4721 = vmatmul.f32.gmra.mxu0 %v4610
      %v4722 = vpop.f32.mrf.mxu0
      %v4723 = vadd.f32 0.0, %v4722
      %4724 = vmatmul.f32.gmra.mxu0 %v4613
      %v4725 = vpop.f32.mrf.mxu0
      %v4726 = vadd.f32 0.0, %v4725
      %4727 = vmatmul.f32.gmra.mxu0 %v4616
      %v4728 = vpop.f32.mrf.mxu0
      %v4729 = vadd.f32 0.0, %v4728
      %4730 = vmatmul.f32.gmra.mxu0 %v4619
      %v4731 = vpop.f32.mrf.mxu0
      %v4732 = vadd.f32 0.0, %v4731
      %4733 = vmatmul.f32.gmra.mxu0 %v4622
      %v4734 = vpop.f32.mrf.mxu0
      %v4735 = vadd.f32 0.0, %v4734
      %4736 = vmatmul.f32.gmra.mxu0 %v4625
      %v4737 = vpop.f32.mrf.mxu0
      %v4738 = vadd.f32 0.0, %v4737
      %4739 = vmatmul.f32.gmra.mxu0 %v4628
      %v4740 = vpop.f32.mrf.mxu0
      %v4741 = vadd.f32 0.0, %v4740
      %4742 = vmatmul.f32.gmra.mxu0 %v4631
      %v4743 = vpop.f32.mrf.mxu0
      %v4744 = vadd.f32 0.0, %v4743
      %4745 = vmatmul.f32.gmra.mxu0 %v4634
      %v4746 = vpop.f32.mrf.mxu0
      %v4747 = vadd.f32 0.0, %v4746
      %4748 = vmatmul.f32.gmra.mxu0 %v4637
      %v4749 = vpop.f32.mrf.mxu0
      %v4750 = vadd.f32 0.0, %v4749
      %4751 = vmatmul.f32.gmra.mxu0 %v4640
      %v4752 = vpop.f32.mrf.mxu0
      %v4753 = vadd.f32 0.0, %v4752
      %4754 = vmatmul.f32.gmra.mxu0 %v4643
      %v4755 = vpop.f32.mrf.mxu0
      %v4756 = vadd.f32 0.0, %v4755
      %4757 = vmatmul.f32.gmra.mxu0 %v4646
      %v4758 = vpop.f32.mrf.mxu0
      %v4759 = vadd.f32 0.0, %v4758
      %4760 = vmatmul.f32.gmra.mxu0 %v4649
      %v4761 = vpop.f32.mrf.mxu0
      %v4762 = vadd.f32 0.0, %v4761
      %4763 = vmatmul.f32.gmra.mxu0 %v4652
      %v4764 = vpop.f32.mrf.mxu0
      %v4765 = vadd.f32 0.0, %v4764
      %4766 = vmatmul.f32.gmra.mxu0 %v4655
      %v4767 = vpop.f32.mrf.mxu0
      %v4768 = vadd.f32 0.0, %v4767
      %4769 = vmatmul.f32.gmra.mxu0 %v4658
      %v4770 = vpop.f32.mrf.mxu0
      %v4771 = vadd.f32 0.0, %v4770
      %4772 = vmatmul.f32.gmra.mxu0 %v4661
      %v4773 = vpop.f32.mrf.mxu0
      %v4774 = vadd.f32 0.0, %v4773
      %4775 = vdwg.mxu0
      %v4776 = vadd.f32 %v4501, %v4681
      %v4777 = vadd.f32 %v4502, %v4684
      %v4778 = vadd.f32 %v4503, %v4687
      %v4779 = vadd.f32 %v4504, %v4690
      %v4780 = vadd.f32 %v4505, %v4693
      %v4781 = vadd.f32 %v4506, %v4696
      %v4782 = vadd.f32 %v4507, %v4699
      %v4783 = vadd.f32 %v4508, %v4702
      %v4784 = vadd.f32 %v4509, %v4705
      %v4785 = vadd.f32 %v4510, %v4708
      %v4786 = vadd.f32 %v4511, %v4711
      %v4787 = vadd.f32 %v4512, %v4714
      %v4788 = vadd.f32 %v4513, %v4717
      %v4789 = vadd.f32 %v4514, %v4720
      %v4790 = vadd.f32 %v4515, %v4723
      %v4791 = vadd.f32 %v4516, %v4726
      %v4792 = vadd.f32 %v4517, %v4729
      %v4793 = vadd.f32 %v4518, %v4732
      %v4794 = vadd.f32 %v4519, %v4735
      %v4795 = vadd.f32 %v4520, %v4738
      %v4796 = vadd.f32 %v4521, %v4741
      %v4797 = vadd.f32 %v4522, %v4744
      %v4798 = vadd.f32 %v4523, %v4747
      %v4799 = vadd.f32 %v4524, %v4750
      %v4800 = vadd.f32 %v4525, %v4753
      %v4801 = vadd.f32 %v4526, %v4756
      %v4802 = vadd.f32 %v4527, %v4759
      %v4803 = vadd.f32 %v4528, %v4762
      %v4804 = vadd.f32 %v4529, %v4765
      %v4805 = vadd.f32 %v4530, %v4768
      %v4806 = vadd.f32 %v4531, %v4771
      %v4807 = vadd.f32 %v4532, %v4774
      %s4808 = scalar_lea.vmem [#allocation3], 48
      %v4809 = vld [vmem:[%s4808] sm:$0xff]
      %v4810 = vld [vmem:[%s4808 + $0x8] sm:$0xff]
      %v4811 = vld [vmem:[%s4808 + $0x18] sm:$0xff]
      %v4812 = vld [vmem:[%s4808 + $0x20] sm:$0xff]
      %v4813 = vld [vmem:[%s4808 + $0x30] sm:$0xff]
      %v4814 = vld [vmem:[%s4808 + $0x38] sm:$0xff]
      %v4815 = vld [vmem:[%s4808 + $0x48] sm:$0xff]
      %v4816 = vld [vmem:[%s4808 + $0x50] sm:$0xff]
      %v4817 = vld [vmem:[%s4808 + $0x60] sm:$0xff]
      %v4818 = vld [vmem:[%s4808 + $0x68] sm:$0xff]
      %v4819 = vld [vmem:[%s4808 + $0x78] sm:$0xff]
      %v4820 = vld [vmem:[%s4808 + $0x80] sm:$0xff]
      %v4821 = vld [vmem:[%s4808 + $0x90] sm:$0xff]
      %v4822 = vld [vmem:[%s4808 + $0x98] sm:$0xff]
      %v4823 = vld [vmem:[%s4808 + $0xa8] sm:$0xff]
      %v4824 = vld [vmem:[%s4808 + $0xb0] sm:$0xff]
      %v4825 = vld [vmem:[%s4808 + $0xc0] sm:$0xff]
      %v4826 = vld [vmem:[%s4808 + $0xc8] sm:$0xff]
      %v4827 = vld [vmem:[%s4808 + $0xd8] sm:$0xff]
      %v4828 = vld [vmem:[%s4808 + $0xe0] sm:$0xff]
      %v4829 = vld [vmem:[%s4808 + $0xf0] sm:$0xff]
      %v4830 = vld [vmem:[%s4808 + $0xf8] sm:$0xff]
      %v4831 = vld [vmem:[%s4808 + $0x108] sm:$0xff]
      %v4832 = vld [vmem:[%s4808 + $0x110] sm:$0xff]
      %v4833 = vld [vmem:[%s4808 + $0x120] sm:$0xff]
      %v4834 = vld [vmem:[%s4808 + $0x128] sm:$0xff]
      %v4835 = vld [vmem:[%s4808 + $0x138] sm:$0xff]
      %v4836 = vld [vmem:[%s4808 + $0x140] sm:$0xff]
      %v4837 = vld [vmem:[%s4808 + $0x150] sm:$0xff]
      %v4838 = vld [vmem:[%s4808 + $0x158] sm:$0xff]
      %v4839 = vld [vmem:[%s4808 + $0x168] sm:$0xff]
      %v4840 = vld [vmem:[%s4808 + $0x170] sm:$0xff]
      %s4841 = scalar_lea.vmem %s347, 48
      %v4842 = vld [vmem:[%s4841] sm:$0xff]
      %v4844 = vsel %vm3288, %v4809, 0
      %v4847 = vsel %vm3288, %v4810, 0
      %v4850 = vsel %vm3288, %v4811, 0
      %v4853 = vsel %vm3288, %v4812, 0
      %v4856 = vsel %vm3288, %v4813, 0
      %v4859 = vsel %vm3288, %v4814, 0
      %v4862 = vsel %vm3288, %v4815, 0
      %v4865 = vsel %vm3288, %v4816, 0
      %v4868 = vsel %vm3288, %v4817, 0
      %v4871 = vsel %vm3288, %v4818, 0
      %v4874 = vsel %vm3288, %v4819, 0
      %v4877 = vsel %vm3288, %v4820, 0
      %v4880 = vsel %vm3288, %v4821, 0
      %v4883 = vsel %vm3288, %v4822, 0
      %v4886 = vsel %vm3288, %v4823, 0
      %v4889 = vsel %vm3288, %v4824, 0
      %v4892 = vsel %vm3288, %v4825, 0
      %v4895 = vsel %vm3288, %v4826, 0
      %v4898 = vsel %vm3288, %v4827, 0
      %v4901 = vsel %vm3288, %v4828, 0
      %v4904 = vsel %vm3288, %v4829, 0
      %v4907 = vsel %vm3288, %v4830, 0
      %v4910 = vsel %vm3288, %v4831, 0
      %v4913 = vsel %vm3288, %v4832, 0
      %v4916 = vsel %vm3288, %v4833, 0
      %v4919 = vsel %vm3288, %v4834, 0
      %v4922 = vsel %vm3288, %v4835, 0
      %v4925 = vsel %vm3288, %v4836, 0
      %v4928 = vsel %vm3288, %v4837, 0
      %v4931 = vsel %vm3288, %v4838, 0
      %v4934 = vsel %vm3288, %v4839, 0
      %v4937 = vsel %vm3288, %v4840, 0
      %4939 = vmatpush.msra.mxu0 0.0
      %4940 = vmatpush.msra.mxu0 0.0
      %4941 = vmatpush.msra.mxu0 0.0
      %4942 = vmatpush.msra.mxu0 0.0
      %4943 = vmatpush.msra.mxu0 0.0
      %4944 = vmatpush.msra.mxu0 0.0
      %4945 = vmatpush.msra.mxu0 0.0
      %4946 = vmatpush.msra.mxu0 0.0
      %4947 = vmatpush.msra.mxu0 0.0
      %4948 = vmatpush.msra.mxu0 0.0
      %4949 = vmatpush.msra.mxu0 0.0
      %4950 = vmatpush.msra.mxu0 0.0
      %4951 = vmatpush.msra.mxu0 0.0
      %4952 = vmatpush.msra.mxu0 0.0
      %4953 = vmatpush.msra.mxu0 0.0
      %4954 = vmatpush.msra.mxu0 %v4842
      %4955 = vmatmul.f32.gmra.mxu0 %v4844
      %v4956 = vpop.f32.mrf.mxu0
      %v4957 = vadd.f32 0.0, %v4956
      %4958 = vmatmul.f32.gmra.mxu0 %v4847
      %v4959 = vpop.f32.mrf.mxu0
      %v4960 = vadd.f32 0.0, %v4959
      %4961 = vmatmul.f32.gmra.mxu0 %v4850
      %v4962 = vpop.f32.mrf.mxu0
      %v4963 = vadd.f32 0.0, %v4962
      %4964 = vmatmul.f32.gmra.mxu0 %v4853
      %v4965 = vpop.f32.mrf.mxu0
      %v4966 = vadd.f32 0.0, %v4965
      %4967 = vmatmul.f32.gmra.mxu0 %v4856
      %v4968 = vpop.f32.mrf.mxu0
      %v4969 = vadd.f32 0.0, %v4968
      %4970 = vmatmul.f32.gmra.mxu0 %v4859
      %v4971 = vpop.f32.mrf.mxu0
      %v4972 = vadd.f32 0.0, %v4971
      %4973 = vmatmul.f32.gmra.mxu0 %v4862
      %v4974 = vpop.f32.mrf.mxu0
      %v4975 = vadd.f32 0.0, %v4974
      %4976 = vmatmul.f32.gmra.mxu0 %v4865
      %v4977 = vpop.f32.mrf.mxu0
      %v4978 = vadd.f32 0.0, %v4977
      %4979 = vmatmul.f32.gmra.mxu0 %v4868
      %v4980 = vpop.f32.mrf.mxu0
      %v4981 = vadd.f32 0.0, %v4980
      %4982 = vmatmul.f32.gmra.mxu0 %v4871
      %v4983 = vpop.f32.mrf.mxu0
      %v4984 = vadd.f32 0.0, %v4983
      %4985 = vmatmul.f32.gmra.mxu0 %v4874
      %v4986 = vpop.f32.mrf.mxu0
      %v4987 = vadd.f32 0.0, %v4986
      %4988 = vmatmul.f32.gmra.mxu0 %v4877
      %v4989 = vpop.f32.mrf.mxu0
      %v4990 = vadd.f32 0.0, %v4989
      %4991 = vmatmul.f32.gmra.mxu0 %v4880
      %v4992 = vpop.f32.mrf.mxu0
      %v4993 = vadd.f32 0.0, %v4992
      %4994 = vmatmul.f32.gmra.mxu0 %v4883
      %v4995 = vpop.f32.mrf.mxu0
      %v4996 = vadd.f32 0.0, %v4995
      %4997 = vmatmul.f32.gmra.mxu0 %v4886
      %v4998 = vpop.f32.mrf.mxu0
      %v4999 = vadd.f32 0.0, %v4998
      %5000 = vmatmul.f32.gmra.mxu0 %v4889
      %v5001 = vpop.f32.mrf.mxu0
      %v5002 = vadd.f32 0.0, %v5001
      %5003 = vmatmul.f32.gmra.mxu0 %v4892
      %v5004 = vpop.f32.mrf.mxu0
      %v5005 = vadd.f32 0.0, %v5004
      %5006 = vmatmul.f32.gmra.mxu0 %v4895
      %v5007 = vpop.f32.mrf.mxu0
      %v5008 = vadd.f32 0.0, %v5007
      %5009 = vmatmul.f32.gmra.mxu0 %v4898
      %v5010 = vpop.f32.mrf.mxu0
      %v5011 = vadd.f32 0.0, %v5010
      %5012 = vmatmul.f32.gmra.mxu0 %v4901
      %v5013 = vpop.f32.mrf.mxu0
      %v5014 = vadd.f32 0.0, %v5013
      %5015 = vmatmul.f32.gmra.mxu0 %v4904
      %v5016 = vpop.f32.mrf.mxu0
      %v5017 = vadd.f32 0.0, %v5016
      %5018 = vmatmul.f32.gmra.mxu0 %v4907
      %v5019 = vpop.f32.mrf.mxu0
      %v5020 = vadd.f32 0.0, %v5019
      %5021 = vmatmul.f32.gmra.mxu0 %v4910
      %v5022 = vpop.f32.mrf.mxu0
      %v5023 = vadd.f32 0.0, %v5022
      %5024 = vmatmul.f32.gmra.mxu0 %v4913
      %v5025 = vpop.f32.mrf.mxu0
      %v5026 = vadd.f32 0.0, %v5025
      %5027 = vmatmul.f32.gmra.mxu0 %v4916
      %v5028 = vpop.f32.mrf.mxu0
      %v5029 = vadd.f32 0.0, %v5028
      %5030 = vmatmul.f32.gmra.mxu0 %v4919
      %v5031 = vpop.f32.mrf.mxu0
      %v5032 = vadd.f32 0.0, %v5031
      %5033 = vmatmul.f32.gmra.mxu0 %v4922
      %v5034 = vpop.f32.mrf.mxu0
      %v5035 = vadd.f32 0.0, %v5034
      %5036 = vmatmul.f32.gmra.mxu0 %v4925
      %v5037 = vpop.f32.mrf.mxu0
      %v5038 = vadd.f32 0.0, %v5037
      %5039 = vmatmul.f32.gmra.mxu0 %v4928
      %v5040 = vpop.f32.mrf.mxu0
      %v5041 = vadd.f32 0.0, %v5040
      %5042 = vmatmul.f32.gmra.mxu0 %v4931
      %v5043 = vpop.f32.mrf.mxu0
      %v5044 = vadd.f32 0.0, %v5043
      %5045 = vmatmul.f32.gmra.mxu0 %v4934
      %v5046 = vpop.f32.mrf.mxu0
      %v5047 = vadd.f32 0.0, %v5046
      %5048 = vmatmul.f32.gmra.mxu0 %v4937
      %v5049 = vpop.f32.mrf.mxu0
      %v5050 = vadd.f32 0.0, %v5049
      %5051 = vdwg.mxu0
      %v5052 = vadd.f32 %v4776, %v4957
      %v5053 = vadd.f32 %v4777, %v4960
      %v5054 = vadd.f32 %v4778, %v4963
      %v5055 = vadd.f32 %v4779, %v4966
      %v5056 = vadd.f32 %v4780, %v4969
      %v5057 = vadd.f32 %v4781, %v4972
      %v5058 = vadd.f32 %v4782, %v4975
      %v5059 = vadd.f32 %v4783, %v4978
      %v5060 = vadd.f32 %v4784, %v4981
      %v5061 = vadd.f32 %v4785, %v4984
      %v5062 = vadd.f32 %v4786, %v4987
      %v5063 = vadd.f32 %v4787, %v4990
      %v5064 = vadd.f32 %v4788, %v4993
      %v5065 = vadd.f32 %v4789, %v4996
      %v5066 = vadd.f32 %v4790, %v4999
      %v5067 = vadd.f32 %v4791, %v5002
      %v5068 = vadd.f32 %v4792, %v5005
      %v5069 = vadd.f32 %v4793, %v5008
      %v5070 = vadd.f32 %v4794, %v5011
      %v5071 = vadd.f32 %v4795, %v5014
      %v5072 = vadd.f32 %v4796, %v5017
      %v5073 = vadd.f32 %v4797, %v5020
      %v5074 = vadd.f32 %v4798, %v5023
      %v5075 = vadd.f32 %v4799, %v5026
      %v5076 = vadd.f32 %v4800, %v5029
      %v5077 = vadd.f32 %v4801, %v5032
      %v5078 = vadd.f32 %v4802, %v5035
      %v5079 = vadd.f32 %v4803, %v5038
      %v5080 = vadd.f32 %v4804, %v5041
      %v5081 = vadd.f32 %v4805, %v5044
      %v5082 = vadd.f32 %v4806, %v5047
      %v5083 = vadd.f32 %v4807, %v5050
      %v5084 = vld [vmem:[%s4808 + $0x1] sm:$0xff]
      %v5085 = vld [vmem:[%s4808 + $0x9] sm:$0xff]
      %v5086 = vld [vmem:[%s4808 + $0x19] sm:$0xff]
      %v5087 = vld [vmem:[%s4808 + $0x21] sm:$0xff]
      %v5088 = vld [vmem:[%s4808 + $0x31] sm:$0xff]
      %v5089 = vld [vmem:[%s4808 + $0x39] sm:$0xff]
      %v5090 = vld [vmem:[%s4808 + $0x49] sm:$0xff]
      %v5091 = vld [vmem:[%s4808 + $0x51] sm:$0xff]
      %v5092 = vld [vmem:[%s4808 + $0x61] sm:$0xff]
      %v5093 = vld [vmem:[%s4808 + $0x69] sm:$0xff]
      %v5094 = vld [vmem:[%s4808 + $0x79] sm:$0xff]
      %v5095 = vld [vmem:[%s4808 + $0x81] sm:$0xff]
      %v5096 = vld [vmem:[%s4808 + $0x91] sm:$0xff]
      %v5097 = vld [vmem:[%s4808 + $0x99] sm:$0xff]
      %v5098 = vld [vmem:[%s4808 + $0xa9] sm:$0xff]
      %v5099 = vld [vmem:[%s4808 + $0xb1] sm:$0xff]
      %v5100 = vld [vmem:[%s4808 + $0xc1] sm:$0xff]
      %v5101 = vld [vmem:[%s4808 + $0xc9] sm:$0xff]
      %v5102 = vld [vmem:[%s4808 + $0xd9] sm:$0xff]
      %v5103 = vld [vmem:[%s4808 + $0xe1] sm:$0xff]
      %v5104 = vld [vmem:[%s4808 + $0xf1] sm:$0xff]
      %v5105 = vld [vmem:[%s4808 + $0xf9] sm:$0xff]
      %v5106 = vld [vmem:[%s4808 + $0x109] sm:$0xff]
      %v5107 = vld [vmem:[%s4808 + $0x111] sm:$0xff]
      %v5108 = vld [vmem:[%s4808 + $0x121] sm:$0xff]
      %v5109 = vld [vmem:[%s4808 + $0x129] sm:$0xff]
      %v5110 = vld [vmem:[%s4808 + $0x139] sm:$0xff]
      %v5111 = vld [vmem:[%s4808 + $0x141] sm:$0xff]
      %v5112 = vld [vmem:[%s4808 + $0x151] sm:$0xff]
      %v5113 = vld [vmem:[%s4808 + $0x159] sm:$0xff]
      %v5114 = vld [vmem:[%s4808 + $0x169] sm:$0xff]
      %v5115 = vld [vmem:[%s4808 + $0x171] sm:$0xff]
      %s5116 = scalar_lea.vmem %s347, 56
      %v5117 = vld [vmem:[%s5116] sm:$0xff]
      %v5119 = vsel %vm3288, %v5084, 0
      %v5122 = vsel %vm3288, %v5085, 0
      %v5125 = vsel %vm3288, %v5086, 0
      %v5128 = vsel %vm3288, %v5087, 0
      %v5131 = vsel %vm3288, %v5088, 0
      %v5134 = vsel %vm3288, %v5089, 0
      %v5137 = vsel %vm3288, %v5090, 0
      %v5140 = vsel %vm3288, %v5091, 0
      %v5143 = vsel %vm3288, %v5092, 0
      %v5146 = vsel %vm3288, %v5093, 0
      %v5149 = vsel %vm3288, %v5094, 0
      %v5152 = vsel %vm3288, %v5095, 0
      %v5155 = vsel %vm3288, %v5096, 0
      %v5158 = vsel %vm3288, %v5097, 0
      %v5161 = vsel %vm3288, %v5098, 0
      %v5164 = vsel %vm3288, %v5099, 0
      %v5167 = vsel %vm3288, %v5100, 0
      %v5170 = vsel %vm3288, %v5101, 0
      %v5173 = vsel %vm3288, %v5102, 0
      %v5176 = vsel %vm3288, %v5103, 0
      %v5179 = vsel %vm3288, %v5104, 0
      %v5182 = vsel %vm3288, %v5105, 0
      %v5185 = vsel %vm3288, %v5106, 0
      %v5188 = vsel %vm3288, %v5107, 0
      %v5191 = vsel %vm3288, %v5108, 0
      %v5194 = vsel %vm3288, %v5109, 0
      %v5197 = vsel %vm3288, %v5110, 0
      %v5200 = vsel %vm3288, %v5111, 0
      %v5203 = vsel %vm3288, %v5112, 0
      %v5206 = vsel %vm3288, %v5113, 0
      %v5209 = vsel %vm3288, %v5114, 0
      %v5212 = vsel %vm3288, %v5115, 0
      %5214 = vmatpush.msra.mxu0 0.0
      %5215 = vmatpush.msra.mxu0 0.0
      %5216 = vmatpush.msra.mxu0 0.0
      %5217 = vmatpush.msra.mxu0 0.0
      %5218 = vmatpush.msra.mxu0 0.0
      %5219 = vmatpush.msra.mxu0 0.0
      %5220 = vmatpush.msra.mxu0 0.0
      %5221 = vmatpush.msra.mxu0 0.0
      %5222 = vmatpush.msra.mxu0 0.0
      %5223 = vmatpush.msra.mxu0 0.0
      %5224 = vmatpush.msra.mxu0 0.0
      %5225 = vmatpush.msra.mxu0 0.0
      %5226 = vmatpush.msra.mxu0 0.0
      %5227 = vmatpush.msra.mxu0 0.0
      %5228 = vmatpush.msra.mxu0 0.0
      %5229 = vmatpush.msra.mxu0 %v5117
      %5230 = vmatmul.f32.gmra.mxu0 %v5119
      %v5231 = vpop.f32.mrf.mxu0
      %v5232 = vadd.f32 0.0, %v5231
      %5233 = vmatmul.f32.gmra.mxu0 %v5122
      %v5234 = vpop.f32.mrf.mxu0
      %v5235 = vadd.f32 0.0, %v5234
      %5236 = vmatmul.f32.gmra.mxu0 %v5125
      %v5237 = vpop.f32.mrf.mxu0
      %v5238 = vadd.f32 0.0, %v5237
      %5239 = vmatmul.f32.gmra.mxu0 %v5128
      %v5240 = vpop.f32.mrf.mxu0
      %v5241 = vadd.f32 0.0, %v5240
      %5242 = vmatmul.f32.gmra.mxu0 %v5131
      %v5243 = vpop.f32.mrf.mxu0
      %v5244 = vadd.f32 0.0, %v5243
      %5245 = vmatmul.f32.gmra.mxu0 %v5134
      %v5246 = vpop.f32.mrf.mxu0
      %v5247 = vadd.f32 0.0, %v5246
      %5248 = vmatmul.f32.gmra.mxu0 %v5137
      %v5249 = vpop.f32.mrf.mxu0
      %v5250 = vadd.f32 0.0, %v5249
      %5251 = vmatmul.f32.gmra.mxu0 %v5140
      %v5252 = vpop.f32.mrf.mxu0
      %v5253 = vadd.f32 0.0, %v5252
      %5254 = vmatmul.f32.gmra.mxu0 %v5143
      %v5255 = vpop.f32.mrf.mxu0
      %v5256 = vadd.f32 0.0, %v5255
      %5257 = vmatmul.f32.gmra.mxu0 %v5146
      %v5258 = vpop.f32.mrf.mxu0
      %v5259 = vadd.f32 0.0, %v5258
      %5260 = vmatmul.f32.gmra.mxu0 %v5149
      %v5261 = vpop.f32.mrf.mxu0
      %v5262 = vadd.f32 0.0, %v5261
      %5263 = vmatmul.f32.gmra.mxu0 %v5152
      %v5264 = vpop.f32.mrf.mxu0
      %v5265 = vadd.f32 0.0, %v5264
      %5266 = vmatmul.f32.gmra.mxu0 %v5155
      %v5267 = vpop.f32.mrf.mxu0
      %v5268 = vadd.f32 0.0, %v5267
      %5269 = vmatmul.f32.gmra.mxu0 %v5158
      %v5270 = vpop.f32.mrf.mxu0
      %v5271 = vadd.f32 0.0, %v5270
      %5272 = vmatmul.f32.gmra.mxu0 %v5161
      %v5273 = vpop.f32.mrf.mxu0
      %v5274 = vadd.f32 0.0, %v5273
      %5275 = vmatmul.f32.gmra.mxu0 %v5164
      %v5276 = vpop.f32.mrf.mxu0
      %v5277 = vadd.f32 0.0, %v5276
      %5278 = vmatmul.f32.gmra.mxu0 %v5167
      %v5279 = vpop.f32.mrf.mxu0
      %v5280 = vadd.f32 0.0, %v5279
      %5281 = vmatmul.f32.gmra.mxu0 %v5170
      %v5282 = vpop.f32.mrf.mxu0
      %v5283 = vadd.f32 0.0, %v5282
      %5284 = vmatmul.f32.gmra.mxu0 %v5173
      %v5285 = vpop.f32.mrf.mxu0
      %v5286 = vadd.f32 0.0, %v5285
      %5287 = vmatmul.f32.gmra.mxu0 %v5176
      %v5288 = vpop.f32.mrf.mxu0
      %v5289 = vadd.f32 0.0, %v5288
      %5290 = vmatmul.f32.gmra.mxu0 %v5179
      %v5291 = vpop.f32.mrf.mxu0
      %v5292 = vadd.f32 0.0, %v5291
      %5293 = vmatmul.f32.gmra.mxu0 %v5182
      %v5294 = vpop.f32.mrf.mxu0
      %v5295 = vadd.f32 0.0, %v5294
      %5296 = vmatmul.f32.gmra.mxu0 %v5185
      %v5297 = vpop.f32.mrf.mxu0
      %v5298 = vadd.f32 0.0, %v5297
      %5299 = vmatmul.f32.gmra.mxu0 %v5188
      %v5300 = vpop.f32.mrf.mxu0
      %v5301 = vadd.f32 0.0, %v5300
      %5302 = vmatmul.f32.gmra.mxu0 %v5191
      %v5303 = vpop.f32.mrf.mxu0
      %v5304 = vadd.f32 0.0, %v5303
      %5305 = vmatmul.f32.gmra.mxu0 %v5194
      %v5306 = vpop.f32.mrf.mxu0
      %v5307 = vadd.f32 0.0, %v5306
      %5308 = vmatmul.f32.gmra.mxu0 %v5197
      %v5309 = vpop.f32.mrf.mxu0
      %v5310 = vadd.f32 0.0, %v5309
      %5311 = vmatmul.f32.gmra.mxu0 %v5200
      %v5312 = vpop.f32.mrf.mxu0
      %v5313 = vadd.f32 0.0, %v5312
      %5314 = vmatmul.f32.gmra.mxu0 %v5203
      %v5315 = vpop.f32.mrf.mxu0
      %v5316 = vadd.f32 0.0, %v5315
      %5317 = vmatmul.f32.gmra.mxu0 %v5206
      %v5318 = vpop.f32.mrf.mxu0
      %v5319 = vadd.f32 0.0, %v5318
      %5320 = vmatmul.f32.gmra.mxu0 %v5209
      %v5321 = vpop.f32.mrf.mxu0
      %v5322 = vadd.f32 0.0, %v5321
      %5323 = vmatmul.f32.gmra.mxu0 %v5212
      %v5324 = vpop.f32.mrf.mxu0
      %v5325 = vadd.f32 0.0, %v5324
      %5326 = vdwg.mxu0
      %v5327 = vadd.f32 %v5052, %v5232
      %v5328 = vadd.f32 %v5053, %v5235
      %v5329 = vadd.f32 %v5054, %v5238
      %v5330 = vadd.f32 %v5055, %v5241
      %v5331 = vadd.f32 %v5056, %v5244
      %v5332 = vadd.f32 %v5057, %v5247
      %v5333 = vadd.f32 %v5058, %v5250
      %v5334 = vadd.f32 %v5059, %v5253
      %v5335 = vadd.f32 %v5060, %v5256
      %v5336 = vadd.f32 %v5061, %v5259
      %v5337 = vadd.f32 %v5062, %v5262
      %v5338 = vadd.f32 %v5063, %v5265
      %v5339 = vadd.f32 %v5064, %v5268
      %v5340 = vadd.f32 %v5065, %v5271
      %v5341 = vadd.f32 %v5066, %v5274
      %v5342 = vadd.f32 %v5067, %v5277
      %v5343 = vadd.f32 %v5068, %v5280
      %v5344 = vadd.f32 %v5069, %v5283
      %v5345 = vadd.f32 %v5070, %v5286
      %v5346 = vadd.f32 %v5071, %v5289
      %v5347 = vadd.f32 %v5072, %v5292
      %v5348 = vadd.f32 %v5073, %v5295
      %v5349 = vadd.f32 %v5074, %v5298
      %v5350 = vadd.f32 %v5075, %v5301
      %v5351 = vadd.f32 %v5076, %v5304
      %v5352 = vadd.f32 %v5077, %v5307
      %v5353 = vadd.f32 %v5078, %v5310
      %v5354 = vadd.f32 %v5079, %v5313
      %v5355 = vadd.f32 %v5080, %v5316
      %v5356 = vadd.f32 %v5081, %v5319
      %v5357 = vadd.f32 %v5082, %v5322
      %v5358 = vadd.f32 %v5083, %v5325
      %v5359 = vld [vmem:[%s4808 + $0x2] sm:$0xff]
      %v5360 = vld [vmem:[%s4808 + $0xa] sm:$0xff]
      %v5361 = vld [vmem:[%s4808 + $0x1a] sm:$0xff]
      %v5362 = vld [vmem:[%s4808 + $0x22] sm:$0xff]
      %v5363 = vld [vmem:[%s4808 + $0x32] sm:$0xff]
      %v5364 = vld [vmem:[%s4808 + $0x3a] sm:$0xff]
      %v5365 = vld [vmem:[%s4808 + $0x4a] sm:$0xff]
      %v5366 = vld [vmem:[%s4808 + $0x52] sm:$0xff]
      %v5367 = vld [vmem:[%s4808 + $0x62] sm:$0xff]
      %v5368 = vld [vmem:[%s4808 + $0x6a] sm:$0xff]
      %v5369 = vld [vmem:[%s4808 + $0x7a] sm:$0xff]
      %v5370 = vld [vmem:[%s4808 + $0x82] sm:$0xff]
      %v5371 = vld [vmem:[%s4808 + $0x92] sm:$0xff]
      %v5372 = vld [vmem:[%s4808 + $0x9a] sm:$0xff]
      %v5373 = vld [vmem:[%s4808 + $0xaa] sm:$0xff]
      %v5374 = vld [vmem:[%s4808 + $0xb2] sm:$0xff]
      %v5375 = vld [vmem:[%s4808 + $0xc2] sm:$0xff]
      %v5376 = vld [vmem:[%s4808 + $0xca] sm:$0xff]
      %v5377 = vld [vmem:[%s4808 + $0xda] sm:$0xff]
      %v5378 = vld [vmem:[%s4808 + $0xe2] sm:$0xff]
      %v5379 = vld [vmem:[%s4808 + $0xf2] sm:$0xff]
      %v5380 = vld [vmem:[%s4808 + $0xfa] sm:$0xff]
      %v5381 = vld [vmem:[%s4808 + $0x10a] sm:$0xff]
      %v5382 = vld [vmem:[%s4808 + $0x112] sm:$0xff]
      %v5383 = vld [vmem:[%s4808 + $0x122] sm:$0xff]
      %v5384 = vld [vmem:[%s4808 + $0x12a] sm:$0xff]
      %v5385 = vld [vmem:[%s4808 + $0x13a] sm:$0xff]
      %v5386 = vld [vmem:[%s4808 + $0x142] sm:$0xff]
      %v5387 = vld [vmem:[%s4808 + $0x152] sm:$0xff]
      %v5388 = vld [vmem:[%s4808 + $0x15a] sm:$0xff]
      %v5389 = vld [vmem:[%s4808 + $0x16a] sm:$0xff]
      %v5390 = vld [vmem:[%s4808 + $0x172] sm:$0xff]
      %s5391 = scalar_lea.vmem %s347, 64
      %v5392 = vld [vmem:[%s5391] sm:$0xff]
      %v5394 = vsel %vm3288, %v5359, 0
      %v5397 = vsel %vm3288, %v5360, 0
      %v5400 = vsel %vm3288, %v5361, 0
      %v5403 = vsel %vm3288, %v5362, 0
      %v5406 = vsel %vm3288, %v5363, 0
      %v5409 = vsel %vm3288, %v5364, 0
      %v5412 = vsel %vm3288, %v5365, 0
      %v5415 = vsel %vm3288, %v5366, 0
      %v5418 = vsel %vm3288, %v5367, 0
      %v5421 = vsel %vm3288, %v5368, 0
      %v5424 = vsel %vm3288, %v5369, 0
      %v5427 = vsel %vm3288, %v5370, 0
      %v5430 = vsel %vm3288, %v5371, 0
      %v5433 = vsel %vm3288, %v5372, 0
      %v5436 = vsel %vm3288, %v5373, 0
      %v5439 = vsel %vm3288, %v5374, 0
      %v5442 = vsel %vm3288, %v5375, 0
      %v5445 = vsel %vm3288, %v5376, 0
      %v5448 = vsel %vm3288, %v5377, 0
      %v5451 = vsel %vm3288, %v5378, 0
      %v5454 = vsel %vm3288, %v5379, 0
      %v5457 = vsel %vm3288, %v5380, 0
      %v5460 = vsel %vm3288, %v5381, 0
      %v5463 = vsel %vm3288, %v5382, 0
      %v5466 = vsel %vm3288, %v5383, 0
      %v5469 = vsel %vm3288, %v5384, 0
      %v5472 = vsel %vm3288, %v5385, 0
      %v5475 = vsel %vm3288, %v5386, 0
      %v5478 = vsel %vm3288, %v5387, 0
      %v5481 = vsel %vm3288, %v5388, 0
      %v5484 = vsel %vm3288, %v5389, 0
      %v5487 = vsel %vm3288, %v5390, 0
      %5489 = vmatpush.msra.mxu0 0.0
      %5490 = vmatpush.msra.mxu0 0.0
      %5491 = vmatpush.msra.mxu0 0.0
      %5492 = vmatpush.msra.mxu0 0.0
      %5493 = vmatpush.msra.mxu0 0.0
      %5494 = vmatpush.msra.mxu0 0.0
      %5495 = vmatpush.msra.mxu0 0.0
      %5496 = vmatpush.msra.mxu0 0.0
      %5497 = vmatpush.msra.mxu0 0.0
      %5498 = vmatpush.msra.mxu0 0.0
      %5499 = vmatpush.msra.mxu0 0.0
      %5500 = vmatpush.msra.mxu0 0.0
      %5501 = vmatpush.msra.mxu0 0.0
      %5502 = vmatpush.msra.mxu0 0.0
      %5503 = vmatpush.msra.mxu0 0.0
      %5504 = vmatpush.msra.mxu0 %v5392
      %5505 = vmatmul.f32.gmra.mxu0 %v5394
      %v5506 = vpop.f32.mrf.mxu0
      %v5507 = vadd.f32 0.0, %v5506
      %5508 = vmatmul.f32.gmra.mxu0 %v5397
      %v5509 = vpop.f32.mrf.mxu0
      %v5510 = vadd.f32 0.0, %v5509
      %5511 = vmatmul.f32.gmra.mxu0 %v5400
      %v5512 = vpop.f32.mrf.mxu0
      %v5513 = vadd.f32 0.0, %v5512
      %5514 = vmatmul.f32.gmra.mxu0 %v5403
      %v5515 = vpop.f32.mrf.mxu0
      %v5516 = vadd.f32 0.0, %v5515
      %5517 = vmatmul.f32.gmra.mxu0 %v5406
      %v5518 = vpop.f32.mrf.mxu0
      %v5519 = vadd.f32 0.0, %v5518
      %5520 = vmatmul.f32.gmra.mxu0 %v5409
      %v5521 = vpop.f32.mrf.mxu0
      %v5522 = vadd.f32 0.0, %v5521
      %5523 = vmatmul.f32.gmra.mxu0 %v5412
      %v5524 = vpop.f32.mrf.mxu0
      %v5525 = vadd.f32 0.0, %v5524
      %5526 = vmatmul.f32.gmra.mxu0 %v5415
      %v5527 = vpop.f32.mrf.mxu0
      %v5528 = vadd.f32 0.0, %v5527
      %5529 = vmatmul.f32.gmra.mxu0 %v5418
      %v5530 = vpop.f32.mrf.mxu0
      %v5531 = vadd.f32 0.0, %v5530
      %5532 = vmatmul.f32.gmra.mxu0 %v5421
      %v5533 = vpop.f32.mrf.mxu0
      %v5534 = vadd.f32 0.0, %v5533
      %5535 = vmatmul.f32.gmra.mxu0 %v5424
      %v5536 = vpop.f32.mrf.mxu0
      %v5537 = vadd.f32 0.0, %v5536
      %5538 = vmatmul.f32.gmra.mxu0 %v5427
      %v5539 = vpop.f32.mrf.mxu0
      %v5540 = vadd.f32 0.0, %v5539
      %5541 = vmatmul.f32.gmra.mxu0 %v5430
      %v5542 = vpop.f32.mrf.mxu0
      %v5543 = vadd.f32 0.0, %v5542
      %5544 = vmatmul.f32.gmra.mxu0 %v5433
      %v5545 = vpop.f32.mrf.mxu0
      %v5546 = vadd.f32 0.0, %v5545
      %5547 = vmatmul.f32.gmra.mxu0 %v5436
      %v5548 = vpop.f32.mrf.mxu0
      %v5549 = vadd.f32 0.0, %v5548
      %5550 = vmatmul.f32.gmra.mxu0 %v5439
      %v5551 = vpop.f32.mrf.mxu0
      %v5552 = vadd.f32 0.0, %v5551
      %5553 = vmatmul.f32.gmra.mxu0 %v5442
      %v5554 = vpop.f32.mrf.mxu0
      %v5555 = vadd.f32 0.0, %v5554
      %5556 = vmatmul.f32.gmra.mxu0 %v5445
      %v5557 = vpop.f32.mrf.mxu0
      %v5558 = vadd.f32 0.0, %v5557
      %5559 = vmatmul.f32.gmra.mxu0 %v5448
      %v5560 = vpop.f32.mrf.mxu0
      %v5561 = vadd.f32 0.0, %v5560
      %5562 = vmatmul.f32.gmra.mxu0 %v5451
      %v5563 = vpop.f32.mrf.mxu0
      %v5564 = vadd.f32 0.0, %v5563
      %5565 = vmatmul.f32.gmra.mxu0 %v5454
      %v5566 = vpop.f32.mrf.mxu0
      %v5567 = vadd.f32 0.0, %v5566
      %5568 = vmatmul.f32.gmra.mxu0 %v5457
      %v5569 = vpop.f32.mrf.mxu0
      %v5570 = vadd.f32 0.0, %v5569
      %5571 = vmatmul.f32.gmra.mxu0 %v5460
      %v5572 = vpop.f32.mrf.mxu0
      %v5573 = vadd.f32 0.0, %v5572
      %5574 = vmatmul.f32.gmra.mxu0 %v5463
      %v5575 = vpop.f32.mrf.mxu0
      %v5576 = vadd.f32 0.0, %v5575
      %5577 = vmatmul.f32.gmra.mxu0 %v5466
      %v5578 = vpop.f32.mrf.mxu0
      %v5579 = vadd.f32 0.0, %v5578
      %5580 = vmatmul.f32.gmra.mxu0 %v5469
      %v5581 = vpop.f32.mrf.mxu0
      %v5582 = vadd.f32 0.0, %v5581
      %5583 = vmatmul.f32.gmra.mxu0 %v5472
      %v5584 = vpop.f32.mrf.mxu0
      %v5585 = vadd.f32 0.0, %v5584
      %5586 = vmatmul.f32.gmra.mxu0 %v5475
      %v5587 = vpop.f32.mrf.mxu0
      %v5588 = vadd.f32 0.0, %v5587
      %5589 = vmatmul.f32.gmra.mxu0 %v5478
      %v5590 = vpop.f32.mrf.mxu0
      %v5591 = vadd.f32 0.0, %v5590
      %5592 = vmatmul.f32.gmra.mxu0 %v5481
      %v5593 = vpop.f32.mrf.mxu0
      %v5594 = vadd.f32 0.0, %v5593
      %5595 = vmatmul.f32.gmra.mxu0 %v5484
      %v5596 = vpop.f32.mrf.mxu0
      %v5597 = vadd.f32 0.0, %v5596
      %5598 = vmatmul.f32.gmra.mxu0 %v5487
      %v5599 = vpop.f32.mrf.mxu0
      %v5600 = vadd.f32 0.0, %v5599
      %5601 = vdwg.mxu0
      %v5602 = vadd.f32 %v5327, %v5507
      %v5603 = vadd.f32 %v5328, %v5510
      %v5604 = vadd.f32 %v5329, %v5513
      %v5605 = vadd.f32 %v5330, %v5516
      %v5606 = vadd.f32 %v5331, %v5519
      %v5607 = vadd.f32 %v5332, %v5522
      %v5608 = vadd.f32 %v5333, %v5525
      %v5609 = vadd.f32 %v5334, %v5528
      %v5610 = vadd.f32 %v5335, %v5531
      %v5611 = vadd.f32 %v5336, %v5534
      %v5612 = vadd.f32 %v5337, %v5537
      %v5613 = vadd.f32 %v5338, %v5540
      %v5614 = vadd.f32 %v5339, %v5543
      %v5615 = vadd.f32 %v5340, %v5546
      %v5616 = vadd.f32 %v5341, %v5549
      %v5617 = vadd.f32 %v5342, %v5552
      %v5618 = vadd.f32 %v5343, %v5555
      %v5619 = vadd.f32 %v5344, %v5558
      %v5620 = vadd.f32 %v5345, %v5561
      %v5621 = vadd.f32 %v5346, %v5564
      %v5622 = vadd.f32 %v5347, %v5567
      %v5623 = vadd.f32 %v5348, %v5570
      %v5624 = vadd.f32 %v5349, %v5573
      %v5625 = vadd.f32 %v5350, %v5576
      %v5626 = vadd.f32 %v5351, %v5579
      %v5627 = vadd.f32 %v5352, %v5582
      %v5628 = vadd.f32 %v5353, %v5585
      %v5629 = vadd.f32 %v5354, %v5588
      %v5630 = vadd.f32 %v5355, %v5591
      %v5631 = vadd.f32 %v5356, %v5594
      %v5632 = vadd.f32 %v5357, %v5597
      %v5633 = vadd.f32 %v5358, %v5600
      %s5634 = scalar_lea.vmem [#allocation2], 24
      %v5635 = vld [vmem:[%s5634 + $0x1] sm:$0xff]
      %v5636 = vld [vmem:[%s5634 + $0x9] sm:$0xff]
      %v5637 = vld [vmem:[%s5634 + $0x19] sm:$0xff]
      %v5638 = vld [vmem:[%s5634 + $0x21] sm:$0xff]
      %v5639 = vld [vmem:[%s5634 + $0x31] sm:$0xff]
      %v5640 = vld [vmem:[%s5634 + $0x39] sm:$0xff]
      %v5641 = vld [vmem:[%s5634 + $0x49] sm:$0xff]
      %v5642 = vld [vmem:[%s5634 + $0x51] sm:$0xff]
      %v5643 = vld [vmem:[%s5634 + $0x61] sm:$0xff]
      %v5644 = vld [vmem:[%s5634 + $0x69] sm:$0xff]
      %v5645 = vld [vmem:[%s5634 + $0x79] sm:$0xff]
      %v5646 = vld [vmem:[%s5634 + $0x81] sm:$0xff]
      %v5647 = vld [vmem:[%s5634 + $0x91] sm:$0xff]
      %v5648 = vld [vmem:[%s5634 + $0x99] sm:$0xff]
      %v5649 = vld [vmem:[%s5634 + $0xa9] sm:$0xff]
      %v5650 = vld [vmem:[%s5634 + $0xb1] sm:$0xff]
      %v5651 = vld [vmem:[%s5634 + $0xc1] sm:$0xff]
      %v5652 = vld [vmem:[%s5634 + $0xc9] sm:$0xff]
      %v5653 = vld [vmem:[%s5634 + $0xd9] sm:$0xff]
      %v5654 = vld [vmem:[%s5634 + $0xe1] sm:$0xff]
      %v5655 = vld [vmem:[%s5634 + $0xf1] sm:$0xff]
      %v5656 = vld [vmem:[%s5634 + $0xf9] sm:$0xff]
      %v5657 = vld [vmem:[%s5634 + $0x109] sm:$0xff]
      %v5658 = vld [vmem:[%s5634 + $0x111] sm:$0xff]
      %v5659 = vld [vmem:[%s5634 + $0x121] sm:$0xff]
      %v5660 = vld [vmem:[%s5634 + $0x129] sm:$0xff]
      %v5661 = vld [vmem:[%s5634 + $0x139] sm:$0xff]
      %v5662 = vld [vmem:[%s5634 + $0x141] sm:$0xff]
      %v5663 = vld [vmem:[%s5634 + $0x151] sm:$0xff]
      %v5664 = vld [vmem:[%s5634 + $0x159] sm:$0xff]
      %v5665 = vld [vmem:[%s5634 + $0x169] sm:$0xff]
      %v5666 = vld [vmem:[%s5634 + $0x171] sm:$0xff]
      %v5667 = vld [vmem:[%s351] sm:$0xf]
      %vm5668 = vcmask 31744
      %v5670 = vsel %vm5668, %v5635, 0
      %v5673 = vsel %vm5668, %v5636, 0
      %v5676 = vsel %vm5668, %v5637, 0
      %v5679 = vsel %vm5668, %v5638, 0
      %v5682 = vsel %vm5668, %v5639, 0
      %v5685 = vsel %vm5668, %v5640, 0
      %v5688 = vsel %vm5668, %v5641, 0
      %v5691 = vsel %vm5668, %v5642, 0
      %v5694 = vsel %vm5668, %v5643, 0
      %v5697 = vsel %vm5668, %v5644, 0
      %v5700 = vsel %vm5668, %v5645, 0
      %v5703 = vsel %vm5668, %v5646, 0
      %v5706 = vsel %vm5668, %v5647, 0
      %v5709 = vsel %vm5668, %v5648, 0
      %v5712 = vsel %vm5668, %v5649, 0
      %v5715 = vsel %vm5668, %v5650, 0
      %v5718 = vsel %vm5668, %v5651, 0
      %v5721 = vsel %vm5668, %v5652, 0
      %v5724 = vsel %vm5668, %v5653, 0
      %v5727 = vsel %vm5668, %v5654, 0
      %v5730 = vsel %vm5668, %v5655, 0
      %v5733 = vsel %vm5668, %v5656, 0
      %v5736 = vsel %vm5668, %v5657, 0
      %v5739 = vsel %vm5668, %v5658, 0
      %v5742 = vsel %vm5668, %v5659, 0
      %v5745 = vsel %vm5668, %v5660, 0
      %v5748 = vsel %vm5668, %v5661, 0
      %v5751 = vsel %vm5668, %v5662, 0
      %v5754 = vsel %vm5668, %v5663, 0
      %v5757 = vsel %vm5668, %v5664, 0
      %v5760 = vsel %vm5668, %v5665, 0
      %v5763 = vsel %vm5668, %v5666, 0
      %vm5765 = vcmask 1043456
      %v5767 = vsel %vm5765, %v5667, 0
      %5769 = vmatpush.msra.mxu0 0.0
      %5770 = vmatpush.msra.mxu0 0.0
      %5771 = vmatpush.msra.mxu0 0.0
      %5772 = vmatpush.msra.mxu0 0.0
      %5773 = vmatpush.msra.mxu0 0.0
      %5774 = vmatpush.msra.mxu0 0.0
      %5775 = vmatpush.msra.mxu0 0.0
      %5776 = vmatpush.msra.mxu0 0.0
      %5777 = vmatpush.msra.mxu0 0.0
      %5778 = vmatpush.msra.mxu0 0.0
      %5779 = vmatpush.msra.mxu0 0.0
      %5780 = vmatpush.msra.mxu0 0.0
      %5781 = vmatpush.msra.mxu0 0.0
      %5782 = vmatpush.msra.mxu0 0.0
      %5783 = vmatpush.msra.mxu0 0.0
      %5784 = vmatpush.msra.mxu0 %v5767
      %5785 = vmatmul.f32.gmra.mxu0 %v5670
      %v5786 = vpop.f32.mrf.mxu0
      %v5787 = vadd.f32 0.0, %v5786
      %5788 = vmatmul.f32.gmra.mxu0 %v5673
      %v5789 = vpop.f32.mrf.mxu0
      %v5790 = vadd.f32 0.0, %v5789
      %5791 = vmatmul.f32.gmra.mxu0 %v5676
      %v5792 = vpop.f32.mrf.mxu0
      %v5793 = vadd.f32 0.0, %v5792
      %5794 = vmatmul.f32.gmra.mxu0 %v5679
      %v5795 = vpop.f32.mrf.mxu0
      %v5796 = vadd.f32 0.0, %v5795
      %5797 = vmatmul.f32.gmra.mxu0 %v5682
      %v5798 = vpop.f32.mrf.mxu0
      %v5799 = vadd.f32 0.0, %v5798
      %5800 = vmatmul.f32.gmra.mxu0 %v5685
      %v5801 = vpop.f32.mrf.mxu0
      %v5802 = vadd.f32 0.0, %v5801
      %5803 = vmatmul.f32.gmra.mxu0 %v5688
      %v5804 = vpop.f32.mrf.mxu0
      %v5805 = vadd.f32 0.0, %v5804
      %5806 = vmatmul.f32.gmra.mxu0 %v5691
      %v5807 = vpop.f32.mrf.mxu0
      %v5808 = vadd.f32 0.0, %v5807
      %5809 = vmatmul.f32.gmra.mxu0 %v5694
      %v5810 = vpop.f32.mrf.mxu0
      %v5811 = vadd.f32 0.0, %v5810
      %5812 = vmatmul.f32.gmra.mxu0 %v5697
      %v5813 = vpop.f32.mrf.mxu0
      %v5814 = vadd.f32 0.0, %v5813
      %5815 = vmatmul.f32.gmra.mxu0 %v5700
      %v5816 = vpop.f32.mrf.mxu0
      %v5817 = vadd.f32 0.0, %v5816
      %5818 = vmatmul.f32.gmra.mxu0 %v5703
      %v5819 = vpop.f32.mrf.mxu0
      %v5820 = vadd.f32 0.0, %v5819
      %5821 = vmatmul.f32.gmra.mxu0 %v5706
      %v5822 = vpop.f32.mrf.mxu0
      %v5823 = vadd.f32 0.0, %v5822
      %5824 = vmatmul.f32.gmra.mxu0 %v5709
      %v5825 = vpop.f32.mrf.mxu0
      %v5826 = vadd.f32 0.0, %v5825
      %5827 = vmatmul.f32.gmra.mxu0 %v5712
      %v5828 = vpop.f32.mrf.mxu0
      %v5829 = vadd.f32 0.0, %v5828
      %5830 = vmatmul.f32.gmra.mxu0 %v5715
      %v5831 = vpop.f32.mrf.mxu0
      %v5832 = vadd.f32 0.0, %v5831
      %5833 = vmatmul.f32.gmra.mxu0 %v5718
      %v5834 = vpop.f32.mrf.mxu0
      %v5835 = vadd.f32 0.0, %v5834
      %5836 = vmatmul.f32.gmra.mxu0 %v5721
      %v5837 = vpop.f32.mrf.mxu0
      %v5838 = vadd.f32 0.0, %v5837
      %5839 = vmatmul.f32.gmra.mxu0 %v5724
      %v5840 = vpop.f32.mrf.mxu0
      %v5841 = vadd.f32 0.0, %v5840
      %5842 = vmatmul.f32.gmra.mxu0 %v5727
      %v5843 = vpop.f32.mrf.mxu0
      %v5844 = vadd.f32 0.0, %v5843
      %5845 = vmatmul.f32.gmra.mxu0 %v5730
      %v5846 = vpop.f32.mrf.mxu0
      %v5847 = vadd.f32 0.0, %v5846
      %5848 = vmatmul.f32.gmra.mxu0 %v5733
      %v5849 = vpop.f32.mrf.mxu0
      %v5850 = vadd.f32 0.0, %v5849
      %5851 = vmatmul.f32.gmra.mxu0 %v5736
      %v5852 = vpop.f32.mrf.mxu0
      %v5853 = vadd.f32 0.0, %v5852
      %5854 = vmatmul.f32.gmra.mxu0 %v5739
      %v5855 = vpop.f32.mrf.mxu0
      %v5856 = vadd.f32 0.0, %v5855
      %5857 = vmatmul.f32.gmra.mxu0 %v5742
      %v5858 = vpop.f32.mrf.mxu0
      %v5859 = vadd.f32 0.0, %v5858
      %5860 = vmatmul.f32.gmra.mxu0 %v5745
      %v5861 = vpop.f32.mrf.mxu0
      %v5862 = vadd.f32 0.0, %v5861
      %5863 = vmatmul.f32.gmra.mxu0 %v5748
      %v5864 = vpop.f32.mrf.mxu0
      %v5865 = vadd.f32 0.0, %v5864
      %5866 = vmatmul.f32.gmra.mxu0 %v5751
      %v5867 = vpop.f32.mrf.mxu0
      %v5868 = vadd.f32 0.0, %v5867
      %5869 = vmatmul.f32.gmra.mxu0 %v5754
      %v5870 = vpop.f32.mrf.mxu0
      %v5871 = vadd.f32 0.0, %v5870
      %5872 = vmatmul.f32.gmra.mxu0 %v5757
      %v5873 = vpop.f32.mrf.mxu0
      %v5874 = vadd.f32 0.0, %v5873
      %5875 = vmatmul.f32.gmra.mxu0 %v5760
      %v5876 = vpop.f32.mrf.mxu0
      %v5877 = vadd.f32 0.0, %v5876
      %5878 = vmatmul.f32.gmra.mxu0 %v5763
      %v5879 = vpop.f32.mrf.mxu0
      %v5880 = vadd.f32 0.0, %v5879
      %5881 = vdwg.mxu0
      %v5882 = vadd.f32 %v5602, %v5787
      %v5883 = vadd.f32 %v5603, %v5790
      %v5884 = vadd.f32 %v5604, %v5793
      %v5885 = vadd.f32 %v5605, %v5796
      %v5886 = vadd.f32 %v5606, %v5799
      %v5887 = vadd.f32 %v5607, %v5802
      %v5888 = vadd.f32 %v5608, %v5805
      %v5889 = vadd.f32 %v5609, %v5808
      %v5890 = vadd.f32 %v5610, %v5811
      %v5891 = vadd.f32 %v5611, %v5814
      %v5892 = vadd.f32 %v5612, %v5817
      %v5893 = vadd.f32 %v5613, %v5820
      %v5894 = vadd.f32 %v5614, %v5823
      %v5895 = vadd.f32 %v5615, %v5826
      %v5896 = vadd.f32 %v5616, %v5829
      %v5897 = vadd.f32 %v5617, %v5832
      %v5898 = vadd.f32 %v5618, %v5835
      %v5899 = vadd.f32 %v5619, %v5838
      %v5900 = vadd.f32 %v5620, %v5841
      %v5901 = vadd.f32 %v5621, %v5844
      %v5902 = vadd.f32 %v5622, %v5847
      %v5903 = vadd.f32 %v5623, %v5850
      %v5904 = vadd.f32 %v5624, %v5853
      %v5905 = vadd.f32 %v5625, %v5856
      %v5906 = vadd.f32 %v5626, %v5859
      %v5907 = vadd.f32 %v5627, %v5862
      %v5908 = vadd.f32 %v5628, %v5865
      %v5909 = vadd.f32 %v5629, %v5868
      %v5910 = vadd.f32 %v5630, %v5871
      %v5911 = vadd.f32 %v5631, %v5874
      %v5912 = vadd.f32 %v5632, %v5877
      %v5913 = vadd.f32 %v5633, %v5880
      %5914 = vst.msk [vmem:[%s359] sm:$0xff] %vm3288, %v5882
      %5915 = vst.msk [vmem:[%s359 + $0x8] sm:$0xff] %vm3288, %v5883
      %5916 = vst.msk [vmem:[%s359 + $0x10] sm:$0xff] %vm3288, %v5884
      %5917 = vst.msk [vmem:[%s359 + $0x18] sm:$0xff] %vm3288, %v5885
      %5918 = vst.msk [vmem:[%s359 + $0x20] sm:$0xff] %vm3288, %v5886
      %5919 = vst.msk [vmem:[%s359 + $0x28] sm:$0xff] %vm3288, %v5887
      %5920 = vst.msk [vmem:[%s359 + $0x30] sm:$0xff] %vm3288, %v5888
      %5921 = vst.msk [vmem:[%s359 + $0x38] sm:$0xff] %vm3288, %v5889
      %5922 = vst.msk [vmem:[%s359 + $0x40] sm:$0xff] %vm3288, %v5890
      %5923 = vst.msk [vmem:[%s359 + $0x48] sm:$0xff] %vm3288, %v5891
      %5924 = vst.msk [vmem:[%s359 + $0x50] sm:$0xff] %vm3288, %v5892
      %5925 = vst.msk [vmem:[%s359 + $0x58] sm:$0xff] %vm3288, %v5893
      %5926 = vst.msk [vmem:[%s359 + $0x60] sm:$0xff] %vm3288, %v5894
      %5927 = vst.msk [vmem:[%s359 + $0x68] sm:$0xff] %vm3288, %v5895
      %5928 = vst.msk [vmem:[%s359 + $0x70] sm:$0xff] %vm3288, %v5896
      %5929 = vst.msk [vmem:[%s359 + $0x78] sm:$0xff] %vm3288, %v5897
      %5930 = vst.msk [vmem:[%s359 + $0x80] sm:$0xff] %vm3288, %v5898
      %5931 = vst.msk [vmem:[%s359 + $0x88] sm:$0xff] %vm3288, %v5899
      %5932 = vst.msk [vmem:[%s359 + $0x90] sm:$0xff] %vm3288, %v5900
      %5933 = vst.msk [vmem:[%s359 + $0x98] sm:$0xff] %vm3288, %v5901
      %5934 = vst.msk [vmem:[%s359 + $0xa0] sm:$0xff] %vm3288, %v5902
      %5935 = vst.msk [vmem:[%s359 + $0xa8] sm:$0xff] %vm3288, %v5903
      %5936 = vst.msk [vmem:[%s359 + $0xb0] sm:$0xff] %vm3288, %v5904
      %5937 = vst.msk [vmem:[%s359 + $0xb8] sm:$0xff] %vm3288, %v5905
      %5938 = vst.msk [vmem:[%s359 + $0xc0] sm:$0xff] %vm3288, %v5906
      %5939 = vst.msk [vmem:[%s359 + $0xc8] sm:$0xff] %vm3288, %v5907
      %5940 = vst.msk [vmem:[%s359 + $0xd0] sm:$0xff] %vm3288, %v5908
      %5941 = vst.msk [vmem:[%s359 + $0xd8] sm:$0xff] %vm3288, %v5909
      %5942 = vst.msk [vmem:[%s359 + $0xe0] sm:$0xff] %vm3288, %v5910
      %5943 = vst.msk [vmem:[%s359 + $0xe8] sm:$0xff] %vm3288, %v5911
      %5944 = vst.msk [vmem:[%s359 + $0xf0] sm:$0xff] %vm3288, %v5912
      %5945 = vst.msk [vmem:[%s359 + $0xf8] sm:$0xff] %vm3288, %v5913
      %p5946 = scmp.lt.s32.totalorder %s23, 1
      %s5947 = scalar_select %p5946, %s23, 1
      %p5948 = scmp.lt.s32.totalorder %s24, 0
      %s5949 = scalar_select %p5948, %s24, 0
      %s5950 = smul.addr %s5947, 32
      %s5951 = sadd.s32 %s5949, %s5950
      %s5952 = smul.addr %s5951, 8
      %s5953 = scalar_lea.vmem %s8, %s5952
      // Predicated region
      $region57: #{tpu_custom_call.1} parent=51 // pred_check
        %p5954 = pneg %p234
      $region58: #{tpu_custom_call.1} parent=51 // pred_check_branch
        %5956 = sbr.rel (%p5954) target = $region60
      $region59: #{tpu_custom_call.1} parent=51 // pred_region
        _
      $region60: #{tpu_custom_call.1} parent=51 // pred_fallthru
        _
    $region52: #{tpu_custom_call.1} parent=5 // pred_fallthru
      _
    %p5957 = scmp.le.s32.totalorder 2, %s14
    // Predicated region
    $region61: #{tpu_custom_call.1} parent=5 // pred_check
      %p5958 = pneg %p5957
    $region62: #{tpu_custom_call.1} parent=5 // pred_check_branch
      %5960 = sbr.rel (%p5958) target = $region64
    $region63: #{tpu_custom_call.1} parent=5 // pred_region
      %s5961 = ssub.s32 %s14, 2
      // Predicated region
      $region65: #{tpu_custom_call.1} parent=63 // pred_check
        %p5962 = pneg %p240
      $region66: #{tpu_custom_call.1} parent=63 // pred_check_branch
        %5964 = sbr.rel (%p5962) target = $region68
      $region67: #{tpu_custom_call.1} parent=63 // pred_region
        %p5965 = scmp.lt.s32.totalorder %s25, 1
        %s5966 = scalar_select %p5965, %s25, 1
        %p5967 = scmp.lt.s32.totalorder %s26, 0
        %s5968 = scalar_select %p5967, %s26, 0
        %s5969 = smul.addr %s5966, 32
        %s5970 = sadd.s32 %s5968, %s5969
        %s5971 = smul.addr %s5970, 8
        %s5972 = scalar_lea.vmem %s8, %s5971
      $region68: #{tpu_custom_call.1} parent=63 // pred_fallthru
        _
    $region64: #{tpu_custom_call.1} parent=5 // pred_fallthru
      _
  $region6: #{tpu_custom_call.1} parent=0 // loop_footer
    %s18 = sadd.s32 1, %s14
  $region7: #{tpu_custom_call.1} parent=0 // loop_footer_branch
    %13 = sbr.rel target = $region3
  $region8: #{tpu_custom_call.1} parent=0 // loop_exit
    _

</llo_original>
